<compile_context>
chip_gen: v7x
topology: tpu7x:2x2x1
jax: 0.10.0
libtpu: 0.0.40
codegen_flags: <defaults>
</compile_context>

<pallas_src>
import functools

import jax
import jax.numpy as jnp
from jax.experimental import pallas as pl
from jax.experimental.pallas import tpu as pltpu


def _round_up(x, m):
    return ((x + m - 1) // m) * m


def _padded_bytes(shape, dtype):
    """Approximate VMEM footprint of one buffer with (8, 128) tile padding."""
    itemsize = jnp.dtype(dtype).itemsize
    if len(shape) == 1:
        return _round_up(int(shape[0]) * itemsize, 512)
    rows = _round_up(int(shape[-2]), 8)
    cols = _round_up(int(shape[-1]), 128)
    lead = 1
    for s in shape[:-2]:
        lead *= int(s)
    return lead * rows * cols * itemsize


def _vmem_capacity_bytes():
    try:
        return int(pltpu.get_tpu_info().vmem_capacity_bytes)
    except Exception:
        return 64 * 1024 * 1024  # conservative: v7x per-TensorCore VMEM


def _mlp_from_refs(res_f32, p_refs, compute_dtype):
    """Linear -> ReLU -> ... -> Linear (stribor MLP, final_activation=None).

    Matmul inputs are cast to `compute_dtype` (bf16 -> MXU-native); products
    accumulate in f32 via preferred_element_type.  Returns the f32 MLP output.
    """
    n_lin = len(p_refs) // 2
    h = res_f32.astype(compute_dtype)
    h32 = None
    for i in range(n_lin):
        w = p_refs[2 * i][...]                          # (in, out), compute dtype
        b = p_refs[2 * i + 1][...].astype(jnp.float32)  # (1, out)
        h32 = jnp.dot(h, w, preferred_element_type=jnp.float32) + b
        if i < n_lin - 1:
            h32 = jnp.maximum(h32, 0.0)                 # ReLU between linears only
            h = h32.astype(compute_dtype)
    return h32


def _make_resident_kernel(linears_per_block, compute_dtype):
    """All blocks unrolled; every weight VMEM-resident; one batch-tile grid."""

    def kernel(*refs):
        x_ref, o_ref = refs[0], refs[-1]
        p = refs[1:-1]
        assert len(p) == 2 * sum(linears_per_block)
        res = x_ref[...].astype(jnp.float32)            # residual stream in f32
        idx = 0
        for n_lin in linears_per_block:                 # static unroll over blocks
            res = res + _mlp_from_refs(res, p[idx:idx + 2 * n_lin], compute_dtype)
            idx += 2 * n_lin
        o_ref[...] = res.astype(o_ref.dtype)            # single cast at the end

    return kernel


def _make_streaming_kernel(n_lin, compute_dtype):
    """One block per (innermost, 'arbitrary') grid step; weights streamed.

    The f32 residual lives in a VMEM scratch accumulator across the block axis;
    next block's weights are auto double-buffered (DMA overlaps current block's
    matmuls).  Output is finalized under pl.when(block == last).
    """

    def kernel(*refs):
        x_ref = refs[0]
        p = refs[1:1 + 2 * n_lin]
        o_ref = refs[1 + 2 * n_lin]
        res_ref = refs[2 + 2 * n_lin]
        blk = pl.program_id(1)

        @pl.when(blk == 0)
        def _():
            res_ref[...] = x_ref[...].astype(jnp.float32)

        res = res_ref[...] + _mlp_from_refs(res_ref[...], p, compute_dtype)
        res_ref[...] = res

        @pl.when(blk == pl.num_programs(1) - 1)
        def _():
            o_ref[...] = res.astype(o_ref.dtype)

    return kernel


def resnet_forward(x, params, *, block_batch=512, in_place=False, force_stream=False):
    """Full ResNet forward in one pallas_call.

    x:      (batch, dim) array.
    params: list over blocks; each block is a list of (W, b) with
            W: (in, out) in the compute dtype (e.g. bf16), b: (1, out) float32.
    in_place: alias the output onto x's buffer (only when no padding copy is
            made).  Callers that reuse x afterwards must leave this False.
    force_stream: force the weight-streaming (per-block grid axis) path.
    """
    B, D = x.shape
    num_layers = len(params)
    linears_per_block = tuple(len(block) for block in params)
    compute_dtype = params[0][0][0].dtype

    # --- batch tile (sublane axis); full feature dim stays on lanes ---------
    TB = _round_up(min(block_batch, B), 8)
    # v7x has 2 TensorCores: give the "parallel" batch axis >= 2 grid steps
    # whenever the batch is big enough to split.
    if B >= 16 and pl.cdiv(B, TB) < 2:
        TB = _round_up(pl.cdiv(B, 2), 8)
    Bp = _round_up(B, TB)
    # Zero-pad ragged batches (padded rows stay finite through Linear+ReLU and
    # are sliced off).  TODO(synk): masked ragged last tile (pltpu.store with a
    # row mask) would avoid the two extra HBM copies for unaligned batches.
    x_in = x if Bp == B else jnp.pad(x, ((0, Bp - B), (0, 0)))
    n_tiles = Bp // TB

    # --- generation-aware VMEM budgeting ------------------------------------
    vmem_cap = _vmem_capacity_bytes()
    act_vmem = 2 * 2 * _padded_bytes((TB, D), x.dtype)        # x + out, 2x-buffered
    resident_wb_vmem = 2 * sum(                                # 2x double-buffering
        _padded_bytes(w.shape, w.dtype) + _padded_bytes(b.shape, b.dtype)
        for block in params for (w, b) in block)
    resident_total = act_vmem + resident_wb_vmem + (1 << 20)   # +1 MiB slack

    uniform_blocks = all(
        tuple(w.shape for (w, _) in block) == tuple(w.shape for (w, _) in params[0])
        for block in params)
    use_stream = force_stream or (resident_total > 0.7 * vmem_cap)
    if use_stream and not uniform_blocks:
        use_stream = False
        assert resident_total <= int(0.9 * vmem_cap), (
            "weights neither fit resident in VMEM nor have uniform per-block "
            "shapes required by the streaming path")
    if use_stream:
        stream_total = (act_vmem + _padded_bytes((TB, D), jnp.float32) + (1 << 20)
                        + 2 * sum(_padded_bytes(w.shape, w.dtype)
                                  + _padded_bytes(b.shape, b.dtype)
                                  for (w, b) in params[0]))
        assert stream_total <= int(0.9 * vmem_cap), (
            "a single block's weights do not fit VMEM; reduce tile or shard features")

    vmem_limit = int(min(vmem_cap, 128 * 1024 * 1024))

    # --- cost estimate for the XLA scheduler ---------------------------------
    lin_dims = [(int(w.shape[0]), int(w.shape[1]))
                for block in params for (w, _) in block]
    weight_raw = sum(int(w.size) * w.dtype.itemsize + int(b.size) * b.dtype.itemsize
                     for block in params for (w, b) in block)
    flops = 2 * Bp * sum(m * n for m, n in lin_dims)
    io_bytes = 2 * Bp * D * x.dtype.itemsize
    cost = pl.CostEstimate(
        flops=flops, transcendentals=0,
        bytes_accessed=io_bytes + (weight_raw * n_tiles if use_stream else weight_raw))

    aliases = {0: 0} if (in_place and Bp == B) else {}

    if not use_stream:
        # Resident path: every W/b uses a constant index_map, so Pallas fetches
        # it once and keeps it VMEM-resident across all batch tiles.  (A
        # single-buffered pipeline_mode on these specs would halve the weight
        # footprint further; the 2x default is already budgeted above.)
        flat = []
        in_specs = [pl.BlockSpec((TB, D), lambda i: (i, 0))]
        for block in params:
            for w, b in block:
                flat += [w, b]
                in_specs.append(pl.BlockSpec(w.shape, lambda i: (0, 0)))
                in_specs.append(pl.BlockSpec(b.shape, lambda i: (0, 0)))
        out = pl.pallas_call(
            _make_resident_kernel(linears_per_block, compute_dtype),
            out_shape=jax.ShapeDtypeStruct((Bp, D), x.dtype),
            grid=(n_tiles,),
            in_specs=in_specs,
            out_specs=pl.BlockSpec((TB, D), lambda i: (i, 0)),
            input_output_aliases=aliases,
            cost_estimate=cost,
            compiler_params=pltpu.CompilerParams(
                dimension_semantics=("parallel",),
                vmem_limit_bytes=vmem_limit),
        )(x_in, *flat)
    else:
        # Streaming path: innermost "arbitrary" grid axis over blocks; stacked
        # per-position weights are selected by index_map (auto double-buffered,
        # so next block's DMA overlaps this block's matmuls).
        n_lin = linears_per_block[0]
        stacked = []
        in_specs = [pl.BlockSpec((TB, D), lambda i, l: (i, 0))]
        for j in range(n_lin):
            wj = jnp.stack([params[l][j][0] for l in range(num_layers)])  # (L,in,out)
            bj = jnp.stack([params[l][j][1] for l in range(num_layers)])  # (L,1,out)
            stacked += [wj, bj]
            in_specs.append(pl.BlockSpec((None,) + wj.shape[1:], lambda i, l: (l, 0, 0)))
            in_specs.append(pl.BlockSpec((None,) + bj.shape[1:], lambda i, l: (l, 0, 0)))
        out = pl.pallas_call(
            _make_streaming_kernel(n_lin, compute_dtype),
            out_shape=jax.ShapeDtypeStruct((Bp, D), x.dtype),
            grid=(n_tiles, num_layers),
            in_specs=in_specs,
            out_specs=pl.BlockSpec((TB, D), lambda i, l: (i, 0)),
            scratch_shapes=[pltpu.VMEM((TB, D), jnp.float32)],
            input_output_aliases=aliases,
            cost_estimate=cost,
            compiler_params=pltpu.CompilerParams(
                dimension_semantics=("parallel", "arbitrary"),
                vmem_limit_bytes=vmem_limit),
        )(x_in, *stacked)

    return out[:B] if Bp != B else out


# ----------------------------- init & reference -----------------------------


def init_linear(key, in_dim, out_dim, weight_dtype):
    """Mirrors torch.nn.Linear default init: U(-k, k), k = 1/sqrt(in_dim)."""
    kw, kb = jax.random.split(key)
    k = 1.0 / (in_dim ** 0.5)
    w = jax.random.uniform(kw, (in_dim, out_dim), jnp.float32, minval=-k, maxval=k)
    b = jax.random.uniform(kb, (1, out_dim), jnp.float32, minval=-k, maxval=k)
    return w.astype(weight_dtype), b  # weights in compute dtype, bias kept f32


def init_resnet_params(key, dim, hidden_dims, num_layers, weight_dtype):
    """Per-block linear params matching stribor's MLP layer sizes."""
    sizes = [dim] + list(hidden_dims) + [dim]
    all_params = []
    for _ in range(num_layers):
        block_params = []
        for i in range(len(sizes) - 1):
            key, sub = jax.random.split(key)
            block_params.append(init_linear(sub, sizes[i], sizes[i + 1], weight_dtype))
        all_params.append(block_params)
    return all_params


def reference_forward(x, params):
    """Pure-JAX reference with the same cast semantics as the kernel."""
    compute_dtype = params[0][0][0].dtype
    res = x.astype(jnp.float32)
    for block in params:
        h = res.astype(compute_dtype)
        n = len(block)
        h32 = None
        for i, (w, b) in enumerate(block):
            h32 = jnp.dot(h, w, preferred_element_type=jnp.float32) + b.astype(jnp.float32)
            if i < n - 1:
                h32 = jnp.maximum(h32, 0.0)
                h = h32.astype(compute_dtype)
        res = res + h32
    return res.astype(x.dtype)


if __name__ == "__main__":
    # (8,128)-aligned, lane-dense shapes: dim on lanes, batch tiles on sublanes.
    # batch=512 with block_batch=512 -> TB auto-splits to 256 -> grid of 2
    # (both v7x TensorCores busy, 2 pipelined steps on v5e/v6e).
    batch, dim = 512, 128
    hidden_dims = [256, 256]
    num_layers = 3
    compute_dtype = jnp.bfloat16  # MXU-native on v6e/v7x; f32 accumulation inside
    # TODO(synk): int8 weights would use the v5e/v6e integer MXU path but NOT
    # v7x (fp8-only MXU); bf16 + f32 accumulation is the portable fast path.

    key = jax.random.PRNGKey(0)
    kx, kp = jax.random.split(key)
    x = jax.random.normal(kx, (batch, dim), jnp.float32)
    params = init_resnet_params(kp, dim, hidden_dims, num_layers, compute_dtype)

    # Reference first (the in_place run logically overwrites x's buffer).
    ref = jax.block_until_ready(reference_forward(x, params))

    # Main path: weights VMEM-resident, one grid axis over batch tiles.
    fwd = jax.jit(functools.partial(resnet_forward, block_batch=512, in_place=True))
    out = jax.block_until_ready(fwd(x, params))
    assert out.shape == (batch, dim) and out.dtype == x.dtype
    assert jnp.allclose(out, ref, atol=2e-3, rtol=2e-3), "resident path mismatch"

    # Fallback path: per-block weight streaming (exercised here for coverage;
    # chosen automatically when weights exceed the VMEM budget).
    fwd_s = jax.jit(functools.partial(resnet_forward, block_batch=512,
                                      force_stream=True))
    out_s = jax.block_until_ready(fwd_s(x, params))
    assert jnp.allclose(out_s, ref, atol=2e-3, rtol=2e-3), "streaming path mismatch"

    print("KERNEL_OK")
</pallas_src>

<mosaic_0001>
module attributes {stable_mosaic.version = 11 : i64} {
  func.func @kernel(%arg0: i32, %arg1: memref<256x128xf32, #tpu.memory_space<vmem>>, %arg2: memref<128x256xbf16, #tpu.memory_space<vmem>>, %arg3: memref<1x256xf32, #tpu.memory_space<vmem>>, %arg4: memref<256x256xbf16, #tpu.memory_space<vmem>>, %arg5: memref<1x256xf32, #tpu.memory_space<vmem>>, %arg6: memref<256x128xbf16, #tpu.memory_space<vmem>>, %arg7: memref<1x128xf32, #tpu.memory_space<vmem>>, %arg8: memref<128x256xbf16, #tpu.memory_space<vmem>>, %arg9: memref<1x256xf32, #tpu.memory_space<vmem>>, %arg10: memref<256x256xbf16, #tpu.memory_space<vmem>>, %arg11: memref<1x256xf32, #tpu.memory_space<vmem>>, %arg12: memref<256x128xbf16, #tpu.memory_space<vmem>>, %arg13: memref<1x128xf32, #tpu.memory_space<vmem>>, %arg14: memref<128x256xbf16, #tpu.memory_space<vmem>>, %arg15: memref<1x256xf32, #tpu.memory_space<vmem>>, %arg16: memref<256x256xbf16, #tpu.memory_space<vmem>>, %arg17: memref<1x256xf32, #tpu.memory_space<vmem>>, %arg18: memref<256x128xbf16, #tpu.memory_space<vmem>>, %arg19: memref<1x128xf32, #tpu.memory_space<vmem>>, %arg20: memref<256x128xf32, #tpu.memory_space<vmem>>) attributes {dimension_semantics = [#tpu.dimension_semantics<parallel>], iteration_bounds = array<i64: 2>, scalar_prefetch = 0 : i64, scratch_operands = 0 : i64, tpu.core_type = #tpu.core_type<tc>, window_params = [{transform_indices = @transform_0, window_bounds = array<i64: 256, 128>}, {pipeline_mode = #tpu.pipeline_mode<synchronous>, transform_indices = @transform_1, window_bounds = array<i64: 128, 256>}, {pipeline_mode = #tpu.pipeline_mode<synchronous>, transform_indices = @transform_2, window_bounds = array<i64: 1, 256>}, {pipeline_mode = #tpu.pipeline_mode<synchronous>, transform_indices = @transform_3, window_bounds = array<i64: 256, 256>}, {pipeline_mode = #tpu.pipeline_mode<synchronous>, transform_indices = @transform_4, window_bounds = array<i64: 1, 256>}, {pipeline_mode = #tpu.pipeline_mode<synchronous>, transform_indices = @transform_5, window_bounds = array<i64: 256, 128>}, {pipeline_mode = #tpu.pipeline_mode<synchronous>, transform_indices = @transform_6, window_bounds = array<i64: 1, 128>}, {pipeline_mode = #tpu.pipeline_mode<synchronous>, transform_indices = @transform_7, window_bounds = array<i64: 128, 256>}, {pipeline_mode = #tpu.pipeline_mode<synchronous>, transform_indices = @transform_8, window_bounds = array<i64: 1, 256>}, {pipeline_mode = #tpu.pipeline_mode<synchronous>, transform_indices = @transform_9, window_bounds = array<i64: 256, 256>}, {pipeline_mode = #tpu.pipeline_mode<synchronous>, transform_indices = @transform_10, window_bounds = array<i64: 1, 256>}, {pipeline_mode = #tpu.pipeline_mode<synchronous>, transform_indices = @transform_11, window_bounds = array<i64: 256, 128>}, {pipeline_mode = #tpu.pipeline_mode<synchronous>, transform_indices = @transform_12, window_bounds = array<i64: 1, 128>}, {pipeline_mode = #tpu.pipeline_mode<synchronous>, transform_indices = @transform_13, window_bounds = array<i64: 128, 256>}, {pipeline_mode = #tpu.pipeline_mode<synchronous>, transform_indices = @transform_14, window_bounds = array<i64: 1, 256>}, {pipeline_mode = #tpu.pipeline_mode<synchronous>, transform_indices = @transform_15, window_bounds = array<i64: 256, 256>}, {pipeline_mode = #tpu.pipeline_mode<synchronous>, transform_indices = @transform_16, window_bounds = array<i64: 1, 256>}, {pipeline_mode = #tpu.pipeline_mode<synchronous>, transform_indices = @transform_17, window_bounds = array<i64: 256, 128>}, {pipeline_mode = #tpu.pipeline_mode<synchronous>, transform_indices = @transform_18, window_bounds = array<i64: 1, 128>}, {transform_indices = @transform_19, window_bounds = array<i64: 256, 128>}]} {
    %c0 = arith.constant 0 : index
    %c0_0 = arith.constant 0 : index
    %0 = vector.load %arg1[%c0, %c0_0] : memref<256x128xf32, #tpu.memory_space<vmem>>, vector<256x128xf32>
    %1 = arith.truncf %0 : vector<256x128xf32> to vector<256x128xbf16>
    %c0_1 = arith.constant 0 : index
    %c0_2 = arith.constant 0 : index
    %2 = vector.load %arg2[%c0_1, %c0_2] : memref<128x256xbf16, #tpu.memory_space<vmem>>, vector<128x256xbf16>
    %c0_3 = arith.constant 0 : index
    %c0_4 = arith.constant 0 : index
    %3 = vector.load %arg3[%c0_3, %c0_4] : memref<1x256xf32, #tpu.memory_space<vmem>>, vector<1x256xf32>
    %cst = arith.constant dense<0.000000e+00> : vector<256x256xf32>
    %4 = tpu.matmul %1, %2, %cst {dimension_numbers = #tpu.dot_dimension_numbers<[1], [0], [0], [1], [0, 0, 1, 1], [], []>} : vector<256x128xbf16>, vector<128x256xbf16>, vector<256x256xf32> -> vector<256x256xf32>
    %5 = vector.broadcast %3 : vector<1x256xf32> to vector<256x256xf32>
    %6 = arith.addf %4, %5 : vector<256x256xf32>
    %cst_5 = arith.constant 0.000000e+00 : f32
    %7 = vector.broadcast %cst_5 : f32 to vector<256x256xf32>
    %8 = arith.maximumf %6, %7 : vector<256x256xf32>
    %9 = arith.truncf %8 : vector<256x256xf32> to vector<256x256xbf16>
    %c0_6 = arith.constant 0 : index
    %c0_7 = arith.constant 0 : index
    %10 = vector.load %arg4[%c0_6, %c0_7] : memref<256x256xbf16, #tpu.memory_space<vmem>>, vector<256x256xbf16>
    %c0_8 = arith.constant 0 : index
    %c0_9 = arith.constant 0 : index
    %11 = vector.load %arg5[%c0_8, %c0_9] : memref<1x256xf32, #tpu.memory_space<vmem>>, vector<1x256xf32>
    %cst_10 = arith.constant dense<0.000000e+00> : vector<256x256xf32>
    %12 = tpu.matmul %9, %10, %cst_10 {dimension_numbers = #tpu.dot_dimension_numbers<[1], [0], [0], [1], [0, 0, 1, 1], [], []>} : vector<256x256xbf16>, vector<256x256xbf16>, vector<256x256xf32> -> vector<256x256xf32>
    %13 = vector.broadcast %11 : vector<1x256xf32> to vector<256x256xf32>
    %14 = arith.addf %12, %13 : vector<256x256xf32>
    %cst_11 = arith.constant 0.000000e+00 : f32
    %15 = vector.broadcast %cst_11 : f32 to vector<256x256xf32>
    %16 = arith.maximumf %14, %15 : vector<256x256xf32>
    %17 = arith.truncf %16 : vector<256x256xf32> to vector<256x256xbf16>
    %c0_12 = arith.constant 0 : index
    %c0_13 = arith.constant 0 : index
    %18 = vector.load %arg6[%c0_12, %c0_13] : memref<256x128xbf16, #tpu.memory_space<vmem>>, vector<256x128xbf16>
    %c0_14 = arith.constant 0 : index
    %c0_15 = arith.constant 0 : index
    %19 = vector.load %arg7[%c0_14, %c0_15] : memref<1x128xf32, #tpu.memory_space<vmem>>, vector<1x128xf32>
    %cst_16 = arith.constant dense<0.000000e+00> : vector<256x128xf32>
    %20 = tpu.matmul %17, %18, %cst_16 {dimension_numbers = #tpu.dot_dimension_numbers<[1], [0], [0], [1], [0, 0, 1, 1], [], []>} : vector<256x256xbf16>, vector<256x128xbf16>, vector<256x128xf32> -> vector<256x128xf32>
    %21 = vector.broadcast %19 : vector<1x128xf32> to vector<256x128xf32>
    %22 = arith.addf %20, %21 : vector<256x128xf32>
    %23 = arith.addf %0, %22 : vector<256x128xf32>
    %24 = arith.truncf %23 : vector<256x128xf32> to vector<256x128xbf16>
    %c0_17 = arith.constant 0 : index
    %c0_18 = arith.constant 0 : index
    %25 = vector.load %arg8[%c0_17, %c0_18] : memref<128x256xbf16, #tpu.memory_space<vmem>>, vector<128x256xbf16>
    %c0_19 = arith.constant 0 : index
    %c0_20 = arith.constant 0 : index
    %26 = vector.load %arg9[%c0_19, %c0_20] : memref<1x256xf32, #tpu.memory_space<vmem>>, vector<1x256xf32>
    %cst_21 = arith.constant dense<0.000000e+00> : vector<256x256xf32>
    %27 = tpu.matmul %24, %25, %cst_21 {dimension_numbers = #tpu.dot_dimension_numbers<[1], [0], [0], [1], [0, 0, 1, 1], [], []>} : vector<256x128xbf16>, vector<128x256xbf16>, vector<256x256xf32> -> vector<256x256xf32>
    %28 = vector.broadcast %26 : vector<1x256xf32> to vector<256x256xf32>
    %29 = arith.addf %27, %28 : vector<256x256xf32>
    %cst_22 = arith.constant 0.000000e+00 : f32
    %30 = vector.broadcast %cst_22 : f32 to vector<256x256xf32>
    %31 = arith.maximumf %29, %30 : vector<256x256xf32>
    %32 = arith.truncf %31 : vector<256x256xf32> to vector<256x256xbf16>
    %c0_23 = arith.constant 0 : index
    %c0_24 = arith.constant 0 : index
    %33 = vector.load %arg10[%c0_23, %c0_24] : memref<256x256xbf16, #tpu.memory_space<vmem>>, vector<256x256xbf16>
    %c0_25 = arith.constant 0 : index
    %c0_26 = arith.constant 0 : index
    %34 = vector.load %arg11[%c0_25, %c0_26] : memref<1x256xf32, #tpu.memory_space<vmem>>, vector<1x256xf32>
    %cst_27 = arith.constant dense<0.000000e+00> : vector<256x256xf32>
    %35 = tpu.matmul %32, %33, %cst_27 {dimension_numbers = #tpu.dot_dimension_numbers<[1], [0], [0], [1], [0, 0, 1, 1], [], []>} : vector<256x256xbf16>, vector<256x256xbf16>, vector<256x256xf32> -> vector<256x256xf32>
    %36 = vector.broadcast %34 : vector<1x256xf32> to vector<256x256xf32>
    %37 = arith.addf %35, %36 : vector<256x256xf32>
    %cst_28 = arith.constant 0.000000e+00 : f32
    %38 = vector.broadcast %cst_28 : f32 to vector<256x256xf32>
    %39 = arith.maximumf %37, %38 : vector<256x256xf32>
    %40 = arith.truncf %39 : vector<256x256xf32> to vector<256x256xbf16>
    %c0_29 = arith.constant 0 : index
    %c0_30 = arith.constant 0 : index
    %41 = vector.load %arg12[%c0_29, %c0_30] : memref<256x128xbf16, #tpu.memory_space<vmem>>, vector<256x128xbf16>
    %c0_31 = arith.constant 0 : index
    %c0_32 = arith.constant 0 : index
    %42 = vector.load %arg13[%c0_31, %c0_32] : memref<1x128xf32, #tpu.memory_space<vmem>>, vector<1x128xf32>
    %cst_33 = arith.constant dense<0.000000e+00> : vector<256x128xf32>
    %43 = tpu.matmul %40, %41, %cst_33 {dimension_numbers = #tpu.dot_dimension_numbers<[1], [0], [0], [1], [0, 0, 1, 1], [], []>} : vector<256x256xbf16>, vector<256x128xbf16>, vector<256x128xf32> -> vector<256x128xf32>
    %44 = vector.broadcast %42 : vector<1x128xf32> to vector<256x128xf32>
    %45 = arith.addf %43, %44 : vector<256x128xf32>
    %46 = arith.addf %23, %45 : vector<256x128xf32>
    %47 = arith.truncf %46 : vector<256x128xf32> to vector<256x128xbf16>
    %c0_34 = arith.constant 0 : index
    %c0_35 = arith.constant 0 : index
    %48 = vector.load %arg14[%c0_34, %c0_35] : memref<128x256xbf16, #tpu.memory_space<vmem>>, vector<128x256xbf16>
    %c0_36 = arith.constant 0 : index
    %c0_37 = arith.constant 0 : index
    %49 = vector.load %arg15[%c0_36, %c0_37] : memref<1x256xf32, #tpu.memory_space<vmem>>, vector<1x256xf32>
    %cst_38 = arith.constant dense<0.000000e+00> : vector<256x256xf32>
    %50 = tpu.matmul %47, %48, %cst_38 {dimension_numbers = #tpu.dot_dimension_numbers<[1], [0], [0], [1], [0, 0, 1, 1], [], []>} : vector<256x128xbf16>, vector<128x256xbf16>, vector<256x256xf32> -> vector<256x256xf32>
    %51 = vector.broadcast %49 : vector<1x256xf32> to vector<256x256xf32>
    %52 = arith.addf %50, %51 : vector<256x256xf32>
    %cst_39 = arith.constant 0.000000e+00 : f32
    %53 = vector.broadcast %cst_39 : f32 to vector<256x256xf32>
    %54 = arith.maximumf %52, %53 : vector<256x256xf32>
    %55 = arith.truncf %54 : vector<256x256xf32> to vector<256x256xbf16>
    %c0_40 = arith.constant 0 : index
    %c0_41 = arith.constant 0 : index
    %56 = vector.load %arg16[%c0_40, %c0_41] : memref<256x256xbf16, #tpu.memory_space<vmem>>, vector<256x256xbf16>
    %c0_42 = arith.constant 0 : index
    %c0_43 = arith.constant 0 : index
    %57 = vector.load %arg17[%c0_42, %c0_43] : memref<1x256xf32, #tpu.memory_space<vmem>>, vector<1x256xf32>
    %cst_44 = arith.constant dense<0.000000e+00> : vector<256x256xf32>
    %58 = tpu.matmul %55, %56, %cst_44 {dimension_numbers = #tpu.dot_dimension_numbers<[1], [0], [0], [1], [0, 0, 1, 1], [], []>} : vector<256x256xbf16>, vector<256x256xbf16>, vector<256x256xf32> -> vector<256x256xf32>
    %59 = vector.broadcast %57 : vector<1x256xf32> to vector<256x256xf32>
    %60 = arith.addf %58, %59 : vector<256x256xf32>
    %cst_45 = arith.constant 0.000000e+00 : f32
    %61 = vector.broadcast %cst_45 : f32 to vector<256x256xf32>
    %62 = arith.maximumf %60, %61 : vector<256x256xf32>
    %63 = arith.truncf %62 : vector<256x256xf32> to vector<256x256xbf16>
    %c0_46 = arith.constant 0 : index
    %c0_47 = arith.constant 0 : index
    %64 = vector.load %arg18[%c0_46, %c0_47] : memref<256x128xbf16, #tpu.memory_space<vmem>>, vector<256x128xbf16>
    %c0_48 = arith.constant 0 : index
    %c0_49 = arith.constant 0 : index
    %65 = vector.load %arg19[%c0_48, %c0_49] : memref<1x128xf32, #tpu.memory_space<vmem>>, vector<1x128xf32>
    %cst_50 = arith.constant dense<0.000000e+00> : vector<256x128xf32>
    %66 = tpu.matmul %63, %64, %cst_50 {dimension_numbers = #tpu.dot_dimension_numbers<[1], [0], [0], [1], [0, 0, 1, 1], [], []>} : vector<256x256xbf16>, vector<256x128xbf16>, vector<256x128xf32> -> vector<256x128xf32>
    %67 = vector.broadcast %65 : vector<1x128xf32> to vector<256x128xf32>
    %68 = arith.addf %66, %67 : vector<256x128xf32>
    %69 = arith.addf %46, %68 : vector<256x128xf32>
    %c0_51 = arith.constant 0 : index
    %c0_52 = arith.constant 0 : index
    %70 = vector.load %arg20[%c0_51, %c0_52] : memref<256x128xf32, #tpu.memory_space<vmem>>, vector<256x128xf32>
    tpu.vector_store %arg20[%c0_51, %c0_52], %69 {strides = array<i32>} : memref<256x128xf32, #tpu.memory_space<vmem>>, vector<256x128xf32>,
    return
  }
  func.func @transform_0(%arg0: i32) -> (i32, i32) {
    %c0_i32 = arith.constant 0 : i32
    %c0_i32_0 = arith.constant 0 : i32
    return %arg0, %c0_i32 : i32, i32
  }
  func.func @transform_1(%arg0: i32) -> (i32, i32) {
    %c0_i32 = arith.constant 0 : i32
    %c0_i32_0 = arith.constant 0 : i32
    %c0_i32_1 = arith.constant 0 : i32
    return %c0_i32, %c0_i32_0 : i32, i32
  }
  func.func @transform_2(%arg0: i32) -> (i32, i32) {
    %c0_i32 = arith.constant 0 : i32
    %c0_i32_0 = arith.constant 0 : i32
    %c0_i32_1 = arith.constant 0 : i32
    return %c0_i32, %c0_i32_0 : i32, i32
  }
  func.func @transform_3(%arg0: i32) -> (i32, i32) {
    %c0_i32 = arith.constant 0 : i32
    %c0_i32_0 = arith.constant 0 : i32
    %c0_i32_1 = arith.constant 0 : i32
    return %c0_i32, %c0_i32_0 : i32, i32
  }
  func.func @transform_4(%arg0: i32) -> (i32, i32) {
    %c0_i32 = arith.constant 0 : i32
    %c0_i32_0 = arith.constant 0 : i32
    %c0_i32_1 = arith.constant 0 : i32
    return %c0_i32, %c0_i32_0 : i32, i32
  }
  func.func @transform_5(%arg0: i32) -> (i32, i32) {
    %c0_i32 = arith.constant 0 : i32
    %c0_i32_0 = arith.constant 0 : i32
    %c0_i32_1 = arith.constant 0 : i32
    return %c0_i32, %c0_i32_0 : i32, i32
  }
  func.func @transform_6(%arg0: i32) -> (i32, i32) {
    %c0_i32 = arith.constant 0 : i32
    %c0_i32_0 = arith.constant 0 : i32
    %c0_i32_1 = arith.constant 0 : i32
    return %c0_i32, %c0_i32_0 : i32, i32
  }
  func.func @transform_7(%arg0: i32) -> (i32, i32) {
    %c0_i32 = arith.constant 0 : i32
    %c0_i32_0 = arith.constant 0 : i32
    %c0_i32_1 = arith.constant 0 : i32
    return %c0_i32, %c0_i32_0 : i32, i32
  }
  func.func @transform_8(%arg0: i32) -> (i32, i32) {
    %c0_i32 = arith.constant 0 : i32
    %c0_i32_0 = arith.constant 0 : i32
    %c0_i32_1 = arith.constant 0 : i32
    return %c0_i32, %c0_i32_0 : i32, i32
  }
  func.func @transform_9(%arg0: i32) -> (i32, i32) {
    %c0_i32 = arith.constant 0 : i32
    %c0_i32_0 = arith.constant 0 : i32
    %c0_i32_1 = arith.constant 0 : i32
    return %c0_i32, %c0_i32_0 : i32, i32
  }
  func.func @transform_10(%arg0: i32) -> (i32, i32) {
    %c0_i32 = arith.constant 0 : i32
    %c0_i32_0 = arith.constant 0 : i32
    %c0_i32_1 = arith.constant 0 : i32
    return %c0_i32, %c0_i32_0 : i32, i32
  }
  func.func @transform_11(%arg0: i32) -> (i32, i32) {
    %c0_i32 = arith.constant 0 : i32
    %c0_i32_0 = arith.constant 0 : i32
    %c0_i32_1 = arith.constant 0 : i32
    return %c0_i32, %c0_i32_0 : i32, i32
  }
  func.func @transform_12(%arg0: i32) -> (i32, i32) {
    %c0_i32 = arith.constant 0 : i32
    %c0_i32_0 = arith.constant 0 : i32
    %c0_i32_1 = arith.constant 0 : i32
    return %c0_i32, %c0_i32_0 : i32, i32
  }
  func.func @transform_13(%arg0: i32) -> (i32, i32) {
    %c0_i32 = arith.constant 0 : i32
    %c0_i32_0 = arith.constant 0 : i32
    %c0_i32_1 = arith.constant 0 : i32
    return %c0_i32, %c0_i32_0 : i32, i32
  }
  func.func @transform_14(%arg0: i32) -> (i32, i32) {
    %c0_i32 = arith.constant 0 : i32
    %c0_i32_0 = arith.constant 0 : i32
    %c0_i32_1 = arith.constant 0 : i32
    return %c0_i32, %c0_i32_0 : i32, i32
  }
  func.func @transform_15(%arg0: i32) -> (i32, i32) {
    %c0_i32 = arith.constant 0 : i32
    %c0_i32_0 = arith.constant 0 : i32
    %c0_i32_1 = arith.constant 0 : i32
    return %c0_i32, %c0_i32_0 : i32, i32
  }
  func.func @transform_16(%arg0: i32) -> (i32, i32) {
    %c0_i32 = arith.constant 0 : i32
    %c0_i32_0 = arith.constant 0 : i32
    %c0_i32_1 = arith.constant 0 : i32
    return %c0_i32, %c0_i32_0 : i32, i32
  }
  func.func @transform_17(%arg0: i32) -> (i32, i32) {
    %c0_i32 = arith.constant 0 : i32
    %c0_i32_0 = arith.constant 0 : i32
    %c0_i32_1 = arith.constant 0 : i32
    return %c0_i32, %c0_i32_0 : i32, i32
  }
  func.func @transform_18(%arg0: i32) -> (i32, i32) {
    %c0_i32 = arith.constant 0 : i32
    %c0_i32_0 = arith.constant 0 : i32
    %c0_i32_1 = arith.constant 0 : i32
    return %c0_i32, %c0_i32_0 : i32, i32
  }
  func.func @transform_19(%arg0: i32) -> (i32, i32) {
    %c0_i32 = arith.constant 0 : i32
    %c0_i32_0 = arith.constant 0 : i32
    return %arg0, %c0_i32 : i32, i32
  }
}

</mosaic_0001>

<llo_original>
// kernel: resnet_forward.1
$region0: #{resnet_forward.1}
  #allocation0 [shape = 'u32[]', space=smem, size = 0x4, offset = 0x4, fixed_abs, tag = 'smem constant byte address 0x4 - core index']
  #allocation1 [shape = 'u32[144,128]{1,0:T(1,128)}', space=vmem, size = 0x12000, scoped, tag = 'internal scratch']
  %s0 = inlined_call_operand.hbm [shape: f32[512,128], index: 0, kind: input, shape index: {}, may-alias: {0,19}]
  %s1 = inlined_call_operand.hbm [shape: bf16[128,256], index: 1, kind: input, shape index: {}]
  %s2 = inlined_call_operand.hbm [shape: f32[1,256], index: 2, kind: input, shape index: {}]
  %s3 = inlined_call_operand.hbm [shape: bf16[256,256], index: 3, kind: input, shape index: {}]
  %s4 = inlined_call_operand.hbm [shape: f32[1,256], index: 4, kind: input, shape index: {}]
  %s5 = inlined_call_operand.hbm [shape: bf16[256,128], index: 5, kind: input, shape index: {}]
  %s6 = inlined_call_operand.hbm [shape: f32[1,128], index: 6, kind: input, shape index: {}]
  %s7 = inlined_call_operand.hbm [shape: bf16[128,256], index: 7, kind: input, shape index: {}]
  %s8 = inlined_call_operand.hbm [shape: f32[1,256], index: 8, kind: input, shape index: {}]
  %s9 = inlined_call_operand.hbm [shape: bf16[256,256], index: 9, kind: input, shape index: {}]
  %s10 = inlined_call_operand.hbm [shape: f32[1,256], index: 10, kind: input, shape index: {}]
  %s11 = inlined_call_operand.hbm [shape: bf16[256,128], index: 11, kind: input, shape index: {}]
  %s12 = inlined_call_operand.hbm [shape: f32[1,128], index: 12, kind: input, shape index: {}]
  %s13 = inlined_call_operand.hbm [shape: bf16[128,256], index: 13, kind: input, shape index: {}]
  %s14 = inlined_call_operand.hbm [shape: f32[1,256], index: 14, kind: input, shape index: {}]
  %s15 = inlined_call_operand.hbm [shape: bf16[256,256], index: 15, kind: input, shape index: {}]
  %s16 = inlined_call_operand.hbm [shape: f32[1,256], index: 16, kind: input, shape index: {}]
  %s17 = inlined_call_operand.hbm [shape: bf16[256,128], index: 17, kind: input, shape index: {}]
  %s18 = inlined_call_operand.hbm [shape: f32[1,128], index: 18, kind: input, shape index: {}]
  %s19 = inlined_call_operand.hbm [shape: f32[512,128], index: 19, kind: output, shape index: {}, may-alias: {0,19}]
  %s20 = sld [smem:[#allocation0]]
  $region185: #{resnet_forward.1} parent=0
    _
  %s22 = ssub.s32 1, %s20
  %s23 = scalar_select 0, %s22, %s20
  $region1: #{resnet_forward.1} parent=0
    #allocation2 [shape = 'u8[262144]{0}', space=vmem, size = 0x40000, scoped, tag = 'input window, operand 0']
    #allocation3 [shape = 's32[2]{0}', space=sflag, size = 0x8, scoped, tag = 'scoped memory for resnet_forward.1']
    #allocation4 [shape = 's32[2]{0}', space=sflag, size = 0x8, scoped, tag = 'scoped memory for resnet_forward.1']
    #allocation5 [shape = 'u8[65536]{0}', space=vmem, size = 0x10000, scoped, tag = 'input window, operand 1, single buffered']
    #allocation6 [shape = 's32[1]{0}', space=sflag, size = 0x4, scoped, tag = 'scoped memory for resnet_forward.1']
    #allocation7 [shape = 'u8[1024]{0}', space=vmem, size = 0x400, scoped, tag = 'input window, operand 2, single buffered']
    #allocation8 [shape = 'u8[131072]{0}', space=vmem, size = 0x20000, scoped, tag = 'input window, operand 3, single buffered']
    #allocation9 [shape = 's32[1]{0}', space=sflag, size = 0x4, scoped, tag = 'scoped memory for resnet_forward.1']
    #allocation10 [shape = 'u8[1024]{0}', space=vmem, size = 0x400, scoped, tag = 'input window, operand 4, single buffered']
    #allocation11 [shape = 'u8[65536]{0}', space=vmem, size = 0x10000, scoped, tag = 'input window, operand 5, single buffered']
    #allocation12 [shape = 's32[1]{0}', space=sflag, size = 0x4, scoped, tag = 'scoped memory for resnet_forward.1']
    #allocation13 [shape = 'u8[512]{0}', space=vmem, size = 0x400, scoped, tag = 'input window, operand 6, single buffered']
    #allocation14 [shape = 'u8[65536]{0}', space=vmem, size = 0x10000, scoped, tag = 'input window, operand 7, single buffered']
    #allocation15 [shape = 's32[1]{0}', space=sflag, size = 0x4, scoped, tag = 'scoped memory for resnet_forward.1']
    #allocation16 [shape = 'u8[1024]{0}', space=vmem, size = 0x400, scoped, tag = 'input window, operand 8, single buffered']
    #allocation17 [shape = 'u8[131072]{0}', space=vmem, size = 0x20000, scoped, tag = 'input window, operand 9, single buffered']
    #allocation18 [shape = 's32[1]{0}', space=sflag, size = 0x4, scoped, tag = 'scoped memory for resnet_forward.1']
    #allocation19 [shape = 'u8[1024]{0}', space=vmem, size = 0x400, scoped, tag = 'input window, operand 10, single buffered']
    #allocation20 [shape = 'u8[65536]{0}', space=vmem, size = 0x10000, scoped, tag = 'input window, operand 11, single buffered']
    #allocation21 [shape = 's32[1]{0}', space=sflag, size = 0x4, scoped, tag = 'scoped memory for resnet_forward.1']
    #allocation22 [shape = 'u8[512]{0}', space=vmem, size = 0x400, scoped, tag = 'input window, operand 12, single buffered']
    #allocation23 [shape = 'u8[65536]{0}', space=vmem, size = 0x10000, scoped, tag = 'input window, operand 13, single buffered']
    #allocation24 [shape = 's32[1]{0}', space=sflag, size = 0x4, scoped, tag = 'scoped memory for resnet_forward.1']
    #allocation25 [shape = 'u8[1024]{0}', space=vmem, size = 0x400, scoped, tag = 'input window, operand 14, single buffered']
    #allocation26 [shape = 'u8[131072]{0}', space=vmem, size = 0x20000, scoped, tag = 'input window, operand 15, single buffered']
    #allocation27 [shape = 's32[1]{0}', space=sflag, size = 0x4, scoped, tag = 'scoped memory for resnet_forward.1']
    #allocation28 [shape = 'u8[1024]{0}', space=vmem, size = 0x400, scoped, tag = 'input window, operand 16, single buffered']
    #allocation29 [shape = 'u8[65536]{0}', space=vmem, size = 0x10000, scoped, tag = 'input window, operand 17, single buffered']
    #allocation30 [shape = 's32[1]{0}', space=sflag, size = 0x4, scoped, tag = 'scoped memory for resnet_forward.1']
    #allocation31 [shape = 'u8[512]{0}', space=vmem, size = 0x400, scoped, tag = 'input window, operand 18, single buffered']
    #allocation32 [shape = 'u8[262144]{0}', space=vmem, size = 0x40000, scoped, tag = 'output window, operand 0']
    %24 = vsyncpa [#allocation3], 0
    %s25 = scalar_lea.sflag [#allocation3], 1
    %26 = vsyncpa %s25, 0
    %27 = vsyncpa [#allocation6], 0
    %28 = vsyncpa [#allocation9], 0
    %29 = vsyncpa [#allocation12], 0
    %30 = vsyncpa [#allocation15], 0
    %31 = vsyncpa [#allocation18], 0
    %32 = vsyncpa [#allocation21], 0
    %33 = vsyncpa [#allocation24], 0
    %34 = vsyncpa [#allocation27], 0
    %35 = vsyncpa [#allocation30], 0
    %36 = vsyncpa [#allocation4], 0
    %s37 = scalar_lea.sflag [#allocation4], 1
    %38 = vsyncpa %s37, 0
    loop: start=0, step=1, limit=4
    $region2: #{resnet_forward.1} parent=1 // loop_pre_header
      _
    $region3: #{resnet_forward.1} parent=1 // loop_header
      %s40 = sphi 0, %s44
      %p41 = scmp.ge.s32.totalorder %s40, 4
      %s50 = sphi 0, %s52
      %s53 = sphi 0, %s50
      %s54 = sphi 0, %s53
      %s70 = sphi 0, %s54
      %s74 = sphi 0, %s74
      %s76 = sphi 0, %s74
      %s77 = sphi 0, %s76
      %s91 = sphi 0, %s77
      %s95 = sphi 0, %s95
      %s97 = sphi 0, %s95
      %s98 = sphi 0, %s97
      %s112 = sphi 0, %s98
      %s116 = sphi 0, %s116
      %s118 = sphi 0, %s116
      %s119 = sphi 0, %s118
      %s133 = sphi 0, %s119
      %s137 = sphi 0, %s137
      %s139 = sphi 0, %s137
      %s140 = sphi 0, %s139
      %s154 = sphi 0, %s140
      %s158 = sphi 0, %s158
      %s160 = sphi 0, %s158
      %s161 = sphi 0, %s160
      %s175 = sphi 0, %s161
      %s179 = sphi 0, %s179
      %s181 = sphi 0, %s179
      %s182 = sphi 0, %s181
      %s196 = sphi 0, %s182
      %s200 = sphi 0, %s200
      %s202 = sphi 0, %s200
      %s203 = sphi 0, %s202
      %s217 = sphi 0, %s203
      %s221 = sphi 0, %s221
      %s223 = sphi 0, %s221
      %s224 = sphi 0, %s223
      %s238 = sphi 0, %s224
      %s242 = sphi 0, %s242
      %s244 = sphi 0, %s242
      %s245 = sphi 0, %s244
      %s259 = sphi 0, %s245
      %s263 = sphi 0, %s263
      %s265 = sphi 0, %s263
      %s266 = sphi 0, %s265
      %s280 = sphi 0, %s266
      %s284 = sphi 0, %s284
      %s286 = sphi 0, %s284
      %s287 = sphi 0, %s286
      %s301 = sphi 0, %s287
      %s305 = sphi 0, %s305
      %s307 = sphi 0, %s305
      %s308 = sphi 0, %s307
      %s322 = sphi 0, %s308
      %s326 = sphi 0, %s326
      %s328 = sphi 0, %s326
      %s329 = sphi 0, %s328
      %s343 = sphi 0, %s329
      %s347 = sphi 0, %s347
      %s349 = sphi 0, %s347
      %s350 = sphi 0, %s349
      %s364 = sphi 0, %s350
      %s368 = sphi 0, %s368
      %s370 = sphi 0, %s368
      %s371 = sphi 0, %s370
      %s385 = sphi 0, %s371
      %s389 = sphi 0, %s389
      %s391 = sphi 0, %s389
      %s392 = sphi 0, %s391
      %s406 = sphi 0, %s392
      %s410 = sphi 0, %s410
      %s412 = sphi 0, %s410
      %s413 = sphi 0, %s412
      %s427 = sphi 0, %s413
      %s431 = sphi 0, %s431
      %s433 = sphi 0, %s431
      %s434 = sphi 0, %s433
      %s448 = sphi 0, %s434
      %s454 = sphi 0, %s456
      %s457 = sphi 0, %s454
      %s458 = sphi 0, %s457
      %s474 = sphi 0, %s458
    $region4: #{resnet_forward.1} parent=1 // loop_header_branch
      %43 = sbr.rel (%p41) target = $region8
    $region5: #{resnet_forward.1} parent=1 // loop_body
      %s45 = ssub.s32 %s40, 1
      %s46 = ssub.s32 %s40, 2
      %s47 = sadd.s32 %s40, 1
      %s48 = ssub.s32 %s40, %s47
      %p49 = scmp.eq.s32.totalorder %s48, 0
      %s51 = sadd.s32 %s50, 1
      %s52 = scalar_select %p49, %s50, %s51
      %p55 = pneg %p49
      %p56 = scmp.eq.s32.totalorder %s40, 1
      %p57 = por %p55, %p56
      %p58 = scmp.ne.s32.totalorder %s50, %s53
      %p59 = scmp.eq.s32.totalorder %s40, 0
      %p60 = por %p58, %p59
      %p61 = scmp.ne.s32.totalorder %s50, %s53
      %p62 = scmp.eq.s32.totalorder %s45, 1
      %p63 = por %p61, %p62
      %p64 = scmp.ne.s32.totalorder %s53, %s54
      %p65 = scmp.eq.s32.totalorder %s45, 0
      %p66 = por %p64, %p65
      %p67 = scmp.ne.s32.totalorder %s53, %s54
      %p68 = scmp.eq.s32.totalorder %s46, 1
      %p69 = por %p67, %p68
      %p71 = scmp.ne.s32.totalorder %s54, %s70
      %p72 = scmp.eq.s32.totalorder %s46, 0
      %p73 = por %p71, %p72
      %s75 = sadd.s32 %s74, 1
      %p78 = scmp.eq.s32.totalorder %s40, 1
      %p79 = scmp.ne.s32.totalorder %s74, %s76
      %p80 = scmp.eq.s32.totalorder %s40, 0
      %p81 = por %p79, %p80
      %p82 = scmp.ne.s32.totalorder %s74, %s76
      %p83 = scmp.eq.s32.totalorder %s45, 1
      %p84 = por %p82, %p83
      %p85 = scmp.ne.s32.totalorder %s76, %s77
      %p86 = scmp.eq.s32.totalorder %s45, 0
      %p87 = por %p85, %p86
      %p88 = scmp.ne.s32.totalorder %s76, %s77
      %p89 = scmp.eq.s32.totalorder %s46, 1
      %p90 = por %p88, %p89
      %p92 = scmp.ne.s32.totalorder %s77, %s91
      %p93 = scmp.eq.s32.totalorder %s46, 0
      %p94 = por %p92, %p93
      %s96 = sadd.s32 %s95, 1
      %p99 = scmp.eq.s32.totalorder %s40, 1
      %p100 = scmp.ne.s32.totalorder %s95, %s97
      %p101 = scmp.eq.s32.totalorder %s40, 0
      %p102 = por %p100, %p101
      %p103 = scmp.ne.s32.totalorder %s95, %s97
      %p104 = scmp.eq.s32.totalorder %s45, 1
      %p105 = por %p103, %p104
      %p106 = scmp.ne.s32.totalorder %s97, %s98
      %p107 = scmp.eq.s32.totalorder %s45, 0
      %p108 = por %p106, %p107
      %p109 = scmp.ne.s32.totalorder %s97, %s98
      %p110 = scmp.eq.s32.totalorder %s46, 1
      %p111 = por %p109, %p110
      %p113 = scmp.ne.s32.totalorder %s98, %s112
      %p114 = scmp.eq.s32.totalorder %s46, 0
      %p115 = por %p113, %p114
      %s117 = sadd.s32 %s116, 1
      %p120 = scmp.eq.s32.totalorder %s40, 1
      %p121 = scmp.ne.s32.totalorder %s116, %s118
      %p122 = scmp.eq.s32.totalorder %s40, 0
      %p123 = por %p121, %p122
      %p124 = scmp.ne.s32.totalorder %s116, %s118
      %p125 = scmp.eq.s32.totalorder %s45, 1
      %p126 = por %p124, %p125
      %p127 = scmp.ne.s32.totalorder %s118, %s119
      %p128 = scmp.eq.s32.totalorder %s45, 0
      %p129 = por %p127, %p128
      %p130 = scmp.ne.s32.totalorder %s118, %s119
      %p131 = scmp.eq.s32.totalorder %s46, 1
      %p132 = por %p130, %p131
      %p134 = scmp.ne.s32.totalorder %s119, %s133
      %p135 = scmp.eq.s32.totalorder %s46, 0
      %p136 = por %p134, %p135
      %s138 = sadd.s32 %s137, 1
      %p141 = scmp.eq.s32.totalorder %s40, 1
      %p142 = scmp.ne.s32.totalorder %s137, %s139
      %p143 = scmp.eq.s32.totalorder %s40, 0
      %p144 = por %p142, %p143
      %p145 = scmp.ne.s32.totalorder %s137, %s139
      %p146 = scmp.eq.s32.totalorder %s45, 1
      %p147 = por %p145, %p146
      %p148 = scmp.ne.s32.totalorder %s139, %s140
      %p149 = scmp.eq.s32.totalorder %s45, 0
      %p150 = por %p148, %p149
      %p151 = scmp.ne.s32.totalorder %s139, %s140
      %p152 = scmp.eq.s32.totalorder %s46, 1
      %p153 = por %p151, %p152
      %p155 = scmp.ne.s32.totalorder %s140, %s154
      %p156 = scmp.eq.s32.totalorder %s46, 0
      %p157 = por %p155, %p156
      %s159 = sadd.s32 %s158, 1
      %p162 = scmp.eq.s32.totalorder %s40, 1
      %p163 = scmp.ne.s32.totalorder %s158, %s160
      %p164 = scmp.eq.s32.totalorder %s40, 0
      %p165 = por %p163, %p164
      %p166 = scmp.ne.s32.totalorder %s158, %s160
      %p167 = scmp.eq.s32.totalorder %s45, 1
      %p168 = por %p166, %p167
      %p169 = scmp.ne.s32.totalorder %s160, %s161
      %p170 = scmp.eq.s32.totalorder %s45, 0
      %p171 = por %p169, %p170
      %p172 = scmp.ne.s32.totalorder %s160, %s161
      %p173 = scmp.eq.s32.totalorder %s46, 1
      %p174 = por %p172, %p173
      %p176 = scmp.ne.s32.totalorder %s161, %s175
      %p177 = scmp.eq.s32.totalorder %s46, 0
      %p178 = por %p176, %p177
      %s180 = sadd.s32 %s179, 1
      %p183 = scmp.eq.s32.totalorder %s40, 1
      %p184 = scmp.ne.s32.totalorder %s179, %s181
      %p185 = scmp.eq.s32.totalorder %s40, 0
      %p186 = por %p184, %p185
      %p187 = scmp.ne.s32.totalorder %s179, %s181
      %p188 = scmp.eq.s32.totalorder %s45, 1
      %p189 = por %p187, %p188
      %p190 = scmp.ne.s32.totalorder %s181, %s182
      %p191 = scmp.eq.s32.totalorder %s45, 0
      %p192 = por %p190, %p191
      %p193 = scmp.ne.s32.totalorder %s181, %s182
      %p194 = scmp.eq.s32.totalorder %s46, 1
      %p195 = por %p193, %p194
      %p197 = scmp.ne.s32.totalorder %s182, %s196
      %p198 = scmp.eq.s32.totalorder %s46, 0
      %p199 = por %p197, %p198
      %s201 = sadd.s32 %s200, 1
      %p204 = scmp.eq.s32.totalorder %s40, 1
      %p205 = scmp.ne.s32.totalorder %s200, %s202
      %p206 = scmp.eq.s32.totalorder %s40, 0
      %p207 = por %p205, %p206
      %p208 = scmp.ne.s32.totalorder %s200, %s202
      %p209 = scmp.eq.s32.totalorder %s45, 1
      %p210 = por %p208, %p209
      %p211 = scmp.ne.s32.totalorder %s202, %s203
      %p212 = scmp.eq.s32.totalorder %s45, 0
      %p213 = por %p211, %p212
      %p214 = scmp.ne.s32.totalorder %s202, %s203
      %p215 = scmp.eq.s32.totalorder %s46, 1
      %p216 = por %p214, %p215
      %p218 = scmp.ne.s32.totalorder %s203, %s217
      %p219 = scmp.eq.s32.totalorder %s46, 0
      %p220 = por %p218, %p219
      %s222 = sadd.s32 %s221, 1
      %p225 = scmp.eq.s32.totalorder %s40, 1
      %p226 = scmp.ne.s32.totalorder %s221, %s223
      %p227 = scmp.eq.s32.totalorder %s40, 0
      %p228 = por %p226, %p227
      %p229 = scmp.ne.s32.totalorder %s221, %s223
      %p230 = scmp.eq.s32.totalorder %s45, 1
      %p231 = por %p229, %p230
      %p232 = scmp.ne.s32.totalorder %s223, %s224
      %p233 = scmp.eq.s32.totalorder %s45, 0
      %p234 = por %p232, %p233
      %p235 = scmp.ne.s32.totalorder %s223, %s224
      %p236 = scmp.eq.s32.totalorder %s46, 1
      %p237 = por %p235, %p236
      %p239 = scmp.ne.s32.totalorder %s224, %s238
      %p240 = scmp.eq.s32.totalorder %s46, 0
      %p241 = por %p239, %p240
      %s243 = sadd.s32 %s242, 1
      %p246 = scmp.eq.s32.totalorder %s40, 1
      %p247 = scmp.ne.s32.totalorder %s242, %s244
      %p248 = scmp.eq.s32.totalorder %s40, 0
      %p249 = por %p247, %p248
      %p250 = scmp.ne.s32.totalorder %s242, %s244
      %p251 = scmp.eq.s32.totalorder %s45, 1
      %p252 = por %p250, %p251
      %p253 = scmp.ne.s32.totalorder %s244, %s245
      %p254 = scmp.eq.s32.totalorder %s45, 0
      %p255 = por %p253, %p254
      %p256 = scmp.ne.s32.totalorder %s244, %s245
      %p257 = scmp.eq.s32.totalorder %s46, 1
      %p258 = por %p256, %p257
      %p260 = scmp.ne.s32.totalorder %s245, %s259
      %p261 = scmp.eq.s32.totalorder %s46, 0
      %p262 = por %p260, %p261
      %s264 = sadd.s32 %s263, 1
      %p267 = scmp.eq.s32.totalorder %s40, 1
      %p268 = scmp.ne.s32.totalorder %s263, %s265
      %p269 = scmp.eq.s32.totalorder %s40, 0
      %p270 = por %p268, %p269
      %p271 = scmp.ne.s32.totalorder %s263, %s265
      %p272 = scmp.eq.s32.totalorder %s45, 1
      %p273 = por %p271, %p272
      %p274 = scmp.ne.s32.totalorder %s265, %s266
      %p275 = scmp.eq.s32.totalorder %s45, 0
      %p276 = por %p274, %p275
      %p277 = scmp.ne.s32.totalorder %s265, %s266
      %p278 = scmp.eq.s32.totalorder %s46, 1
      %p279 = por %p277, %p278
      %p281 = scmp.ne.s32.totalorder %s266, %s280
      %p282 = scmp.eq.s32.totalorder %s46, 0
      %p283 = por %p281, %p282
      %s285 = sadd.s32 %s284, 1
      %p288 = scmp.eq.s32.totalorder %s40, 1
      %p289 = scmp.ne.s32.totalorder %s284, %s286
      %p290 = scmp.eq.s32.totalorder %s40, 0
      %p291 = por %p289, %p290
      %p292 = scmp.ne.s32.totalorder %s284, %s286
      %p293 = scmp.eq.s32.totalorder %s45, 1
      %p294 = por %p292, %p293
      %p295 = scmp.ne.s32.totalorder %s286, %s287
      %p296 = scmp.eq.s32.totalorder %s45, 0
      %p297 = por %p295, %p296
      %p298 = scmp.ne.s32.totalorder %s286, %s287
      %p299 = scmp.eq.s32.totalorder %s46, 1
      %p300 = por %p298, %p299
      %p302 = scmp.ne.s32.totalorder %s287, %s301
      %p303 = scmp.eq.s32.totalorder %s46, 0
      %p304 = por %p302, %p303
      %s306 = sadd.s32 %s305, 1
      %p309 = scmp.eq.s32.totalorder %s40, 1
      %p310 = scmp.ne.s32.totalorder %s305, %s307
      %p311 = scmp.eq.s32.totalorder %s40, 0
      %p312 = por %p310, %p311
      %p313 = scmp.ne.s32.totalorder %s305, %s307
      %p314 = scmp.eq.s32.totalorder %s45, 1
      %p315 = por %p313, %p314
      %p316 = scmp.ne.s32.totalorder %s307, %s308
      %p317 = scmp.eq.s32.totalorder %s45, 0
      %p318 = por %p316, %p317
      %p319 = scmp.ne.s32.totalorder %s307, %s308
      %p320 = scmp.eq.s32.totalorder %s46, 1
      %p321 = por %p319, %p320
      %p323 = scmp.ne.s32.totalorder %s308, %s322
      %p324 = scmp.eq.s32.totalorder %s46, 0
      %p325 = por %p323, %p324
      %s327 = sadd.s32 %s326, 1
      %p330 = scmp.eq.s32.totalorder %s40, 1
      %p331 = scmp.ne.s32.totalorder %s326, %s328
      %p332 = scmp.eq.s32.totalorder %s40, 0
      %p333 = por %p331, %p332
      %p334 = scmp.ne.s32.totalorder %s326, %s328
      %p335 = scmp.eq.s32.totalorder %s45, 1
      %p336 = por %p334, %p335
      %p337 = scmp.ne.s32.totalorder %s328, %s329
      %p338 = scmp.eq.s32.totalorder %s45, 0
      %p339 = por %p337, %p338
      %p340 = scmp.ne.s32.totalorder %s328, %s329
      %p341 = scmp.eq.s32.totalorder %s46, 1
      %p342 = por %p340, %p341
      %p344 = scmp.ne.s32.totalorder %s329, %s343
      %p345 = scmp.eq.s32.totalorder %s46, 0
      %p346 = por %p344, %p345
      %s348 = sadd.s32 %s347, 1
      %p351 = scmp.eq.s32.totalorder %s40, 1
      %p352 = scmp.ne.s32.totalorder %s347, %s349
      %p353 = scmp.eq.s32.totalorder %s40, 0
      %p354 = por %p352, %p353
      %p355 = scmp.ne.s32.totalorder %s347, %s349
      %p356 = scmp.eq.s32.totalorder %s45, 1
      %p357 = por %p355, %p356
      %p358 = scmp.ne.s32.totalorder %s349, %s350
      %p359 = scmp.eq.s32.totalorder %s45, 0
      %p360 = por %p358, %p359
      %p361 = scmp.ne.s32.totalorder %s349, %s350
      %p362 = scmp.eq.s32.totalorder %s46, 1
      %p363 = por %p361, %p362
      %p365 = scmp.ne.s32.totalorder %s350, %s364
      %p366 = scmp.eq.s32.totalorder %s46, 0
      %p367 = por %p365, %p366
      %s369 = sadd.s32 %s368, 1
      %p372 = scmp.eq.s32.totalorder %s40, 1
      %p373 = scmp.ne.s32.totalorder %s368, %s370
      %p374 = scmp.eq.s32.totalorder %s40, 0
      %p375 = por %p373, %p374
      %p376 = scmp.ne.s32.totalorder %s368, %s370
      %p377 = scmp.eq.s32.totalorder %s45, 1
      %p378 = por %p376, %p377
      %p379 = scmp.ne.s32.totalorder %s370, %s371
      %p380 = scmp.eq.s32.totalorder %s45, 0
      %p381 = por %p379, %p380
      %p382 = scmp.ne.s32.totalorder %s370, %s371
      %p383 = scmp.eq.s32.totalorder %s46, 1
      %p384 = por %p382, %p383
      %p386 = scmp.ne.s32.totalorder %s371, %s385
      %p387 = scmp.eq.s32.totalorder %s46, 0
      %p388 = por %p386, %p387
      %s390 = sadd.s32 %s389, 1
      %p393 = scmp.eq.s32.totalorder %s40, 1
      %p394 = scmp.ne.s32.totalorder %s389, %s391
      %p395 = scmp.eq.s32.totalorder %s40, 0
      %p396 = por %p394, %p395
      %p397 = scmp.ne.s32.totalorder %s389, %s391
      %p398 = scmp.eq.s32.totalorder %s45, 1
      %p399 = por %p397, %p398
      %p400 = scmp.ne.s32.totalorder %s391, %s392
      %p401 = scmp.eq.s32.totalorder %s45, 0
      %p402 = por %p400, %p401
      %p403 = scmp.ne.s32.totalorder %s391, %s392
      %p404 = scmp.eq.s32.totalorder %s46, 1
      %p405 = por %p403, %p404
      %p407 = scmp.ne.s32.totalorder %s392, %s406
      %p408 = scmp.eq.s32.totalorder %s46, 0
      %p409 = por %p407, %p408
      %s411 = sadd.s32 %s410, 1
      %p414 = scmp.eq.s32.totalorder %s40, 1
      %p415 = scmp.ne.s32.totalorder %s410, %s412
      %p416 = scmp.eq.s32.totalorder %s40, 0
      %p417 = por %p415, %p416
      %p418 = scmp.ne.s32.totalorder %s410, %s412
      %p419 = scmp.eq.s32.totalorder %s45, 1
      %p420 = por %p418, %p419
      %p421 = scmp.ne.s32.totalorder %s412, %s413
      %p422 = scmp.eq.s32.totalorder %s45, 0
      %p423 = por %p421, %p422
      %p424 = scmp.ne.s32.totalorder %s412, %s413
      %p425 = scmp.eq.s32.totalorder %s46, 1
      %p426 = por %p424, %p425
      %p428 = scmp.ne.s32.totalorder %s413, %s427
      %p429 = scmp.eq.s32.totalorder %s46, 0
      %p430 = por %p428, %p429
      %s432 = sadd.s32 %s431, 1
      %p435 = scmp.eq.s32.totalorder %s40, 1
      %p436 = scmp.ne.s32.totalorder %s431, %s433
      %p437 = scmp.eq.s32.totalorder %s40, 0
      %p438 = por %p436, %p437
      %p439 = scmp.ne.s32.totalorder %s431, %s433
      %p440 = scmp.eq.s32.totalorder %s45, 1
      %p441 = por %p439, %p440
      %p442 = scmp.ne.s32.totalorder %s433, %s434
      %p443 = scmp.eq.s32.totalorder %s45, 0
      %p444 = por %p442, %p443
      %p445 = scmp.ne.s32.totalorder %s433, %s434
      %p446 = scmp.eq.s32.totalorder %s46, 1
      %p447 = por %p445, %p446
      %p449 = scmp.ne.s32.totalorder %s434, %s448
      %p450 = scmp.eq.s32.totalorder %s46, 0
      %p451 = por %p449, %p450
      %s452 = ssub.s32 %s40, %s47
      %p453 = scmp.eq.s32.totalorder %s452, 0
      %s455 = sadd.s32 %s454, 1
      %s456 = scalar_select %p453, %s454, %s455
      %p459 = pneg %p453
      %p460 = scmp.eq.s32.totalorder %s40, 1
      %p461 = por %p459, %p460
      %p462 = scmp.ne.s32.totalorder %s454, %s457
      %p463 = scmp.eq.s32.totalorder %s40, 0
      %p464 = por %p462, %p463
      %p465 = scmp.ne.s32.totalorder %s454, %s457
      %p466 = scmp.eq.s32.totalorder %s45, 1
      %p467 = por %p465, %p466
      %p468 = scmp.ne.s32.totalorder %s457, %s458
      %p469 = scmp.eq.s32.totalorder %s45, 0
      %p470 = por %p468, %p469
      %p471 = scmp.ne.s32.totalorder %s457, %s458
      %p472 = scmp.eq.s32.totalorder %s46, 1
      %p473 = por %p471, %p472
      %p475 = scmp.ne.s32.totalorder %s458, %s474
      %p476 = scmp.eq.s32.totalorder %s46, 0
      %p477 = por %p475, %p476
      %p478 = scmp.le.s32.totalorder 1, %s40
      %p479 = scmp.lt.s32.totalorder %s40, 3
      %p480 = pnand %p478, %p479
      %p481 = pneg %p480
      // Predicated region
      $region9: #{resnet_forward.1} parent=5 // pred_check
        _
      $region10: #{resnet_forward.1} parent=5 // pred_check_branch
        %483 = sbr.rel (%p480) target = $region12
      $region11: #{resnet_forward.1} parent=5 // pred_region
        %s484 = ssub.s32 %s40, 1
        // Predicated region
        $region13: #{resnet_forward.1} parent=11 // pred_check
          %p485 = pneg %p87
        $region14: #{resnet_forward.1} parent=11 // pred_check_branch
          %487 = sbr.rel (%p485) target = $region16
        $region15: #{resnet_forward.1} parent=11 // pred_region
          %s489 = ssub.s32 2048, 2048
          %490 = vsyncadd [#allocation6], %s489
          %s491 = sshll.u32 [#allocation5], 4
          %s492 = int_to_ptr.vmem [resolvable:$true] %s491
          %497 = dma.hbm_to_vmem [thread:$0]  %s1, 2048, %s492, [#allocation6], 128, 128, 8
        $region16: #{resnet_forward.1} parent=11 // pred_fallthru
          _
        // Predicated region
        $region17: #{resnet_forward.1} parent=11 // pred_check
          %p498 = pneg %p108
        $region18: #{resnet_forward.1} parent=11 // pred_check_branch
          %500 = sbr.rel (%p498) target = $region20
        $region19: #{resnet_forward.1} parent=11 // pred_region
          %s502 = ssub.s32 32, 32
          %503 = vsyncadd [#allocation6], %s502
          %s505 = sshll.u32 [#allocation7], 4
          %s506 = int_to_ptr.vmem [resolvable:$true] %s505
          %508 = dma.hbm_to_vmem [thread:$0]  %s2, 32, %s506, [#allocation6]
        $region20: #{resnet_forward.1} parent=11 // pred_fallthru
          _
        // Predicated region
        $region21: #{resnet_forward.1} parent=11 // pred_check
          %p509 = pneg %p129
        $region22: #{resnet_forward.1} parent=11 // pred_check_branch
          %511 = sbr.rel (%p509) target = $region24
        $region23: #{resnet_forward.1} parent=11 // pred_region
          %s513 = ssub.s32 4096, 4096
          %514 = vsyncadd [#allocation9], %s513
          %s515 = sshll.u32 [#allocation8], 4
          %s516 = int_to_ptr.vmem [resolvable:$true] %s515
          %521 = dma.hbm_to_vmem [thread:$0]  %s3, 4096, %s516, [#allocation9], 128, 128, 8
        $region24: #{resnet_forward.1} parent=11 // pred_fallthru
          _
        // Predicated region
        $region25: #{resnet_forward.1} parent=11 // pred_check
          %p522 = pneg %p150
        $region26: #{resnet_forward.1} parent=11 // pred_check_branch
          %524 = sbr.rel (%p522) target = $region28
        $region27: #{resnet_forward.1} parent=11 // pred_region
          %s526 = ssub.s32 32, 32
          %527 = vsyncadd [#allocation9], %s526
          %s529 = sshll.u32 [#allocation10], 4
          %s530 = int_to_ptr.vmem [resolvable:$true] %s529
          %532 = dma.hbm_to_vmem [thread:$0]  %s4, 32, %s530, [#allocation9]
        $region28: #{resnet_forward.1} parent=11 // pred_fallthru
          _
        // Predicated region
        $region29: #{resnet_forward.1} parent=11 // pred_check
          %p533 = pneg %p171
        $region30: #{resnet_forward.1} parent=11 // pred_check_branch
          %535 = sbr.rel (%p533) target = $region32
        $region31: #{resnet_forward.1} parent=11 // pred_region
          %s537 = ssub.s32 2048, 2048
          %538 = vsyncadd [#allocation12], %s537
          %s539 = sshll.u32 [#allocation11], 4
          %s540 = int_to_ptr.vmem [resolvable:$true] %s539
          %545 = dma.hbm_to_vmem [thread:$0]  %s5, 2048, %s540, [#allocation12], 64, 64, 4
        $region32: #{resnet_forward.1} parent=11 // pred_fallthru
          _
        // Predicated region
        $region33: #{resnet_forward.1} parent=11 // pred_check
          %p546 = pneg %p192
        $region34: #{resnet_forward.1} parent=11 // pred_check_branch
          %548 = sbr.rel (%p546) target = $region36
        $region35: #{resnet_forward.1} parent=11 // pred_region
          %s550 = ssub.s32 16, 16
          %551 = vsyncadd [#allocation12], %s550
          %s553 = sshll.u32 [#allocation13], 4
          %s554 = int_to_ptr.vmem [resolvable:$true] %s553
          %556 = dma.hbm_to_vmem [thread:$0]  %s6, 16, %s554, [#allocation12]
        $region36: #{resnet_forward.1} parent=11 // pred_fallthru
          _
        // Predicated region
        $region37: #{resnet_forward.1} parent=11 // pred_check
          %p557 = pneg %p213
        $region38: #{resnet_forward.1} parent=11 // pred_check_branch
          %559 = sbr.rel (%p557) target = $region40
        $region39: #{resnet_forward.1} parent=11 // pred_region
          %s561 = ssub.s32 2048, 2048
          %562 = vsyncadd [#allocation15], %s561
          %s563 = sshll.u32 [#allocation14], 4
          %s564 = int_to_ptr.vmem [resolvable:$true] %s563
          %569 = dma.hbm_to_vmem [thread:$0]  %s7, 2048, %s564, [#allocation15], 128, 128, 8
        $region40: #{resnet_forward.1} parent=11 // pred_fallthru
          _
        // Predicated region
        $region41: #{resnet_forward.1} parent=11 // pred_check
          %p570 = pneg %p234
        $region42: #{resnet_forward.1} parent=11 // pred_check_branch
          %572 = sbr.rel (%p570) target = $region44
        $region43: #{resnet_forward.1} parent=11 // pred_region
          %s574 = ssub.s32 32, 32
          %575 = vsyncadd [#allocation15], %s574
          %s577 = sshll.u32 [#allocation16], 4
          %s578 = int_to_ptr.vmem [resolvable:$true] %s577
          %580 = dma.hbm_to_vmem [thread:$0]  %s8, 32, %s578, [#allocation15]
        $region44: #{resnet_forward.1} parent=11 // pred_fallthru
          _
        // Predicated region
        $region45: #{resnet_forward.1} parent=11 // pred_check
          %p581 = pneg %p255
        $region46: #{resnet_forward.1} parent=11 // pred_check_branch
          %583 = sbr.rel (%p581) target = $region48
        $region47: #{resnet_forward.1} parent=11 // pred_region
          %s585 = ssub.s32 4096, 4096
          %586 = vsyncadd [#allocation18], %s585
          %s587 = sshll.u32 [#allocation17], 4
          %s588 = int_to_ptr.vmem [resolvable:$true] %s587
          %593 = dma.hbm_to_vmem [thread:$0]  %s9, 4096, %s588, [#allocation18], 128, 128, 8
        $region48: #{resnet_forward.1} parent=11 // pred_fallthru
          _
        // Predicated region
        $region49: #{resnet_forward.1} parent=11 // pred_check
          %p594 = pneg %p276
        $region50: #{resnet_forward.1} parent=11 // pred_check_branch
          %596 = sbr.rel (%p594) target = $region52
        $region51: #{resnet_forward.1} parent=11 // pred_region
          %s598 = ssub.s32 32, 32
          %599 = vsyncadd [#allocation18], %s598
          %s601 = sshll.u32 [#allocation19], 4
          %s602 = int_to_ptr.vmem [resolvable:$true] %s601
          %604 = dma.hbm_to_vmem [thread:$0]  %s10, 32, %s602, [#allocation18]
        $region52: #{resnet_forward.1} parent=11 // pred_fallthru
          _
        // Predicated region
        $region53: #{resnet_forward.1} parent=11 // pred_check
          %p605 = pneg %p297
        $region54: #{resnet_forward.1} parent=11 // pred_check_branch
          %607 = sbr.rel (%p605) target = $region56
        $region55: #{resnet_forward.1} parent=11 // pred_region
          %s609 = ssub.s32 2048, 2048
          %610 = vsyncadd [#allocation21], %s609
          %s611 = sshll.u32 [#allocation20], 4
          %s612 = int_to_ptr.vmem [resolvable:$true] %s611
          %617 = dma.hbm_to_vmem [thread:$0]  %s11, 2048, %s612, [#allocation21], 64, 64, 4
        $region56: #{resnet_forward.1} parent=11 // pred_fallthru
          _
        // Predicated region
        $region57: #{resnet_forward.1} parent=11 // pred_check
          %p618 = pneg %p318
        $region58: #{resnet_forward.1} parent=11 // pred_check_branch
          %620 = sbr.rel (%p618) target = $region60
        $region59: #{resnet_forward.1} parent=11 // pred_region
          %s622 = ssub.s32 16, 16
          %623 = vsyncadd [#allocation21], %s622
          %s625 = sshll.u32 [#allocation22], 4
          %s626 = int_to_ptr.vmem [resolvable:$true] %s625
          %628 = dma.hbm_to_vmem [thread:$0]  %s12, 16, %s626, [#allocation21]
        $region60: #{resnet_forward.1} parent=11 // pred_fallthru
          _
        // Predicated region
        $region61: #{resnet_forward.1} parent=11 // pred_check
          %p629 = pneg %p339
        $region62: #{resnet_forward.1} parent=11 // pred_check_branch
          %631 = sbr.rel (%p629) target = $region64
        $region63: #{resnet_forward.1} parent=11 // pred_region
          %s633 = ssub.s32 2048, 2048
          %634 = vsyncadd [#allocation24], %s633
          %s635 = sshll.u32 [#allocation23], 4
          %s636 = int_to_ptr.vmem [resolvable:$true] %s635
          %641 = dma.hbm_to_vmem [thread:$0]  %s13, 2048, %s636, [#allocation24], 128, 128, 8
        $region64: #{resnet_forward.1} parent=11 // pred_fallthru
          _
        // Predicated region
        $region65: #{resnet_forward.1} parent=11 // pred_check
          %p642 = pneg %p360
        $region66: #{resnet_forward.1} parent=11 // pred_check_branch
          %644 = sbr.rel (%p642) target = $region68
        $region67: #{resnet_forward.1} parent=11 // pred_region
          %s646 = ssub.s32 32, 32
          %647 = vsyncadd [#allocation24], %s646
          %s649 = sshll.u32 [#allocation25], 4
          %s650 = int_to_ptr.vmem [resolvable:$true] %s649
          %652 = dma.hbm_to_vmem [thread:$0]  %s14, 32, %s650, [#allocation24]
        $region68: #{resnet_forward.1} parent=11 // pred_fallthru
          _
        // Predicated region
        $region69: #{resnet_forward.1} parent=11 // pred_check
          %p653 = pneg %p381
        $region70: #{resnet_forward.1} parent=11 // pred_check_branch
          %655 = sbr.rel (%p653) target = $region72
        $region71: #{resnet_forward.1} parent=11 // pred_region
          %s657 = ssub.s32 4096, 4096
          %658 = vsyncadd [#allocation27], %s657
          %s659 = sshll.u32 [#allocation26], 4
          %s660 = int_to_ptr.vmem [resolvable:$true] %s659
          %665 = dma.hbm_to_vmem [thread:$0]  %s15, 4096, %s660, [#allocation27], 128, 128, 8
        $region72: #{resnet_forward.1} parent=11 // pred_fallthru
          _
        // Predicated region
        $region73: #{resnet_forward.1} parent=11 // pred_check
          %p666 = pneg %p402
        $region74: #{resnet_forward.1} parent=11 // pred_check_branch
          %668 = sbr.rel (%p666) target = $region76
        $region75: #{resnet_forward.1} parent=11 // pred_region
          %s670 = ssub.s32 32, 32
          %671 = vsyncadd [#allocation27], %s670
          %s673 = sshll.u32 [#allocation28], 4
          %s674 = int_to_ptr.vmem [resolvable:$true] %s673
          %676 = dma.hbm_to_vmem [thread:$0]  %s16, 32, %s674, [#allocation27]
        $region76: #{resnet_forward.1} parent=11 // pred_fallthru
          _
        // Predicated region
        $region77: #{resnet_forward.1} parent=11 // pred_check
          %p677 = pneg %p423
        $region78: #{resnet_forward.1} parent=11 // pred_check_branch
          %679 = sbr.rel (%p677) target = $region80
        $region79: #{resnet_forward.1} parent=11 // pred_region
          %s681 = ssub.s32 2048, 2048
          %682 = vsyncadd [#allocation30], %s681
          %s683 = sshll.u32 [#allocation29], 4
          %s684 = int_to_ptr.vmem [resolvable:$true] %s683
          %689 = dma.hbm_to_vmem [thread:$0]  %s17, 2048, %s684, [#allocation30], 64, 64, 4
        $region80: #{resnet_forward.1} parent=11 // pred_fallthru
          _
        // Predicated region
        $region81: #{resnet_forward.1} parent=11 // pred_check
          %p690 = pneg %p444
        $region82: #{resnet_forward.1} parent=11 // pred_check_branch
          %692 = sbr.rel (%p690) target = $region84
        $region83: #{resnet_forward.1} parent=11 // pred_region
          %s694 = ssub.s32 16, 16
          %695 = vsyncadd [#allocation30], %s694
          %s697 = sshll.u32 [#allocation31], 4
          %s698 = int_to_ptr.vmem [resolvable:$true] %s697
          %700 = dma.hbm_to_vmem [thread:$0]  %s18, 16, %s698, [#allocation30]
        $region84: #{resnet_forward.1} parent=11 // pred_fallthru
          _
      $region12: #{resnet_forward.1} parent=5 // pred_fallthru
        _
      %p701 = scmp.lt.s32.totalorder %s40, 2
      // Predicated region
      $region85: #{resnet_forward.1} parent=5 // pred_check
        %p702 = pneg %p701
      $region86: #{resnet_forward.1} parent=5 // pred_check_branch
        %704 = sbr.rel (%p702) target = $region88
      $region87: #{resnet_forward.1} parent=5 // pred_region
        // Predicated region
        $region89: #{resnet_forward.1} parent=87 // pred_check
          %p705 = pneg %p60
        $region90: #{resnet_forward.1} parent=87 // pred_check_branch
          %707 = sbr.rel (%p705) target = $region92
        $region91: #{resnet_forward.1} parent=87 // pred_region
          %s708 = sand.u32 %s50, 1
          %s709 = scalar_lea.sflag [#allocation3], %s708
          %s710 = sand.u32 %s50, 1
          %s711 = smul.addr %s710, 256
          %s712 = scalar_lea.vmem [#allocation2], %s711
          %s713 = smul.u32 32, %s40
          %s715 = ssub.s32 4096, 4096
          %716 = vsyncadd %s709, %s715
          %s717 = smul.addr %s713, 128
          %s718 = scalar_lea.hbm %s0, %s717
          %s719 = sshll.u32 %s712, 4
          %s720 = int_to_ptr.vmem [resolvable:$true] %s719
          %725 = dma.hbm_to_vmem [thread:$0]  %s718, 4096, %s720, %s709, 128, 128, 8
        $region92: #{resnet_forward.1} parent=87 // pred_fallthru
          _
      $region88: #{resnet_forward.1} parent=5 // pred_fallthru
        _
      %p726 = scmp.le.s32.totalorder 1, %s40
      %p727 = scmp.lt.s32.totalorder %s40, 3
      %p728 = pnand %p726, %p727
      %p729 = pneg %p728
      // Predicated region
      $region93: #{resnet_forward.1} parent=5 // pred_check
        _
      $region94: #{resnet_forward.1} parent=5 // pred_check_branch
        %731 = sbr.rel (%p728) target = $region96
      $region95: #{resnet_forward.1} parent=5 // pred_region
        %s732 = ssub.s32 %s40, 1
        %s733 = sand.u32 %s53, 1
        %s734 = scalar_lea.sflag [#allocation3], %s733
        %s735 = sand.u32 %s53, 1
        %s736 = smul.addr %s735, 256
        %s737 = scalar_lea.vmem [#allocation2], %s736
        // Predicated region
        $region97: #{resnet_forward.1} parent=95 // pred_check
          %p738 = pneg %p66
        $region98: #{resnet_forward.1} parent=95 // pred_check_branch
          %740 = sbr.rel (%p738) target = $region100
        $region99: #{resnet_forward.1} parent=95 // pred_region
          %741 = dma.done %s734, 4096
        $region100: #{resnet_forward.1} parent=95 // pred_fallthru
          _
        // Predicated region
        $region101: #{resnet_forward.1} parent=95 // pred_check
          %p742 = pneg %p87
        $region102: #{resnet_forward.1} parent=95 // pred_check_branch
          %744 = sbr.rel (%p742) target = $region104
        $region103: #{resnet_forward.1} parent=95 // pred_region
          %745 = dma.done [#allocation6], 2048
        $region104: #{resnet_forward.1} parent=95 // pred_fallthru
          _
        // Predicated region
        $region105: #{resnet_forward.1} parent=95 // pred_check
          %p746 = pneg %p108
        $region106: #{resnet_forward.1} parent=95 // pred_check_branch
          %748 = sbr.rel (%p746) target = $region108
        $region107: #{resnet_forward.1} parent=95 // pred_region
          %749 = dma.done [#allocation6], 32
        $region108: #{resnet_forward.1} parent=95 // pred_fallthru
          _
        // Predicated region
        $region109: #{resnet_forward.1} parent=95 // pred_check
          %p750 = pneg %p129
        $region110: #{resnet_forward.1} parent=95 // pred_check_branch
          %752 = sbr.rel (%p750) target = $region112
        $region111: #{resnet_forward.1} parent=95 // pred_region
          %753 = dma.done [#allocation9], 4096
        $region112: #{resnet_forward.1} parent=95 // pred_fallthru
          _
        // Predicated region
        $region113: #{resnet_forward.1} parent=95 // pred_check
          %p754 = pneg %p150
        $region114: #{resnet_forward.1} parent=95 // pred_check_branch
          %756 = sbr.rel (%p754) target = $region116
        $region115: #{resnet_forward.1} parent=95 // pred_region
          %757 = dma.done [#allocation9], 32
        $region116: #{resnet_forward.1} parent=95 // pred_fallthru
          _
        // Predicated region
        $region117: #{resnet_forward.1} parent=95 // pred_check
          %p758 = pneg %p171
        $region118: #{resnet_forward.1} parent=95 // pred_check_branch
          %760 = sbr.rel (%p758) target = $region120
        $region119: #{resnet_forward.1} parent=95 // pred_region
          %761 = dma.done [#allocation12], 2048
        $region120: #{resnet_forward.1} parent=95 // pred_fallthru
          _
        // Predicated region
        $region121: #{resnet_forward.1} parent=95 // pred_check
          %p762 = pneg %p192
        $region122: #{resnet_forward.1} parent=95 // pred_check_branch
          %764 = sbr.rel (%p762) target = $region124
        $region123: #{resnet_forward.1} parent=95 // pred_region
          %765 = dma.done [#allocation12], 16
        $region124: #{resnet_forward.1} parent=95 // pred_fallthru
          _
        // Predicated region
        $region125: #{resnet_forward.1} parent=95 // pred_check
          %p766 = pneg %p213
        $region126: #{resnet_forward.1} parent=95 // pred_check_branch
          %768 = sbr.rel (%p766) target = $region128
        $region127: #{resnet_forward.1} parent=95 // pred_region
          %769 = dma.done [#allocation15], 2048
        $region128: #{resnet_forward.1} parent=95 // pred_fallthru
          _
        // Predicated region
        $region129: #{resnet_forward.1} parent=95 // pred_check
          %p770 = pneg %p234
        $region130: #{resnet_forward.1} parent=95 // pred_check_branch
          %772 = sbr.rel (%p770) target = $region132
        $region131: #{resnet_forward.1} parent=95 // pred_region
          %773 = dma.done [#allocation15], 32
        $region132: #{resnet_forward.1} parent=95 // pred_fallthru
          _
        // Predicated region
        $region133: #{resnet_forward.1} parent=95 // pred_check
          %p774 = pneg %p255
        $region134: #{resnet_forward.1} parent=95 // pred_check_branch
          %776 = sbr.rel (%p774) target = $region136
        $region135: #{resnet_forward.1} parent=95 // pred_region
          %777 = dma.done [#allocation18], 4096
        $region136: #{resnet_forward.1} parent=95 // pred_fallthru
          _
        // Predicated region
        $region137: #{resnet_forward.1} parent=95 // pred_check
          %p778 = pneg %p276
        $region138: #{resnet_forward.1} parent=95 // pred_check_branch
          %780 = sbr.rel (%p778) target = $region140
        $region139: #{resnet_forward.1} parent=95 // pred_region
          %781 = dma.done [#allocation18], 32
        $region140: #{resnet_forward.1} parent=95 // pred_fallthru
          _
        // Predicated region
        $region141: #{resnet_forward.1} parent=95 // pred_check
          %p782 = pneg %p297
        $region142: #{resnet_forward.1} parent=95 // pred_check_branch
          %784 = sbr.rel (%p782) target = $region144
        $region143: #{resnet_forward.1} parent=95 // pred_region
          %785 = dma.done [#allocation21], 2048
        $region144: #{resnet_forward.1} parent=95 // pred_fallthru
          _
        // Predicated region
        $region145: #{resnet_forward.1} parent=95 // pred_check
          %p786 = pneg %p318
        $region146: #{resnet_forward.1} parent=95 // pred_check_branch
          %788 = sbr.rel (%p786) target = $region148
        $region147: #{resnet_forward.1} parent=95 // pred_region
          %789 = dma.done [#allocation21], 16
        $region148: #{resnet_forward.1} parent=95 // pred_fallthru
          _
        // Predicated region
        $region149: #{resnet_forward.1} parent=95 // pred_check
          %p790 = pneg %p339
        $region150: #{resnet_forward.1} parent=95 // pred_check_branch
          %792 = sbr.rel (%p790) target = $region152
        $region151: #{resnet_forward.1} parent=95 // pred_region
          %793 = dma.done [#allocation24], 2048
        $region152: #{resnet_forward.1} parent=95 // pred_fallthru
          _
        // Predicated region
        $region153: #{resnet_forward.1} parent=95 // pred_check
          %p794 = pneg %p360
        $region154: #{resnet_forward.1} parent=95 // pred_check_branch
          %796 = sbr.rel (%p794) target = $region156
        $region155: #{resnet_forward.1} parent=95 // pred_region
          %797 = dma.done [#allocation24], 32
        $region156: #{resnet_forward.1} parent=95 // pred_fallthru
          _
        // Predicated region
        $region157: #{resnet_forward.1} parent=95 // pred_check
          %p798 = pneg %p381
        $region158: #{resnet_forward.1} parent=95 // pred_check_branch
          %800 = sbr.rel (%p798) target = $region160
        $region159: #{resnet_forward.1} parent=95 // pred_region
          %801 = dma.done [#allocation27], 4096
        $region160: #{resnet_forward.1} parent=95 // pred_fallthru
          _
        // Predicated region
        $region161: #{resnet_forward.1} parent=95 // pred_check
          %p802 = pneg %p402
        $region162: #{resnet_forward.1} parent=95 // pred_check_branch
          %804 = sbr.rel (%p802) target = $region164
        $region163: #{resnet_forward.1} parent=95 // pred_region
          %805 = dma.done [#allocation27], 32
        $region164: #{resnet_forward.1} parent=95 // pred_fallthru
          _
        // Predicated region
        $region165: #{resnet_forward.1} parent=95 // pred_check
          %p806 = pneg %p423
        $region166: #{resnet_forward.1} parent=95 // pred_check_branch
          %808 = sbr.rel (%p806) target = $region168
        $region167: #{resnet_forward.1} parent=95 // pred_region
          %809 = dma.done [#allocation30], 2048
        $region168: #{resnet_forward.1} parent=95 // pred_fallthru
          _
        // Predicated region
        $region169: #{resnet_forward.1} parent=95 // pred_check
          %p810 = pneg %p444
        $region170: #{resnet_forward.1} parent=95 // pred_check_branch
          %812 = sbr.rel (%p810) target = $region172
        $region171: #{resnet_forward.1} parent=95 // pred_region
          %813 = dma.done [#allocation30], 16
        $region172: #{resnet_forward.1} parent=95 // pred_fallthru
          _
        %s814 = sand.u32 %s53, 1
        %s815 = scalar_lea.sflag [#allocation3], %s814
        %s816 = sand.u32 %s53, 1
        %s817 = smul.addr %s816, 256
        %s818 = scalar_lea.vmem [#allocation2], %s817
        %p819 = pneg %p66
        %p820 = pneg %p63
        %p821 = pneg %p87
        %p822 = pneg %p84
        %p823 = pneg %p108
        %p824 = pneg %p105
        %p825 = pneg %p129
        %p826 = pneg %p126
        %p827 = pneg %p150
        %p828 = pneg %p147
        %p829 = pneg %p171
        %p830 = pneg %p168
        %p831 = pneg %p192
        %p832 = pneg %p189
        %p833 = pneg %p213
        %p834 = pneg %p210
        %p835 = pneg %p234
        %p836 = pneg %p231
        %p837 = pneg %p255
        %p838 = pneg %p252
        %p839 = pneg %p276
        %p840 = pneg %p273
        %p841 = pneg %p297
        %p842 = pneg %p294
        %p843 = pneg %p318
        %p844 = pneg %p315
        %p845 = pneg %p339
        %p846 = pneg %p336
        %p847 = pneg %p360
        %p848 = pneg %p357
        %p849 = pneg %p381
        %p850 = pneg %p378
        %p851 = pneg %p402
        %p852 = pneg %p399
        %p853 = pneg %p423
        %p854 = pneg %p420
        %p855 = pneg %p444
        %p856 = pneg %p441
        %p857 = pneg %p470
        %p858 = pneg %p467
        %s859 = sand.u32 %s457, 1
        %s860 = scalar_lea.sflag [#allocation4], %s859
        %s861 = sand.u32 %s457, 1
        %s862 = smul.addr %s861, 256
        %s863 = scalar_lea.vmem [#allocation32], %s862
        %s864 = smul.u32 32, %s45
        %s865 = smul.u32 32, %s45
        %v867 = vld [vmem:[%s737] sm:$0xff]
        %v868 = vld [vmem:[%s737 + $0x8] sm:$0xff]
        %v869 = vld [vmem:[%s737 + $0x10] sm:$0xff]
        %v870 = vld [vmem:[%s737 + $0x18] sm:$0xff]
        %v871 = vld [vmem:[%s737 + $0x20] sm:$0xff]
        %v872 = vld [vmem:[%s737 + $0x28] sm:$0xff]
        %v873 = vld [vmem:[%s737 + $0x30] sm:$0xff]
        %v874 = vld [vmem:[%s737 + $0x38] sm:$0xff]
        %v875 = vld [vmem:[%s737 + $0x40] sm:$0xff]
        %v876 = vld [vmem:[%s737 + $0x48] sm:$0xff]
        %v877 = vld [vmem:[%s737 + $0x50] sm:$0xff]
        %v878 = vld [vmem:[%s737 + $0x58] sm:$0xff]
        %v879 = vld [vmem:[%s737 + $0x60] sm:$0xff]
        %v880 = vld [vmem:[%s737 + $0x68] sm:$0xff]
        %v881 = vld [vmem:[%s737 + $0x70] sm:$0xff]
        %v882 = vld [vmem:[%s737 + $0x78] sm:$0xff]
        %v883 = vld [vmem:[%s737 + $0x80] sm:$0xff]
        %v884 = vld [vmem:[%s737 + $0x88] sm:$0xff]
        %v885 = vld [vmem:[%s737 + $0x90] sm:$0xff]
        %v886 = vld [vmem:[%s737 + $0x98] sm:$0xff]
        %v887 = vld [vmem:[%s737 + $0xa0] sm:$0xff]
        %v888 = vld [vmem:[%s737 + $0xa8] sm:$0xff]
        %v889 = vld [vmem:[%s737 + $0xb0] sm:$0xff]
        %v890 = vld [vmem:[%s737 + $0xb8] sm:$0xff]
        %v891 = vld [vmem:[%s737 + $0xc0] sm:$0xff]
        %v892 = vld [vmem:[%s737 + $0xc8] sm:$0xff]
        %v893 = vld [vmem:[%s737 + $0xd0] sm:$0xff]
        %v894 = vld [vmem:[%s737 + $0xd8] sm:$0xff]
        %v895 = vld [vmem:[%s737 + $0xe0] sm:$0xff]
        %v896 = vld [vmem:[%s737 + $0xe8] sm:$0xff]
        %v897 = vld [vmem:[%s737 + $0xf0] sm:$0xff]
        %v898 = vld [vmem:[%s737 + $0xf8] sm:$0xff]
        %v899 = vpack.c.bf16 %v868, %v867
        %v900 = vpack.c.bf16 %v870, %v869
        %v901 = vpack.c.bf16 %v872, %v871
        %v902 = vpack.c.bf16 %v874, %v873
        %v903 = vpack.c.bf16 %v876, %v875
        %v904 = vpack.c.bf16 %v878, %v877
        %v905 = vpack.c.bf16 %v880, %v879
        %v906 = vpack.c.bf16 %v882, %v881
        %v907 = vpack.c.bf16 %v884, %v883
        %v908 = vpack.c.bf16 %v886, %v885
        %v909 = vpack.c.bf16 %v888, %v887
        %v910 = vpack.c.bf16 %v890, %v889
        %v911 = vpack.c.bf16 %v892, %v891
        %v912 = vpack.c.bf16 %v894, %v893
        %v913 = vpack.c.bf16 %v896, %v895
        %v914 = vpack.c.bf16 %v898, %v897
        %v915 = vld [vmem:[#allocation5] sm:$0xff]
        %v916 = vld [vmem:[#allocation5 + $0x8] sm:$0xff]
        %v917 = vld [vmem:[#allocation5 + $0x10] sm:$0xff]
        %v918 = vld [vmem:[#allocation5 + $0x18] sm:$0xff]
        %v919 = vld [vmem:[#allocation5 + $0x20] sm:$0xff]
        %v920 = vld [vmem:[#allocation5 + $0x28] sm:$0xff]
        %v921 = vld [vmem:[#allocation5 + $0x30] sm:$0xff]
        %v922 = vld [vmem:[#allocation5 + $0x38] sm:$0xff]
        %v923 = vld [vmem:[#allocation5 + $0x40] sm:$0xff]
        %v924 = vld [vmem:[#allocation5 + $0x48] sm:$0xff]
        %v925 = vld [vmem:[#allocation5 + $0x50] sm:$0xff]
        %v926 = vld [vmem:[#allocation5 + $0x58] sm:$0xff]
        %v927 = vld [vmem:[#allocation5 + $0x60] sm:$0xff]
        %v928 = vld [vmem:[#allocation5 + $0x68] sm:$0xff]
        %v929 = vld [vmem:[#allocation5 + $0x70] sm:$0xff]
        %v930 = vld [vmem:[#allocation5 + $0x78] sm:$0xff]
        %v931 = vld [vmem:[#allocation7] sm:$0x3]
        %v933 = vlaneseq
        %v934 = vshrl.u32 %v933, 7
        %v935 = vsub.s32 0, %v934
        %v936 = vrot.slane %v931, %v935
        %v937 = vlaneseq
        %v938 = vshrl.u32 %v937, 7
        %v939 = vsub.s32 1, %v938
        %v940 = vrot.slane %v931, %v939
        %v959 = vunpack.c.l.b16 %v915
        %v960 = vunpack.c.h.b16 %v915
        %v961 = vunpack.c.l.b16 %v916
        %v962 = vunpack.c.h.b16 %v916
        %v963 = vunpack.c.l.b16 %v917
        %v964 = vunpack.c.h.b16 %v917
        %v965 = vunpack.c.l.b16 %v918
        %v966 = vunpack.c.h.b16 %v918
        %v967 = vunpack.c.l.b16 %v919
        %v968 = vunpack.c.h.b16 %v919
        %v969 = vunpack.c.l.b16 %v920
        %v970 = vunpack.c.h.b16 %v920
        %v971 = vunpack.c.l.b16 %v921
        %v972 = vunpack.c.h.b16 %v921
        %v973 = vunpack.c.l.b16 %v922
        %v974 = vunpack.c.h.b16 %v922
        %v975 = vunpack.c.l.b16 %v923
        %v976 = vunpack.c.h.b16 %v923
        %v977 = vunpack.c.l.b16 %v924
        %v978 = vunpack.c.h.b16 %v924
        %v979 = vunpack.c.l.b16 %v925
        %v980 = vunpack.c.h.b16 %v925
        %v981 = vunpack.c.l.b16 %v926
        %v982 = vunpack.c.h.b16 %v926
        %v983 = vunpack.c.l.b16 %v927
        %v984 = vunpack.c.h.b16 %v927
        %v985 = vunpack.c.l.b16 %v928
        %v986 = vunpack.c.h.b16 %v928
        %v987 = vunpack.c.l.b16 %v929
        %v988 = vunpack.c.h.b16 %v929
        %v989 = vunpack.c.l.b16 %v930
        %v990 = vunpack.c.h.b16 %v930
        %v991 = vpack.c.b16 %v961, %v959
        %v992 = vpack.c.b16 %v962, %v960
        %v993 = vpack.c.b16 %v965, %v963
        %v994 = vpack.c.b16 %v966, %v964
        %v995 = vpack.c.b16 %v969, %v967
        %v996 = vpack.c.b16 %v970, %v968
        %v997 = vpack.c.b16 %v973, %v971
        %v998 = vpack.c.b16 %v974, %v972
        %v999 = vpack.c.b16 %v977, %v975
        %v1000 = vpack.c.b16 %v978, %v976
        %v1001 = vpack.c.b16 %v981, %v979
        %v1002 = vpack.c.b16 %v982, %v980
        %v1003 = vpack.c.b16 %v985, %v983
        %v1004 = vpack.c.b16 %v986, %v984
        %v1005 = vpack.c.b16 %v989, %v987
        %v1006 = vpack.c.b16 %v990, %v988
        %1023 = vmatprep.subr.bf16.mxu0 %v992
        %1024 = vmatpush1.bf16.msra.mxu0 %v991
        %1025 = vmatprep.subr.bf16.mxu0 %v994
        %1026 = vmatpush1.bf16.msra.mxu0 %v993
        %1027 = vmatprep.subr.bf16.mxu0 %v996
        %1028 = vmatpush1.bf16.msra.mxu0 %v995
        %1029 = vmatprep.subr.bf16.mxu0 %v998
        %1030 = vmatpush1.bf16.msra.mxu0 %v997
        %1031 = vmatprep.subr.bf16.mxu0 %v1000
        %1032 = vmatpush1.bf16.msra.mxu0 %v999
        %1033 = vmatprep.subr.bf16.mxu0 %v1002
        %1034 = vmatpush1.bf16.msra.mxu0 %v1001
        %1035 = vmatprep.subr.bf16.mxu0 %v1004
        %1036 = vmatpush1.bf16.msra.mxu0 %v1003
        %1037 = vmatprep.subr.bf16.mxu0 %v1006
        %1038 = vmatpush1.bf16.msra.mxu0 %v1005
        %1039 = vmatprep.subr.bf16.mxu0 0
        %1040 = vmatpush1.bf16.msra.mxu0 0
        %1041 = vmatprep.subr.bf16.mxu0 0
        %1042 = vmatpush1.bf16.msra.mxu0 0
        %1043 = vmatprep.subr.bf16.mxu0 0
        %1044 = vmatpush1.bf16.msra.mxu0 0
        %1045 = vmatprep.subr.bf16.mxu0 0
        %1046 = vmatpush1.bf16.msra.mxu0 0
        %1047 = vmatprep.subr.bf16.mxu0 0
        %1048 = vmatpush1.bf16.msra.mxu0 0
        %1049 = vmatprep.subr.bf16.mxu0 0
        %1050 = vmatpush1.bf16.msra.mxu0 0
        %1051 = vmatprep.subr.bf16.mxu0 0
        %1052 = vmatpush1.bf16.msra.mxu0 0
        %1053 = vmatprep.subr.bf16.mxu0 0
        %1054 = vmatpush1.bf16.msra.mxu0 0
        %1055 = vmatprep.mubr.bf16.mxu0 0
        %1056 = vmatmul.mubr.bf16.gmra.mrb[0].mxu0 %v899
        %v1057 = vpop.f32.mrb[0].mxu0
        %v1058 = vadd.f32 %v936, %v1057
        %v1059 = vpop.f32.mrb[0].mxu0
        %v1060 = vadd.f32 %v940, %v1059
        %v1061 = vpop.f32.mrb[0].mxu0
        %v1062 = vadd.f32 %v936, %v1061
        %v1063 = vpop.f32.mrb[0].mxu0
        %v1064 = vadd.f32 %v940, %v1063
        %1065 = vmatprep.mubr.bf16.mxu0 0
        %1066 = vmatmul.mubr.bf16.gmra.mrb[0].mxu0 %v900
        %v1067 = vpop.f32.mrb[0].mxu0
        %v1068 = vadd.f32 %v936, %v1067
        %v1069 = vpop.f32.mrb[0].mxu0
        %v1070 = vadd.f32 %v940, %v1069
        %v1071 = vpop.f32.mrb[0].mxu0
        %v1072 = vadd.f32 %v936, %v1071
        %v1073 = vpop.f32.mrb[0].mxu0
        %v1074 = vadd.f32 %v940, %v1073
        %1075 = vmatprep.mubr.bf16.mxu0 0
        %1076 = vmatmul.mubr.bf16.gmra.mrb[0].mxu0 %v901
        %v1077 = vpop.f32.mrb[0].mxu0
        %v1078 = vadd.f32 %v936, %v1077
        %v1079 = vpop.f32.mrb[0].mxu0
        %v1080 = vadd.f32 %v940, %v1079
        %v1081 = vpop.f32.mrb[0].mxu0
        %v1082 = vadd.f32 %v936, %v1081
        %v1083 = vpop.f32.mrb[0].mxu0
        %v1084 = vadd.f32 %v940, %v1083
        %1085 = vmatprep.mubr.bf16.mxu0 0
        %1086 = vmatmul.mubr.bf16.gmra.mrb[0].mxu0 %v902
        %v1087 = vpop.f32.mrb[0].mxu0
        %v1088 = vadd.f32 %v936, %v1087
        %v1089 = vpop.f32.mrb[0].mxu0
        %v1090 = vadd.f32 %v940, %v1089
        %v1091 = vpop.f32.mrb[0].mxu0
        %v1092 = vadd.f32 %v936, %v1091
        %v1093 = vpop.f32.mrb[0].mxu0
        %v1094 = vadd.f32 %v940, %v1093
        %1095 = vmatprep.mubr.bf16.mxu0 0
        %1096 = vmatmul.mubr.bf16.gmra.mrb[0].mxu0 %v903
        %v1097 = vpop.f32.mrb[0].mxu0
        %v1098 = vadd.f32 %v936, %v1097
        %v1099 = vpop.f32.mrb[0].mxu0
        %v1100 = vadd.f32 %v940, %v1099
        %v1101 = vpop.f32.mrb[0].mxu0
        %v1102 = vadd.f32 %v936, %v1101
        %v1103 = vpop.f32.mrb[0].mxu0
        %v1104 = vadd.f32 %v940, %v1103
        %1105 = vmatprep.mubr.bf16.mxu0 0
        %1106 = vmatmul.mubr.bf16.gmra.mrb[0].mxu0 %v904
        %v1107 = vpop.f32.mrb[0].mxu0
        %v1108 = vadd.f32 %v936, %v1107
        %v1109 = vpop.f32.mrb[0].mxu0
        %v1110 = vadd.f32 %v940, %v1109
        %v1111 = vpop.f32.mrb[0].mxu0
        %v1112 = vadd.f32 %v936, %v1111
        %v1113 = vpop.f32.mrb[0].mxu0
        %v1114 = vadd.f32 %v940, %v1113
        %1115 = vmatprep.mubr.bf16.mxu0 0
        %1116 = vmatmul.mubr.bf16.gmra.mrb[0].mxu0 %v905
        %v1117 = vpop.f32.mrb[0].mxu0
        %v1118 = vadd.f32 %v936, %v1117
        %v1119 = vpop.f32.mrb[0].mxu0
        %v1120 = vadd.f32 %v940, %v1119
        %v1121 = vpop.f32.mrb[0].mxu0
        %v1122 = vadd.f32 %v936, %v1121
        %v1123 = vpop.f32.mrb[0].mxu0
        %v1124 = vadd.f32 %v940, %v1123
        %1125 = vmatprep.mubr.bf16.mxu0 0
        %1126 = vmatmul.mubr.bf16.gmra.mrb[0].mxu0 %v906
        %v1127 = vpop.f32.mrb[0].mxu0
        %v1128 = vadd.f32 %v936, %v1127
        %v1129 = vpop.f32.mrb[0].mxu0
        %v1130 = vadd.f32 %v940, %v1129
        %v1131 = vpop.f32.mrb[0].mxu0
        %v1132 = vadd.f32 %v936, %v1131
        %v1133 = vpop.f32.mrb[0].mxu0
        %v1134 = vadd.f32 %v940, %v1133
        %1135 = vmatprep.mubr.bf16.mxu0 0
        %1136 = vmatmul.mubr.bf16.gmra.mrb[0].mxu0 %v907
        %v1137 = vpop.f32.mrb[0].mxu0
        %v1138 = vadd.f32 %v936, %v1137
        %v1139 = vpop.f32.mrb[0].mxu0
        %v1140 = vadd.f32 %v940, %v1139
        %v1141 = vpop.f32.mrb[0].mxu0
        %v1142 = vadd.f32 %v936, %v1141
        %v1143 = vpop.f32.mrb[0].mxu0
        %v1144 = vadd.f32 %v940, %v1143
        %1145 = vmatprep.mubr.bf16.mxu0 0
        %1146 = vmatmul.mubr.bf16.gmra.mrb[0].mxu0 %v908
        %v1147 = vpop.f32.mrb[0].mxu0
        %v1148 = vadd.f32 %v936, %v1147
        %v1149 = vpop.f32.mrb[0].mxu0
        %v1150 = vadd.f32 %v940, %v1149
        %v1151 = vpop.f32.mrb[0].mxu0
        %v1152 = vadd.f32 %v936, %v1151
        %v1153 = vpop.f32.mrb[0].mxu0
        %v1154 = vadd.f32 %v940, %v1153
        %1155 = vmatprep.mubr.bf16.mxu0 0
        %1156 = vmatmul.mubr.bf16.gmra.mrb[0].mxu0 %v909
        %v1157 = vpop.f32.mrb[0].mxu0
        %v1158 = vadd.f32 %v936, %v1157
        %v1159 = vpop.f32.mrb[0].mxu0
        %v1160 = vadd.f32 %v940, %v1159
        %v1161 = vpop.f32.mrb[0].mxu0
        %v1162 = vadd.f32 %v936, %v1161
        %v1163 = vpop.f32.mrb[0].mxu0
        %v1164 = vadd.f32 %v940, %v1163
        %1165 = vmatprep.mubr.bf16.mxu0 0
        %1166 = vmatmul.mubr.bf16.gmra.mrb[0].mxu0 %v910
        %v1167 = vpop.f32.mrb[0].mxu0
        %v1168 = vadd.f32 %v936, %v1167
        %v1169 = vpop.f32.mrb[0].mxu0
        %v1170 = vadd.f32 %v940, %v1169
        %v1171 = vpop.f32.mrb[0].mxu0
        %v1172 = vadd.f32 %v936, %v1171
        %v1173 = vpop.f32.mrb[0].mxu0
        %v1174 = vadd.f32 %v940, %v1173
        %1175 = vmatprep.mubr.bf16.mxu0 0
        %1176 = vmatmul.mubr.bf16.gmra.mrb[0].mxu0 %v911
        %v1177 = vpop.f32.mrb[0].mxu0
        %v1178 = vadd.f32 %v936, %v1177
        %v1179 = vpop.f32.mrb[0].mxu0
        %v1180 = vadd.f32 %v940, %v1179
        %v1181 = vpop.f32.mrb[0].mxu0
        %v1182 = vadd.f32 %v936, %v1181
        %v1183 = vpop.f32.mrb[0].mxu0
        %v1184 = vadd.f32 %v940, %v1183
        %1185 = vmatprep.mubr.bf16.mxu0 0
        %1186 = vmatmul.mubr.bf16.gmra.mrb[0].mxu0 %v912
        %v1187 = vpop.f32.mrb[0].mxu0
        %v1188 = vadd.f32 %v936, %v1187
        %v1189 = vpop.f32.mrb[0].mxu0
        %v1190 = vadd.f32 %v940, %v1189
        %v1191 = vpop.f32.mrb[0].mxu0
        %v1192 = vadd.f32 %v936, %v1191
        %v1193 = vpop.f32.mrb[0].mxu0
        %v1194 = vadd.f32 %v940, %v1193
        %1195 = vmatprep.mubr.bf16.mxu0 0
        %1196 = vmatmul.mubr.bf16.gmra.mrb[0].mxu0 %v913
        %v1197 = vpop.f32.mrb[0].mxu0
        %v1198 = vadd.f32 %v936, %v1197
        %v1199 = vpop.f32.mrb[0].mxu0
        %v1200 = vadd.f32 %v940, %v1199
        %v1201 = vpop.f32.mrb[0].mxu0
        %v1202 = vadd.f32 %v936, %v1201
        %v1203 = vpop.f32.mrb[0].mxu0
        %v1204 = vadd.f32 %v940, %v1203
        %1205 = vmatprep.mubr.bf16.mxu0 0
        %1206 = vmatmul.mubr.bf16.gmra.mrb[0].mxu0 %v914
        %v1207 = vpop.f32.mrb[0].mxu0
        %v1208 = vadd.f32 %v936, %v1207
        %v1209 = vpop.f32.mrb[0].mxu0
        %v1210 = vadd.f32 %v940, %v1209
        %v1211 = vpop.f32.mrb[0].mxu0
        %v1212 = vadd.f32 %v936, %v1211
        %v1213 = vpop.f32.mrb[0].mxu0
        %v1214 = vadd.f32 %v940, %v1213
        %1215 = vdwg.mxu0
        %v1216 = vmax.f32 %v1058, 0.0
        %v1217 = vmax.f32 %v1060, 0.0
        %v1218 = vmax.f32 %v1062, 0.0
        %v1219 = vmax.f32 %v1064, 0.0
        %v1220 = vmax.f32 %v1068, 0.0
        %v1221 = vmax.f32 %v1070, 0.0
        %v1222 = vmax.f32 %v1072, 0.0
        %v1223 = vmax.f32 %v1074, 0.0
        %v1224 = vmax.f32 %v1078, 0.0
        %v1225 = vmax.f32 %v1080, 0.0
        %v1226 = vmax.f32 %v1082, 0.0
        %v1227 = vmax.f32 %v1084, 0.0
        %v1228 = vmax.f32 %v1088, 0.0
        %v1229 = vmax.f32 %v1090, 0.0
        %v1230 = vmax.f32 %v1092, 0.0
        %v1231 = vmax.f32 %v1094, 0.0
        %v1232 = vmax.f32 %v1098, 0.0
        %v1233 = vmax.f32 %v1100, 0.0
        %v1234 = vmax.f32 %v1102, 0.0
        %v1235 = vmax.f32 %v1104, 0.0
        %v1236 = vmax.f32 %v1108, 0.0
        %v1237 = vmax.f32 %v1110, 0.0
        %v1238 = vmax.f32 %v1112, 0.0
        %v1239 = vmax.f32 %v1114, 0.0
        %v1240 = vmax.f32 %v1118, 0.0
        %v1241 = vmax.f32 %v1120, 0.0
        %v1242 = vmax.f32 %v1122, 0.0
        %v1243 = vmax.f32 %v1124, 0.0
        %v1244 = vmax.f32 %v1128, 0.0
        %v1245 = vmax.f32 %v1130, 0.0
        %v1246 = vmax.f32 %v1132, 0.0
        %v1247 = vmax.f32 %v1134, 0.0
        %v1248 = vmax.f32 %v1138, 0.0
        %v1249 = vmax.f32 %v1140, 0.0
        %v1250 = vmax.f32 %v1142, 0.0
        %v1251 = vmax.f32 %v1144, 0.0
        %v1252 = vmax.f32 %v1148, 0.0
        %v1253 = vmax.f32 %v1150, 0.0
        %v1254 = vmax.f32 %v1152, 0.0
        %v1255 = vmax.f32 %v1154, 0.0
        %v1256 = vmax.f32 %v1158, 0.0
        %v1257 = vmax.f32 %v1160, 0.0
        %v1258 = vmax.f32 %v1162, 0.0
        %v1259 = vmax.f32 %v1164, 0.0
        %v1260 = vmax.f32 %v1168, 0.0
        %v1261 = vmax.f32 %v1170, 0.0
        %v1262 = vmax.f32 %v1172, 0.0
        %v1263 = vmax.f32 %v1174, 0.0
        %v1264 = vmax.f32 %v1178, 0.0
        %v1265 = vmax.f32 %v1180, 0.0
        %v1266 = vmax.f32 %v1182, 0.0
        %v1267 = vmax.f32 %v1184, 0.0
        %v1268 = vmax.f32 %v1188, 0.0
        %v1269 = vmax.f32 %v1190, 0.0
        %v1270 = vmax.f32 %v1192, 0.0
        %v1271 = vmax.f32 %v1194, 0.0
        %v1272 = vmax.f32 %v1198, 0.0
        %v1273 = vmax.f32 %v1200, 0.0
        %v1274 = vmax.f32 %v1202, 0.0
        %v1275 = vmax.f32 %v1204, 0.0
        %v1276 = vmax.f32 %v1208, 0.0
        %v1277 = vmax.f32 %v1210, 0.0
        %v1278 = vmax.f32 %v1212, 0.0
        %v1279 = vmax.f32 %v1214, 0.0
        %v1280 = vpack.c.bf16 %v1218, %v1216
        %v1281 = vpack.c.bf16 %v1219, %v1217
        %v1282 = vpack.c.bf16 %v1222, %v1220
        %v1283 = vpack.c.bf16 %v1223, %v1221
        %v1284 = vpack.c.bf16 %v1226, %v1224
        %v1285 = vpack.c.bf16 %v1227, %v1225
        %v1286 = vpack.c.bf16 %v1230, %v1228
        %v1287 = vpack.c.bf16 %v1231, %v1229
        %v1288 = vpack.c.bf16 %v1234, %v1232
        %v1289 = vpack.c.bf16 %v1235, %v1233
        %v1290 = vpack.c.bf16 %v1238, %v1236
        %v1291 = vpack.c.bf16 %v1239, %v1237
        %v1292 = vpack.c.bf16 %v1242, %v1240
        %v1293 = vpack.c.bf16 %v1243, %v1241
        %v1294 = vpack.c.bf16 %v1246, %v1244
        %v1295 = vpack.c.bf16 %v1247, %v1245
        %v1296 = vpack.c.bf16 %v1250, %v1248
        %v1297 = vpack.c.bf16 %v1251, %v1249
        %v1298 = vpack.c.bf16 %v1254, %v1252
        %v1299 = vpack.c.bf16 %v1255, %v1253
        %v1300 = vpack.c.bf16 %v1258, %v1256
        %v1301 = vpack.c.bf16 %v1259, %v1257
        %v1302 = vpack.c.bf16 %v1262, %v1260
        %v1303 = vpack.c.bf16 %v1263, %v1261
        %v1304 = vpack.c.bf16 %v1266, %v1264
        %v1305 = vpack.c.bf16 %v1267, %v1265
        %v1306 = vpack.c.bf16 %v1270, %v1268
        %v1307 = vpack.c.bf16 %v1271, %v1269
        %v1308 = vpack.c.bf16 %v1274, %v1272
        %v1309 = vpack.c.bf16 %v1275, %v1273
        %v1310 = vpack.c.bf16 %v1278, %v1276
        %v1311 = vpack.c.bf16 %v1279, %v1277
        %v1312 = vld [vmem:[#allocation8] sm:$0xff]
        %v1313 = vld [vmem:[#allocation8 + $0x8] sm:$0xff]
        %v1314 = vld [vmem:[#allocation8 + $0x10] sm:$0xff]
        %v1315 = vld [vmem:[#allocation8 + $0x18] sm:$0xff]
        %v1316 = vld [vmem:[#allocation8 + $0x20] sm:$0xff]
        %v1317 = vld [vmem:[#allocation8 + $0x28] sm:$0xff]
        %v1318 = vld [vmem:[#allocation8 + $0x30] sm:$0xff]
        %v1319 = vld [vmem:[#allocation8 + $0x38] sm:$0xff]
        %v1320 = vld [vmem:[#allocation8 + $0x40] sm:$0xff]
        %v1321 = vld [vmem:[#allocation8 + $0x48] sm:$0xff]
        %v1322 = vld [vmem:[#allocation8 + $0x50] sm:$0xff]
        %v1323 = vld [vmem:[#allocation8 + $0x58] sm:$0xff]
        %v1324 = vld [vmem:[#allocation8 + $0x60] sm:$0xff]
        %v1325 = vld [vmem:[#allocation8 + $0x68] sm:$0xff]
        %v1326 = vld [vmem:[#allocation8 + $0x70] sm:$0xff]
        %v1327 = vld [vmem:[#allocation8 + $0x78] sm:$0xff]
        %v1328 = vld [vmem:[#allocation8 + $0x80] sm:$0xff]
        %v1329 = vld [vmem:[#allocation8 + $0x88] sm:$0xff]
        %v1330 = vld [vmem:[#allocation8 + $0x90] sm:$0xff]
        %v1331 = vld [vmem:[#allocation8 + $0x98] sm:$0xff]
        %v1332 = vld [vmem:[#allocation8 + $0xa0] sm:$0xff]
        %v1333 = vld [vmem:[#allocation8 + $0xa8] sm:$0xff]
        %v1334 = vld [vmem:[#allocation8 + $0xb0] sm:$0xff]
        %v1335 = vld [vmem:[#allocation8 + $0xb8] sm:$0xff]
        %v1336 = vld [vmem:[#allocation8 + $0xc0] sm:$0xff]
        %v1337 = vld [vmem:[#allocation8 + $0xc8] sm:$0xff]
        %v1338 = vld [vmem:[#allocation8 + $0xd0] sm:$0xff]
        %v1339 = vld [vmem:[#allocation8 + $0xd8] sm:$0xff]
        %v1340 = vld [vmem:[#allocation8 + $0xe0] sm:$0xff]
        %v1341 = vld [vmem:[#allocation8 + $0xe8] sm:$0xff]
        %v1342 = vld [vmem:[#allocation8 + $0xf0] sm:$0xff]
        %v1343 = vld [vmem:[#allocation8 + $0xf8] sm:$0xff]
        %v1344 = vld [vmem:[#allocation10] sm:$0x3]
        %v1346 = vlaneseq
        %v1347 = vshrl.u32 %v1346, 7
        %v1348 = vsub.s32 0, %v1347
        %v1349 = vrot.slane %v1344, %v1348
        %v1350 = vlaneseq
        %v1351 = vshrl.u32 %v1350, 7
        %v1352 = vsub.s32 1, %v1351
        %v1353 = vrot.slane %v1344, %v1352
        %v1388 = vunpack.c.l.b16 %v1312
        %v1389 = vunpack.c.h.b16 %v1312
        %v1390 = vunpack.c.l.b16 %v1313
        %v1391 = vunpack.c.h.b16 %v1313
        %v1392 = vunpack.c.l.b16 %v1314
        %v1393 = vunpack.c.h.b16 %v1314
        %v1394 = vunpack.c.l.b16 %v1315
        %v1395 = vunpack.c.h.b16 %v1315
        %v1396 = vunpack.c.l.b16 %v1316
        %v1397 = vunpack.c.h.b16 %v1316
        %v1398 = vunpack.c.l.b16 %v1317
        %v1399 = vunpack.c.h.b16 %v1317
        %v1400 = vunpack.c.l.b16 %v1318
        %v1401 = vunpack.c.h.b16 %v1318
        %v1402 = vunpack.c.l.b16 %v1319
        %v1403 = vunpack.c.h.b16 %v1319
        %v1404 = vunpack.c.l.b16 %v1320
        %v1405 = vunpack.c.h.b16 %v1320
        %v1406 = vunpack.c.l.b16 %v1321
        %v1407 = vunpack.c.h.b16 %v1321
        %v1408 = vunpack.c.l.b16 %v1322
        %v1409 = vunpack.c.h.b16 %v1322
        %v1410 = vunpack.c.l.b16 %v1323
        %v1411 = vunpack.c.h.b16 %v1323
        %v1412 = vunpack.c.l.b16 %v1324
        %v1413 = vunpack.c.h.b16 %v1324
        %v1414 = vunpack.c.l.b16 %v1325
        %v1415 = vunpack.c.h.b16 %v1325
        %v1416 = vunpack.c.l.b16 %v1326
        %v1417 = vunpack.c.h.b16 %v1326
        %v1418 = vunpack.c.l.b16 %v1327
        %v1419 = vunpack.c.h.b16 %v1327
        %v1420 = vunpack.c.l.b16 %v1328
        %v1421 = vunpack.c.h.b16 %v1328
        %v1422 = vunpack.c.l.b16 %v1329
        %v1423 = vunpack.c.h.b16 %v1329
        %v1424 = vunpack.c.l.b16 %v1330
        %v1425 = vunpack.c.h.b16 %v1330
        %v1426 = vunpack.c.l.b16 %v1331
        %v1427 = vunpack.c.h.b16 %v1331
        %v1428 = vunpack.c.l.b16 %v1332
        %v1429 = vunpack.c.h.b16 %v1332
        %v1430 = vunpack.c.l.b16 %v1333
        %v1431 = vunpack.c.h.b16 %v1333
        %v1432 = vunpack.c.l.b16 %v1334
        %v1433 = vunpack.c.h.b16 %v1334
        %v1434 = vunpack.c.l.b16 %v1335
        %v1435 = vunpack.c.h.b16 %v1335
        %v1436 = vunpack.c.l.b16 %v1336
        %v1437 = vunpack.c.h.b16 %v1336
        %v1438 = vunpack.c.l.b16 %v1337
        %v1439 = vunpack.c.h.b16 %v1337
        %v1440 = vunpack.c.l.b16 %v1338
        %v1441 = vunpack.c.h.b16 %v1338
        %v1442 = vunpack.c.l.b16 %v1339
        %v1443 = vunpack.c.h.b16 %v1339
        %v1444 = vunpack.c.l.b16 %v1340
        %v1445 = vunpack.c.h.b16 %v1340
        %v1446 = vunpack.c.l.b16 %v1341
        %v1447 = vunpack.c.h.b16 %v1341
        %v1448 = vunpack.c.l.b16 %v1342
        %v1449 = vunpack.c.h.b16 %v1342
        %v1450 = vunpack.c.l.b16 %v1343
        %v1451 = vunpack.c.h.b16 %v1343
        %v1452 = vpack.c.b16 %v1390, %v1388
        %v1453 = vpack.c.b16 %v1391, %v1389
        %v1454 = vpack.c.b16 %v1394, %v1392
        %v1455 = vpack.c.b16 %v1395, %v1393
        %v1456 = vpack.c.b16 %v1398, %v1396
        %v1457 = vpack.c.b16 %v1399, %v1397
        %v1458 = vpack.c.b16 %v1402, %v1400
        %v1459 = vpack.c.b16 %v1403, %v1401
        %v1460 = vpack.c.b16 %v1406, %v1404
        %v1461 = vpack.c.b16 %v1407, %v1405
        %v1462 = vpack.c.b16 %v1410, %v1408
        %v1463 = vpack.c.b16 %v1411, %v1409
        %v1464 = vpack.c.b16 %v1414, %v1412
        %v1465 = vpack.c.b16 %v1415, %v1413
        %v1466 = vpack.c.b16 %v1418, %v1416
        %v1467 = vpack.c.b16 %v1419, %v1417
        %v1468 = vpack.c.b16 %v1422, %v1420
        %v1469 = vpack.c.b16 %v1423, %v1421
        %v1470 = vpack.c.b16 %v1426, %v1424
        %v1471 = vpack.c.b16 %v1427, %v1425
        %v1472 = vpack.c.b16 %v1430, %v1428
        %v1473 = vpack.c.b16 %v1431, %v1429
        %v1474 = vpack.c.b16 %v1434, %v1432
        %v1475 = vpack.c.b16 %v1435, %v1433
        %v1476 = vpack.c.b16 %v1438, %v1436
        %v1477 = vpack.c.b16 %v1439, %v1437
        %v1478 = vpack.c.b16 %v1442, %v1440
        %v1479 = vpack.c.b16 %v1443, %v1441
        %v1480 = vpack.c.b16 %v1446, %v1444
        %v1481 = vpack.c.b16 %v1447, %v1445
        %v1482 = vpack.c.b16 %v1450, %v1448
        %v1483 = vpack.c.b16 %v1451, %v1449
        %1516 = vmatprep.subr.bf16.mxu0 %v1453
        %1517 = vmatpush1.bf16.msra.mxu0 %v1452
        %1518 = vmatprep.subr.bf16.mxu0 %v1455
        %1519 = vmatpush1.bf16.msra.mxu0 %v1454
        %1520 = vmatprep.subr.bf16.mxu0 %v1457
        %1521 = vmatpush1.bf16.msra.mxu0 %v1456
        %1522 = vmatprep.subr.bf16.mxu0 %v1459
        %1523 = vmatpush1.bf16.msra.mxu0 %v1458
        %1524 = vmatprep.subr.bf16.mxu0 %v1461
        %1525 = vmatpush1.bf16.msra.mxu0 %v1460
        %1526 = vmatprep.subr.bf16.mxu0 %v1463
        %1527 = vmatpush1.bf16.msra.mxu0 %v1462
        %1528 = vmatprep.subr.bf16.mxu0 %v1465
        %1529 = vmatpush1.bf16.msra.mxu0 %v1464
        %1530 = vmatprep.subr.bf16.mxu0 %v1467
        %1531 = vmatpush1.bf16.msra.mxu0 %v1466
        %1532 = vmatprep.subr.bf16.mxu0 %v1469
        %1533 = vmatpush1.bf16.msra.mxu0 %v1468
        %1534 = vmatprep.subr.bf16.mxu0 %v1471
        %1535 = vmatpush1.bf16.msra.mxu0 %v1470
        %1536 = vmatprep.subr.bf16.mxu0 %v1473
        %1537 = vmatpush1.bf16.msra.mxu0 %v1472
        %1538 = vmatprep.subr.bf16.mxu0 %v1475
        %1539 = vmatpush1.bf16.msra.mxu0 %v1474
        %1540 = vmatprep.subr.bf16.mxu0 %v1477
        %1541 = vmatpush1.bf16.msra.mxu0 %v1476
        %1542 = vmatprep.subr.bf16.mxu0 %v1479
        %1543 = vmatpush1.bf16.msra.mxu0 %v1478
        %1544 = vmatprep.subr.bf16.mxu0 %v1481
        %1545 = vmatpush1.bf16.msra.mxu0 %v1480
        %1546 = vmatprep.subr.bf16.mxu0 %v1483
        %1547 = vmatpush1.bf16.msra.mxu0 %v1482
        %1548 = vmatprep.mubr.bf16.mxu0 %v1281
        %1549 = vmatmul.mubr.bf16.gmra.mrb[0].mxu0 %v1280
        %v1550 = vpop.f32.mrb[0].mxu0
        %v1551 = vadd.f32 %v1349, %v1550
        %v1552 = vpop.f32.mrb[0].mxu0
        %v1553 = vadd.f32 %v1353, %v1552
        %v1554 = vpop.f32.mrb[0].mxu0
        %v1555 = vadd.f32 %v1349, %v1554
        %v1556 = vpop.f32.mrb[0].mxu0
        %v1557 = vadd.f32 %v1353, %v1556
        %1558 = vmatprep.mubr.bf16.mxu0 %v1283
        %1559 = vmatmul.mubr.bf16.gmra.mrb[0].mxu0 %v1282
        %v1560 = vpop.f32.mrb[0].mxu0
        %v1561 = vadd.f32 %v1349, %v1560
        %v1562 = vpop.f32.mrb[0].mxu0
        %v1563 = vadd.f32 %v1353, %v1562
        %v1564 = vpop.f32.mrb[0].mxu0
        %v1565 = vadd.f32 %v1349, %v1564
        %v1566 = vpop.f32.mrb[0].mxu0
        %v1567 = vadd.f32 %v1353, %v1566
        %1568 = vmatprep.mubr.bf16.mxu0 %v1285
        %1569 = vmatmul.mubr.bf16.gmra.mrb[0].mxu0 %v1284
        %v1570 = vpop.f32.mrb[0].mxu0
        %v1571 = vadd.f32 %v1349, %v1570
        %v1572 = vpop.f32.mrb[0].mxu0
        %v1573 = vadd.f32 %v1353, %v1572
        %v1574 = vpop.f32.mrb[0].mxu0
        %v1575 = vadd.f32 %v1349, %v1574
        %v1576 = vpop.f32.mrb[0].mxu0
        %v1577 = vadd.f32 %v1353, %v1576
        %1578 = vmatprep.mubr.bf16.mxu0 %v1287
        %1579 = vmatmul.mubr.bf16.gmra.mrb[0].mxu0 %v1286
        %v1580 = vpop.f32.mrb[0].mxu0
        %v1581 = vadd.f32 %v1349, %v1580
        %v1582 = vpop.f32.mrb[0].mxu0
        %v1583 = vadd.f32 %v1353, %v1582
        %v1584 = vpop.f32.mrb[0].mxu0
        %v1585 = vadd.f32 %v1349, %v1584
        %v1586 = vpop.f32.mrb[0].mxu0
        %v1587 = vadd.f32 %v1353, %v1586
        %1588 = vmatprep.mubr.bf16.mxu0 %v1289
        %1589 = vmatmul.mubr.bf16.gmra.mrb[0].mxu0 %v1288
        %v1590 = vpop.f32.mrb[0].mxu0
        %v1591 = vadd.f32 %v1349, %v1590
        %v1592 = vpop.f32.mrb[0].mxu0
        %v1593 = vadd.f32 %v1353, %v1592
        %v1594 = vpop.f32.mrb[0].mxu0
        %v1595 = vadd.f32 %v1349, %v1594
        %v1596 = vpop.f32.mrb[0].mxu0
        %v1597 = vadd.f32 %v1353, %v1596
        %1598 = vmatprep.mubr.bf16.mxu0 %v1291
        %1599 = vmatmul.mubr.bf16.gmra.mrb[0].mxu0 %v1290
        %v1600 = vpop.f32.mrb[0].mxu0
        %v1601 = vadd.f32 %v1349, %v1600
        %v1602 = vpop.f32.mrb[0].mxu0
        %v1603 = vadd.f32 %v1353, %v1602
        %v1604 = vpop.f32.mrb[0].mxu0
        %v1605 = vadd.f32 %v1349, %v1604
        %v1606 = vpop.f32.mrb[0].mxu0
        %v1607 = vadd.f32 %v1353, %v1606
        %1608 = vmatprep.mubr.bf16.mxu0 %v1293
        %1609 = vmatmul.mubr.bf16.gmra.mrb[0].mxu0 %v1292
        %v1610 = vpop.f32.mrb[0].mxu0
        %v1611 = vadd.f32 %v1349, %v1610
        %v1612 = vpop.f32.mrb[0].mxu0
        %v1613 = vadd.f32 %v1353, %v1612
        %v1614 = vpop.f32.mrb[0].mxu0
        %v1615 = vadd.f32 %v1349, %v1614
        %v1616 = vpop.f32.mrb[0].mxu0
        %v1617 = vadd.f32 %v1353, %v1616
        %1618 = vmatprep.mubr.bf16.mxu0 %v1295
        %1619 = vmatmul.mubr.bf16.gmra.mrb[0].mxu0 %v1294
        %v1620 = vpop.f32.mrb[0].mxu0
        %v1621 = vadd.f32 %v1349, %v1620
        %v1622 = vpop.f32.mrb[0].mxu0
        %v1623 = vadd.f32 %v1353, %v1622
        %v1624 = vpop.f32.mrb[0].mxu0
        %v1625 = vadd.f32 %v1349, %v1624
        %v1626 = vpop.f32.mrb[0].mxu0
        %v1627 = vadd.f32 %v1353, %v1626
        %1628 = vmatprep.mubr.bf16.mxu0 %v1297
        %1629 = vmatmul.mubr.bf16.gmra.mrb[0].mxu0 %v1296
        %v1630 = vpop.f32.mrb[0].mxu0
        %v1631 = vadd.f32 %v1349, %v1630
        %v1632 = vpop.f32.mrb[0].mxu0
        %v1633 = vadd.f32 %v1353, %v1632
        %v1634 = vpop.f32.mrb[0].mxu0
        %v1635 = vadd.f32 %v1349, %v1634
        %v1636 = vpop.f32.mrb[0].mxu0
        %v1637 = vadd.f32 %v1353, %v1636
        %1638 = vmatprep.mubr.bf16.mxu0 %v1299
        %1639 = vmatmul.mubr.bf16.gmra.mrb[0].mxu0 %v1298
        %v1640 = vpop.f32.mrb[0].mxu0
        %v1641 = vadd.f32 %v1349, %v1640
        %v1642 = vpop.f32.mrb[0].mxu0
        %v1643 = vadd.f32 %v1353, %v1642
        %v1644 = vpop.f32.mrb[0].mxu0
        %v1645 = vadd.f32 %v1349, %v1644
        %v1646 = vpop.f32.mrb[0].mxu0
        %v1647 = vadd.f32 %v1353, %v1646
        %1648 = vmatprep.mubr.bf16.mxu0 %v1301
        %1649 = vmatmul.mubr.bf16.gmra.mrb[0].mxu0 %v1300
        %v1650 = vpop.f32.mrb[0].mxu0
        %v1651 = vadd.f32 %v1349, %v1650
        %v1652 = vpop.f32.mrb[0].mxu0
        %v1653 = vadd.f32 %v1353, %v1652
        %v1654 = vpop.f32.mrb[0].mxu0
        %v1655 = vadd.f32 %v1349, %v1654
        %v1656 = vpop.f32.mrb[0].mxu0
        %v1657 = vadd.f32 %v1353, %v1656
        %1658 = vmatprep.mubr.bf16.mxu0 %v1303
        %1659 = vmatmul.mubr.bf16.gmra.mrb[0].mxu0 %v1302
        %v1660 = vpop.f32.mrb[0].mxu0
        %v1661 = vadd.f32 %v1349, %v1660
        %v1662 = vpop.f32.mrb[0].mxu0
        %v1663 = vadd.f32 %v1353, %v1662
        %v1664 = vpop.f32.mrb[0].mxu0
        %v1665 = vadd.f32 %v1349, %v1664
        %v1666 = vpop.f32.mrb[0].mxu0
        %v1667 = vadd.f32 %v1353, %v1666
        %1668 = vmatprep.mubr.bf16.mxu0 %v1305
        %1669 = vmatmul.mubr.bf16.gmra.mrb[0].mxu0 %v1304
        %v1670 = vpop.f32.mrb[0].mxu0
        %v1671 = vadd.f32 %v1349, %v1670
        %v1672 = vpop.f32.mrb[0].mxu0
        %v1673 = vadd.f32 %v1353, %v1672
        %v1674 = vpop.f32.mrb[0].mxu0
        %v1675 = vadd.f32 %v1349, %v1674
        %v1676 = vpop.f32.mrb[0].mxu0
        %v1677 = vadd.f32 %v1353, %v1676
        %1678 = vmatprep.mubr.bf16.mxu0 %v1307
        %1679 = vmatmul.mubr.bf16.gmra.mrb[0].mxu0 %v1306
        %v1680 = vpop.f32.mrb[0].mxu0
        %v1681 = vadd.f32 %v1349, %v1680
        %v1682 = vpop.f32.mrb[0].mxu0
        %v1683 = vadd.f32 %v1353, %v1682
        %v1684 = vpop.f32.mrb[0].mxu0
        %v1685 = vadd.f32 %v1349, %v1684
        %v1686 = vpop.f32.mrb[0].mxu0
        %v1687 = vadd.f32 %v1353, %v1686
        %1688 = vmatprep.mubr.bf16.mxu0 %v1309
        %1689 = vmatmul.mubr.bf16.gmra.mrb[0].mxu0 %v1308
        %v1690 = vpop.f32.mrb[0].mxu0
        %v1691 = vadd.f32 %v1349, %v1690
        %v1692 = vpop.f32.mrb[0].mxu0
        %v1693 = vadd.f32 %v1353, %v1692
        %v1694 = vpop.f32.mrb[0].mxu0
        %v1695 = vadd.f32 %v1349, %v1694
        %v1696 = vpop.f32.mrb[0].mxu0
        %v1697 = vadd.f32 %v1353, %v1696
        %1698 = vmatprep.mubr.bf16.mxu0 %v1311
        %1699 = vmatmul.mubr.bf16.gmra.mrb[0].mxu0 %v1310
        %v1700 = vpop.f32.mrb[0].mxu0
        %v1701 = vadd.f32 %v1349, %v1700
        %v1702 = vpop.f32.mrb[0].mxu0
        %v1703 = vadd.f32 %v1353, %v1702
        %v1704 = vpop.f32.mrb[0].mxu0
        %v1705 = vadd.f32 %v1349, %v1704
        %v1706 = vpop.f32.mrb[0].mxu0
        %v1707 = vadd.f32 %v1353, %v1706
        %1708 = vdwg.mxu0
        %v1709 = vmax.f32 %v1551, 0.0
        %v1710 = vmax.f32 %v1553, 0.0
        %v1711 = vmax.f32 %v1555, 0.0
        %v1712 = vmax.f32 %v1557, 0.0
        %v1713 = vmax.f32 %v1561, 0.0
        %v1714 = vmax.f32 %v1563, 0.0
        %v1715 = vmax.f32 %v1565, 0.0
        %v1716 = vmax.f32 %v1567, 0.0
        %v1717 = vmax.f32 %v1571, 0.0
        %v1718 = vmax.f32 %v1573, 0.0
        %v1719 = vmax.f32 %v1575, 0.0
        %v1720 = vmax.f32 %v1577, 0.0
        %v1721 = vmax.f32 %v1581, 0.0
        %v1722 = vmax.f32 %v1583, 0.0
        %v1723 = vmax.f32 %v1585, 0.0
        %v1724 = vmax.f32 %v1587, 0.0
        %v1725 = vmax.f32 %v1591, 0.0
        %v1726 = vmax.f32 %v1593, 0.0
        %v1727 = vmax.f32 %v1595, 0.0
        %v1728 = vmax.f32 %v1597, 0.0
        %v1729 = vmax.f32 %v1601, 0.0
        %v1730 = vmax.f32 %v1603, 0.0
        %v1731 = vmax.f32 %v1605, 0.0
        %v1732 = vmax.f32 %v1607, 0.0
        %v1733 = vmax.f32 %v1611, 0.0
        %v1734 = vmax.f32 %v1613, 0.0
        %v1735 = vmax.f32 %v1615, 0.0
        %v1736 = vmax.f32 %v1617, 0.0
        %v1737 = vmax.f32 %v1621, 0.0
        %v1738 = vmax.f32 %v1623, 0.0
        %v1739 = vmax.f32 %v1625, 0.0
        %v1740 = vmax.f32 %v1627, 0.0
        %v1741 = vmax.f32 %v1631, 0.0
        %v1742 = vmax.f32 %v1633, 0.0
        %v1743 = vmax.f32 %v1635, 0.0
        %v1744 = vmax.f32 %v1637, 0.0
        %v1745 = vmax.f32 %v1641, 0.0
        %v1746 = vmax.f32 %v1643, 0.0
        %v1747 = vmax.f32 %v1645, 0.0
        %v1748 = vmax.f32 %v1647, 0.0
        %v1749 = vmax.f32 %v1651, 0.0
        %v1750 = vmax.f32 %v1653, 0.0
        %v1751 = vmax.f32 %v1655, 0.0
        %v1752 = vmax.f32 %v1657, 0.0
        %v1753 = vmax.f32 %v1661, 0.0
        %v1754 = vmax.f32 %v1663, 0.0
        %v1755 = vmax.f32 %v1665, 0.0
        %v1756 = vmax.f32 %v1667, 0.0
        %v1757 = vmax.f32 %v1671, 0.0
        %v1758 = vmax.f32 %v1673, 0.0
        %v1759 = vmax.f32 %v1675, 0.0
        %v1760 = vmax.f32 %v1677, 0.0
        %v1761 = vmax.f32 %v1681, 0.0
        %v1762 = vmax.f32 %v1683, 0.0
        %v1763 = vmax.f32 %v1685, 0.0
        %v1764 = vmax.f32 %v1687, 0.0
        %v1765 = vmax.f32 %v1691, 0.0
        %v1766 = vmax.f32 %v1693, 0.0
        %v1767 = vmax.f32 %v1695, 0.0
        %v1768 = vmax.f32 %v1697, 0.0
        %v1769 = vmax.f32 %v1701, 0.0
        %v1770 = vmax.f32 %v1703, 0.0
        %v1771 = vmax.f32 %v1705, 0.0
        %v1772 = vmax.f32 %v1707, 0.0
        %v1773 = vpack.c.bf16 %v1711, %v1709
        %v1774 = vpack.c.bf16 %v1712, %v1710
        %v1775 = vpack.c.bf16 %v1715, %v1713
        %v1776 = vpack.c.bf16 %v1716, %v1714
        %v1777 = vpack.c.bf16 %v1719, %v1717
        %v1778 = vpack.c.bf16 %v1720, %v1718
        %v1779 = vpack.c.bf16 %v1723, %v1721
        %v1780 = vpack.c.bf16 %v1724, %v1722
        %v1781 = vpack.c.bf16 %v1727, %v1725
        %v1782 = vpack.c.bf16 %v1728, %v1726
        %v1783 = vpack.c.bf16 %v1731, %v1729
        %v1784 = vpack.c.bf16 %v1732, %v1730
        %v1785 = vpack.c.bf16 %v1735, %v1733
        %v1786 = vpack.c.bf16 %v1736, %v1734
        %v1787 = vpack.c.bf16 %v1739, %v1737
        %v1788 = vpack.c.bf16 %v1740, %v1738
        %v1789 = vpack.c.bf16 %v1743, %v1741
        %v1790 = vpack.c.bf16 %v1744, %v1742
        %v1791 = vpack.c.bf16 %v1747, %v1745
        %v1792 = vpack.c.bf16 %v1748, %v1746
        %v1793 = vpack.c.bf16 %v1751, %v1749
        %v1794 = vpack.c.bf16 %v1752, %v1750
        %v1795 = vpack.c.bf16 %v1755, %v1753
        %v1796 = vpack.c.bf16 %v1756, %v1754
        %v1797 = vpack.c.bf16 %v1759, %v1757
        %v1798 = vpack.c.bf16 %v1760, %v1758
        %v1799 = vpack.c.bf16 %v1763, %v1761
        %v1800 = vpack.c.bf16 %v1764, %v1762
        %v1801 = vpack.c.bf16 %v1767, %v1765
        %v1802 = vpack.c.bf16 %v1768, %v1766
        %v1803 = vpack.c.bf16 %v1771, %v1769
        %v1804 = vpack.c.bf16 %v1772, %v1770
        %v1805 = vld [vmem:[#allocation11] sm:$0xf]
        %v1806 = vld [vmem:[#allocation11 + $0x4] sm:$0xf]
        %v1807 = vld [vmem:[#allocation11 + $0x8] sm:$0xf]
        %v1808 = vld [vmem:[#allocation11 + $0xc] sm:$0xf]
        %v1809 = vld [vmem:[#allocation11 + $0x10] sm:$0xf]
        %v1810 = vld [vmem:[#allocation11 + $0x14] sm:$0xf]
        %v1811 = vld [vmem:[#allocation11 + $0x18] sm:$0xf]
        %v1812 = vld [vmem:[#allocation11 + $0x1c] sm:$0xf]
        %v1813 = vld [vmem:[#allocation11 + $0x20] sm:$0xf]
        %v1814 = vld [vmem:[#allocation11 + $0x24] sm:$0xf]
        %v1815 = vld [vmem:[#allocation11 + $0x28] sm:$0xf]
        %v1816 = vld [vmem:[#allocation11 + $0x2c] sm:$0xf]
        %v1817 = vld [vmem:[#allocation11 + $0x30] sm:$0xf]
        %v1818 = vld [vmem:[#allocation11 + $0x34] sm:$0xf]
        %v1819 = vld [vmem:[#allocation11 + $0x38] sm:$0xf]
        %v1820 = vld [vmem:[#allocation11 + $0x3c] sm:$0xf]
        %v1821 = vld [vmem:[#allocation11 + $0x40] sm:$0xf]
        %v1822 = vld [vmem:[#allocation11 + $0x44] sm:$0xf]
        %v1823 = vld [vmem:[#allocation11 + $0x48] sm:$0xf]
        %v1824 = vld [vmem:[#allocation11 + $0x4c] sm:$0xf]
        %v1825 = vld [vmem:[#allocation11 + $0x50] sm:$0xf]
        %v1826 = vld [vmem:[#allocation11 + $0x54] sm:$0xf]
        %v1827 = vld [vmem:[#allocation11 + $0x58] sm:$0xf]
        %v1828 = vld [vmem:[#allocation11 + $0x5c] sm:$0xf]
        %v1829 = vld [vmem:[#allocation11 + $0x60] sm:$0xf]
        %v1830 = vld [vmem:[#allocation11 + $0x64] sm:$0xf]
        %v1831 = vld [vmem:[#allocation11 + $0x68] sm:$0xf]
        %v1832 = vld [vmem:[#allocation11 + $0x6c] sm:$0xf]
        %v1833 = vld [vmem:[#allocation11 + $0x70] sm:$0xf]
        %v1834 = vld [vmem:[#allocation11 + $0x74] sm:$0xf]
        %v1835 = vld [vmem:[#allocation11 + $0x78] sm:$0xf]
        %v1836 = vld [vmem:[#allocation11 + $0x7c] sm:$0xf]
        %v1837 = vld [vmem:[#allocation13] sm:$0x1]
        %v1839 = vlaneseq
        %v1840 = vshrl.u32 %v1839, 7
        %v1841 = vsub.s32 0, %v1840
        %v1842 = vrot.slane %v1837, %v1841
        %v1876 = vunpack.c.l.b16 %v1805
        %v1877 = vunpack.c.l.b16 %v1806
        %v1878 = vunpack.c.l.b16 %v1807
        %v1879 = vunpack.c.l.b16 %v1808
        %v1880 = vunpack.c.l.b16 %v1809
        %v1881 = vunpack.c.l.b16 %v1810
        %v1882 = vunpack.c.l.b16 %v1811
        %v1883 = vunpack.c.l.b16 %v1812
        %v1884 = vunpack.c.l.b16 %v1813
        %v1885 = vunpack.c.l.b16 %v1814
        %v1886 = vunpack.c.l.b16 %v1815
        %v1887 = vunpack.c.l.b16 %v1816
        %v1888 = vunpack.c.l.b16 %v1817
        %v1889 = vunpack.c.l.b16 %v1818
        %v1890 = vunpack.c.l.b16 %v1819
        %v1891 = vunpack.c.l.b16 %v1820
        %v1892 = vunpack.c.l.b16 %v1821
        %v1893 = vunpack.c.l.b16 %v1822
        %v1894 = vunpack.c.l.b16 %v1823
        %v1895 = vunpack.c.l.b16 %v1824
        %v1896 = vunpack.c.l.b16 %v1825
        %v1897 = vunpack.c.l.b16 %v1826
        %v1898 = vunpack.c.l.b16 %v1827
        %v1899 = vunpack.c.l.b16 %v1828
        %v1900 = vunpack.c.l.b16 %v1829
        %v1901 = vunpack.c.l.b16 %v1830
        %v1902 = vunpack.c.l.b16 %v1831
        %v1903 = vunpack.c.l.b16 %v1832
        %v1904 = vunpack.c.l.b16 %v1833
        %v1905 = vunpack.c.l.b16 %v1834
        %v1906 = vunpack.c.l.b16 %v1835
        %v1907 = vunpack.c.l.b16 %v1836
        %v1908 = vpack.c.b16 %v1877, %v1876
        %v1909 = vpack.c.b16 %v1879, %v1878
        %v1910 = vpack.c.b16 %v1881, %v1880
        %v1911 = vpack.c.b16 %v1883, %v1882
        %v1912 = vpack.c.b16 %v1885, %v1884
        %v1913 = vpack.c.b16 %v1887, %v1886
        %v1914 = vpack.c.b16 %v1889, %v1888
        %v1915 = vpack.c.b16 %v1891, %v1890
        %v1916 = vpack.c.b16 %v1893, %v1892
        %v1917 = vpack.c.b16 %v1895, %v1894
        %v1918 = vpack.c.b16 %v1897, %v1896
        %v1919 = vpack.c.b16 %v1899, %v1898
        %v1920 = vpack.c.b16 %v1901, %v1900
        %v1921 = vpack.c.b16 %v1903, %v1902
        %v1922 = vpack.c.b16 %v1905, %v1904
        %v1923 = vpack.c.b16 %v1907, %v1906
        %1940 = vmatprep.subr.bf16.mxu0 0
        %1941 = vmatpush1.bf16.msra.mxu0 %v1908
        %1942 = vmatprep.subr.bf16.mxu0 0
        %1943 = vmatpush1.bf16.msra.mxu0 %v1909
        %1944 = vmatprep.subr.bf16.mxu0 0
        %1945 = vmatpush1.bf16.msra.mxu0 %v1910
        %1946 = vmatprep.subr.bf16.mxu0 0
        %1947 = vmatpush1.bf16.msra.mxu0 %v1911
        %1948 = vmatprep.subr.bf16.mxu0 0
        %1949 = vmatpush1.bf16.msra.mxu0 %v1912
        %1950 = vmatprep.subr.bf16.mxu0 0
        %1951 = vmatpush1.bf16.msra.mxu0 %v1913
        %1952 = vmatprep.subr.bf16.mxu0 0
        %1953 = vmatpush1.bf16.msra.mxu0 %v1914
        %1954 = vmatprep.subr.bf16.mxu0 0
        %1955 = vmatpush1.bf16.msra.mxu0 %v1915
        %1956 = vmatprep.subr.bf16.mxu0 0
        %1957 = vmatpush1.bf16.msra.mxu0 %v1916
        %1958 = vmatprep.subr.bf16.mxu0 0
        %1959 = vmatpush1.bf16.msra.mxu0 %v1917
        %1960 = vmatprep.subr.bf16.mxu0 0
        %1961 = vmatpush1.bf16.msra.mxu0 %v1918
        %1962 = vmatprep.subr.bf16.mxu0 0
        %1963 = vmatpush1.bf16.msra.mxu0 %v1919
        %1964 = vmatprep.subr.bf16.mxu0 0
        %1965 = vmatpush1.bf16.msra.mxu0 %v1920
        %1966 = vmatprep.subr.bf16.mxu0 0
        %1967 = vmatpush1.bf16.msra.mxu0 %v1921
        %1968 = vmatprep.subr.bf16.mxu0 0
        %1969 = vmatpush1.bf16.msra.mxu0 %v1922
        %1970 = vmatprep.subr.bf16.mxu0 0
        %1971 = vmatpush1.bf16.msra.mxu0 %v1923
        %1972 = vmatprep.mubr.bf16.mxu0 %v1774
        %1973 = vmatmul.mubr.bf16.gmra.mrb[0].mxu0 %v1773
        %v1974 = vpop.f32.mrb[0].mxu0
        %v1975 = vadd.f32 %v1842, %v1974
        %v1976 = vpop.f32.mrb[0].mxu0
        %v1977 = vpop.f32.mrb[0].mxu0
        %v1978 = vadd.f32 %v1842, %v1977
        %v1979 = vpop.f32.mrb[0].mxu0
        %1980 = vmatprep.mubr.bf16.mxu0 %v1776
        %1981 = vmatmul.mubr.bf16.gmra.mrb[0].mxu0 %v1775
        %v1982 = vpop.f32.mrb[0].mxu0
        %v1983 = vadd.f32 %v1842, %v1982
        %v1984 = vpop.f32.mrb[0].mxu0
        %v1985 = vpop.f32.mrb[0].mxu0
        %v1986 = vadd.f32 %v1842, %v1985
        %v1987 = vpop.f32.mrb[0].mxu0
        %1988 = vmatprep.mubr.bf16.mxu0 %v1778
        %1989 = vmatmul.mubr.bf16.gmra.mrb[0].mxu0 %v1777
        %v1990 = vpop.f32.mrb[0].mxu0
        %v1991 = vadd.f32 %v1842, %v1990
        %v1992 = vpop.f32.mrb[0].mxu0
        %v1993 = vpop.f32.mrb[0].mxu0
        %v1994 = vadd.f32 %v1842, %v1993
        %v1995 = vpop.f32.mrb[0].mxu0
        %1996 = vmatprep.mubr.bf16.mxu0 %v1780
        %1997 = vmatmul.mubr.bf16.gmra.mrb[0].mxu0 %v1779
        %v1998 = vpop.f32.mrb[0].mxu0
        %v1999 = vadd.f32 %v1842, %v1998
        %v2000 = vpop.f32.mrb[0].mxu0
        %v2001 = vpop.f32.mrb[0].mxu0
        %v2002 = vadd.f32 %v1842, %v2001
        %v2003 = vpop.f32.mrb[0].mxu0
        %2004 = vmatprep.mubr.bf16.mxu0 %v1782
        %2005 = vmatmul.mubr.bf16.gmra.mrb[0].mxu0 %v1781
        %v2006 = vpop.f32.mrb[0].mxu0
        %v2007 = vadd.f32 %v1842, %v2006
        %v2008 = vpop.f32.mrb[0].mxu0
        %v2009 = vpop.f32.mrb[0].mxu0
        %v2010 = vadd.f32 %v1842, %v2009
        %v2011 = vpop.f32.mrb[0].mxu0
        %2012 = vmatprep.mubr.bf16.mxu0 %v1784
        %2013 = vmatmul.mubr.bf16.gmra.mrb[0].mxu0 %v1783
        %v2014 = vpop.f32.mrb[0].mxu0
        %v2015 = vadd.f32 %v1842, %v2014
        %v2016 = vpop.f32.mrb[0].mxu0
        %v2017 = vpop.f32.mrb[0].mxu0
        %v2018 = vadd.f32 %v1842, %v2017
        %v2019 = vpop.f32.mrb[0].mxu0
        %2020 = vmatprep.mubr.bf16.mxu0 %v1786
        %2021 = vmatmul.mubr.bf16.gmra.mrb[0].mxu0 %v1785
        %v2022 = vpop.f32.mrb[0].mxu0
        %v2023 = vadd.f32 %v1842, %v2022
        %v2024 = vpop.f32.mrb[0].mxu0
        %v2025 = vpop.f32.mrb[0].mxu0
        %v2026 = vadd.f32 %v1842, %v2025
        %v2027 = vpop.f32.mrb[0].mxu0
        %2028 = vmatprep.mubr.bf16.mxu0 %v1788
        %2029 = vmatmul.mubr.bf16.gmra.mrb[0].mxu0 %v1787
        %v2030 = vpop.f32.mrb[0].mxu0
        %v2031 = vadd.f32 %v1842, %v2030
        %v2032 = vpop.f32.mrb[0].mxu0
        %v2033 = vpop.f32.mrb[0].mxu0
        %v2034 = vadd.f32 %v1842, %v2033
        %v2035 = vpop.f32.mrb[0].mxu0
        %2036 = vmatprep.mubr.bf16.mxu0 %v1790
        %2037 = vmatmul.mubr.bf16.gmra.mrb[0].mxu0 %v1789
        %v2038 = vpop.f32.mrb[0].mxu0
        %v2039 = vadd.f32 %v1842, %v2038
        %v2040 = vpop.f32.mrb[0].mxu0
        %v2041 = vpop.f32.mrb[0].mxu0
        %v2042 = vadd.f32 %v1842, %v2041
        %v2043 = vpop.f32.mrb[0].mxu0
        %2044 = vmatprep.mubr.bf16.mxu0 %v1792
        %2045 = vmatmul.mubr.bf16.gmra.mrb[0].mxu0 %v1791
        %v2046 = vpop.f32.mrb[0].mxu0
        %v2047 = vadd.f32 %v1842, %v2046
        %v2048 = vpop.f32.mrb[0].mxu0
        %v2049 = vpop.f32.mrb[0].mxu0
        %v2050 = vadd.f32 %v1842, %v2049
        %v2051 = vpop.f32.mrb[0].mxu0
        %2052 = vmatprep.mubr.bf16.mxu0 %v1794
        %2053 = vmatmul.mubr.bf16.gmra.mrb[0].mxu0 %v1793
        %v2054 = vpop.f32.mrb[0].mxu0
        %v2055 = vadd.f32 %v1842, %v2054
        %v2056 = vpop.f32.mrb[0].mxu0
        %v2057 = vpop.f32.mrb[0].mxu0
        %v2058 = vadd.f32 %v1842, %v2057
        %v2059 = vpop.f32.mrb[0].mxu0
        %2060 = vmatprep.mubr.bf16.mxu0 %v1796
        %2061 = vmatmul.mubr.bf16.gmra.mrb[0].mxu0 %v1795
        %v2062 = vpop.f32.mrb[0].mxu0
        %v2063 = vadd.f32 %v1842, %v2062
        %v2064 = vpop.f32.mrb[0].mxu0
        %v2065 = vpop.f32.mrb[0].mxu0
        %v2066 = vadd.f32 %v1842, %v2065
        %v2067 = vpop.f32.mrb[0].mxu0
        %2068 = vmatprep.mubr.bf16.mxu0 %v1798
        %2069 = vmatmul.mubr.bf16.gmra.mrb[0].mxu0 %v1797
        %v2070 = vpop.f32.mrb[0].mxu0
        %v2071 = vadd.f32 %v1842, %v2070
        %v2072 = vpop.f32.mrb[0].mxu0
        %v2073 = vpop.f32.mrb[0].mxu0
        %v2074 = vadd.f32 %v1842, %v2073
        %v2075 = vpop.f32.mrb[0].mxu0
        %2076 = vmatprep.mubr.bf16.mxu0 %v1800
        %2077 = vmatmul.mubr.bf16.gmra.mrb[0].mxu0 %v1799
        %v2078 = vpop.f32.mrb[0].mxu0
        %v2079 = vadd.f32 %v1842, %v2078
        %v2080 = vpop.f32.mrb[0].mxu0
        %v2081 = vpop.f32.mrb[0].mxu0
        %v2082 = vadd.f32 %v1842, %v2081
        %v2083 = vpop.f32.mrb[0].mxu0
        %2084 = vmatprep.mubr.bf16.mxu0 %v1802
        %2085 = vmatmul.mubr.bf16.gmra.mrb[0].mxu0 %v1801
        %v2086 = vpop.f32.mrb[0].mxu0
        %v2087 = vadd.f32 %v1842, %v2086
        %v2088 = vpop.f32.mrb[0].mxu0
        %v2089 = vpop.f32.mrb[0].mxu0
        %v2090 = vadd.f32 %v1842, %v2089
        %v2091 = vpop.f32.mrb[0].mxu0
        %2092 = vmatprep.mubr.bf16.mxu0 %v1804
        %2093 = vmatmul.mubr.bf16.gmra.mrb[0].mxu0 %v1803
        %v2094 = vpop.f32.mrb[0].mxu0
        %v2095 = vadd.f32 %v1842, %v2094
        %v2096 = vpop.f32.mrb[0].mxu0
        %v2097 = vpop.f32.mrb[0].mxu0
        %v2098 = vadd.f32 %v1842, %v2097
        %v2099 = vpop.f32.mrb[0].mxu0
        %2100 = vdwg.mxu0
        %v2101 = vadd.f32 %v867, %v1975
        %v2102 = vadd.f32 %v868, %v1978
        %v2103 = vadd.f32 %v869, %v1983
        %v2104 = vadd.f32 %v870, %v1986
        %v2105 = vadd.f32 %v871, %v1991
        %v2106 = vadd.f32 %v872, %v1994
        %v2107 = vadd.f32 %v873, %v1999
        %v2108 = vadd.f32 %v874, %v2002
        %v2109 = vadd.f32 %v875, %v2007
        %v2110 = vadd.f32 %v876, %v2010
        %v2111 = vadd.f32 %v877, %v2015
        %v2112 = vadd.f32 %v878, %v2018
        %v2113 = vadd.f32 %v879, %v2023
        %v2114 = vadd.f32 %v880, %v2026
        %v2115 = vadd.f32 %v881, %v2031
        %v2116 = vadd.f32 %v882, %v2034
        %v2117 = vadd.f32 %v883, %v2039
        %v2118 = vadd.f32 %v884, %v2042
        %v2119 = vadd.f32 %v885, %v2047
        %v2120 = vadd.f32 %v886, %v2050
        %v2121 = vadd.f32 %v887, %v2055
        %v2122 = vadd.f32 %v888, %v2058
        %v2123 = vadd.f32 %v889, %v2063
        %v2124 = vadd.f32 %v890, %v2066
        %v2125 = vadd.f32 %v891, %v2071
        %v2126 = vadd.f32 %v892, %v2074
        %v2127 = vadd.f32 %v893, %v2079
        %v2128 = vadd.f32 %v894, %v2082
        %v2129 = vadd.f32 %v895, %v2087
        %v2130 = vadd.f32 %v896, %v2090
        %v2131 = vadd.f32 %v897, %v2095
        %v2132 = vadd.f32 %v898, %v2098
        %v2133 = vpack.c.bf16 %v2102, %v2101
        %v2134 = vpack.c.bf16 %v2104, %v2103
        %v2135 = vpack.c.bf16 %v2106, %v2105
        %v2136 = vpack.c.bf16 %v2108, %v2107
        %v2137 = vpack.c.bf16 %v2110, %v2109
        %v2138 = vpack.c.bf16 %v2112, %v2111
        %v2139 = vpack.c.bf16 %v2114, %v2113
        %v2140 = vpack.c.bf16 %v2116, %v2115
        %v2141 = vpack.c.bf16 %v2118, %v2117
        %v2142 = vpack.c.bf16 %v2120, %v2119
        %v2143 = vpack.c.bf16 %v2122, %v2121
        %v2144 = vpack.c.bf16 %v2124, %v2123
        %v2145 = vpack.c.bf16 %v2126, %v2125
        %v2146 = vpack.c.bf16 %v2128, %v2127
        %v2147 = vpack.c.bf16 %v2130, %v2129
        %v2148 = vpack.c.bf16 %v2132, %v2131
        %v2149 = vld [vmem:[#allocation14] sm:$0xff]
        %v2150 = vld [vmem:[#allocation14 + $0x8] sm:$0xff]
        %v2151 = vld [vmem:[#allocation14 + $0x10] sm:$0xff]
        %v2152 = vld [vmem:[#allocation14 + $0x18] sm:$0xff]
        %v2153 = vld [vmem:[#allocation14 + $0x20] sm:$0xff]
        %v2154 = vld [vmem:[#allocation14 + $0x28] sm:$0xff]
        %v2155 = vld [vmem:[#allocation14 + $0x30] sm:$0xff]
        %v2156 = vld [vmem:[#allocation14 + $0x38] sm:$0xff]
        %v2157 = vld [vmem:[#allocation14 + $0x40] sm:$0xff]
        %v2158 = vld [vmem:[#allocation14 + $0x48] sm:$0xff]
        %v2159 = vld [vmem:[#allocation14 + $0x50] sm:$0xff]
        %v2160 = vld [vmem:[#allocation14 + $0x58] sm:$0xff]
        %v2161 = vld [vmem:[#allocation14 + $0x60] sm:$0xff]
        %v2162 = vld [vmem:[#allocation14 + $0x68] sm:$0xff]
        %v2163 = vld [vmem:[#allocation14 + $0x70] sm:$0xff]
        %v2164 = vld [vmem:[#allocation14 + $0x78] sm:$0xff]
        %v2165 = vld [vmem:[#allocation16] sm:$0x3]
        %v2167 = vlaneseq
        %v2168 = vshrl.u32 %v2167, 7
        %v2169 = vsub.s32 0, %v2168
        %v2170 = vrot.slane %v2165, %v2169
        %v2171 = vlaneseq
        %v2172 = vshrl.u32 %v2171, 7
        %v2173 = vsub.s32 1, %v2172
        %v2174 = vrot.slane %v2165, %v2173
        %v2193 = vunpack.c.l.b16 %v2149
        %v2194 = vunpack.c.h.b16 %v2149
        %v2195 = vunpack.c.l.b16 %v2150
        %v2196 = vunpack.c.h.b16 %v2150
        %v2197 = vunpack.c.l.b16 %v2151
        %v2198 = vunpack.c.h.b16 %v2151
        %v2199 = vunpack.c.l.b16 %v2152
        %v2200 = vunpack.c.h.b16 %v2152
        %v2201 = vunpack.c.l.b16 %v2153
        %v2202 = vunpack.c.h.b16 %v2153
        %v2203 = vunpack.c.l.b16 %v2154
        %v2204 = vunpack.c.h.b16 %v2154
        %v2205 = vunpack.c.l.b16 %v2155
        %v2206 = vunpack.c.h.b16 %v2155
        %v2207 = vunpack.c.l.b16 %v2156
        %v2208 = vunpack.c.h.b16 %v2156
        %v2209 = vunpack.c.l.b16 %v2157
        %v2210 = vunpack.c.h.b16 %v2157
        %v2211 = vunpack.c.l.b16 %v2158
        %v2212 = vunpack.c.h.b16 %v2158
        %v2213 = vunpack.c.l.b16 %v2159
        %v2214 = vunpack.c.h.b16 %v2159
        %v2215 = vunpack.c.l.b16 %v2160
        %v2216 = vunpack.c.h.b16 %v2160
        %v2217 = vunpack.c.l.b16 %v2161
        %v2218 = vunpack.c.h.b16 %v2161
        %v2219 = vunpack.c.l.b16 %v2162
        %v2220 = vunpack.c.h.b16 %v2162
        %v2221 = vunpack.c.l.b16 %v2163
        %v2222 = vunpack.c.h.b16 %v2163
        %v2223 = vunpack.c.l.b16 %v2164
        %v2224 = vunpack.c.h.b16 %v2164
        %v2225 = vpack.c.b16 %v2195, %v2193
        %v2226 = vpack.c.b16 %v2196, %v2194
        %v2227 = vpack.c.b16 %v2199, %v2197
        %v2228 = vpack.c.b16 %v2200, %v2198
        %v2229 = vpack.c.b16 %v2203, %v2201
        %v2230 = vpack.c.b16 %v2204, %v2202
        %v2231 = vpack.c.b16 %v2207, %v2205
        %v2232 = vpack.c.b16 %v2208, %v2206
        %v2233 = vpack.c.b16 %v2211, %v2209
        %v2234 = vpack.c.b16 %v2212, %v2210
        %v2235 = vpack.c.b16 %v2215, %v2213
        %v2236 = vpack.c.b16 %v2216, %v2214
        %v2237 = vpack.c.b16 %v2219, %v2217
        %v2238 = vpack.c.b16 %v2220, %v2218
        %v2239 = vpack.c.b16 %v2223, %v2221
        %v2240 = vpack.c.b16 %v2224, %v2222
        %2257 = vmatprep.subr.bf16.mxu0 %v2226
        %2258 = vmatpush1.bf16.msra.mxu0 %v2225
        %2259 = vmatprep.subr.bf16.mxu0 %v2228
        %2260 = vmatpush1.bf16.msra.mxu0 %v2227
        %2261 = vmatprep.subr.bf16.mxu0 %v2230
        %2262 = vmatpush1.bf16.msra.mxu0 %v2229
        %2263 = vmatprep.subr.bf16.mxu0 %v2232
        %2264 = vmatpush1.bf16.msra.mxu0 %v2231
        %2265 = vmatprep.subr.bf16.mxu0 %v2234
        %2266 = vmatpush1.bf16.msra.mxu0 %v2233
        %2267 = vmatprep.subr.bf16.mxu0 %v2236
        %2268 = vmatpush1.bf16.msra.mxu0 %v2235
        %2269 = vmatprep.subr.bf16.mxu0 %v2238
        %2270 = vmatpush1.bf16.msra.mxu0 %v2237
        %2271 = vmatprep.subr.bf16.mxu0 %v2240
        %2272 = vmatpush1.bf16.msra.mxu0 %v2239
        %2273 = vmatprep.subr.bf16.mxu0 0
        %2274 = vmatpush1.bf16.msra.mxu0 0
        %2275 = vmatprep.subr.bf16.mxu0 0
        %2276 = vmatpush1.bf16.msra.mxu0 0
        %2277 = vmatprep.subr.bf16.mxu0 0
        %2278 = vmatpush1.bf16.msra.mxu0 0
        %2279 = vmatprep.subr.bf16.mxu0 0
        %2280 = vmatpush1.bf16.msra.mxu0 0
        %2281 = vmatprep.subr.bf16.mxu0 0
        %2282 = vmatpush1.bf16.msra.mxu0 0
        %2283 = vmatprep.subr.bf16.mxu0 0
        %2284 = vmatpush1.bf16.msra.mxu0 0
        %2285 = vmatprep.subr.bf16.mxu0 0
        %2286 = vmatpush1.bf16.msra.mxu0 0
        %2287 = vmatprep.subr.bf16.mxu0 0
        %2288 = vmatpush1.bf16.msra.mxu0 0
        %2289 = vmatprep.mubr.bf16.mxu0 0
        %2290 = vmatmul.mubr.bf16.gmra.mrb[0].mxu0 %v2133
        %v2291 = vpop.f32.mrb[0].mxu0
        %v2292 = vadd.f32 %v2170, %v2291
        %v2293 = vpop.f32.mrb[0].mxu0
        %v2294 = vadd.f32 %v2174, %v2293
        %v2295 = vpop.f32.mrb[0].mxu0
        %v2296 = vadd.f32 %v2170, %v2295
        %v2297 = vpop.f32.mrb[0].mxu0
        %v2298 = vadd.f32 %v2174, %v2297
        %2299 = vmatprep.mubr.bf16.mxu0 0
        %2300 = vmatmul.mubr.bf16.gmra.mrb[0].mxu0 %v2134
        %v2301 = vpop.f32.mrb[0].mxu0
        %v2302 = vadd.f32 %v2170, %v2301
        %v2303 = vpop.f32.mrb[0].mxu0
        %v2304 = vadd.f32 %v2174, %v2303
        %v2305 = vpop.f32.mrb[0].mxu0
        %v2306 = vadd.f32 %v2170, %v2305
        %v2307 = vpop.f32.mrb[0].mxu0
        %v2308 = vadd.f32 %v2174, %v2307
        %2309 = vmatprep.mubr.bf16.mxu0 0
        %2310 = vmatmul.mubr.bf16.gmra.mrb[0].mxu0 %v2135
        %v2311 = vpop.f32.mrb[0].mxu0
        %v2312 = vadd.f32 %v2170, %v2311
        %v2313 = vpop.f32.mrb[0].mxu0
        %v2314 = vadd.f32 %v2174, %v2313
        %v2315 = vpop.f32.mrb[0].mxu0
        %v2316 = vadd.f32 %v2170, %v2315
        %v2317 = vpop.f32.mrb[0].mxu0
        %v2318 = vadd.f32 %v2174, %v2317
        %2319 = vmatprep.mubr.bf16.mxu0 0
        %2320 = vmatmul.mubr.bf16.gmra.mrb[0].mxu0 %v2136
        %v2321 = vpop.f32.mrb[0].mxu0
        %v2322 = vadd.f32 %v2170, %v2321
        %v2323 = vpop.f32.mrb[0].mxu0
        %v2324 = vadd.f32 %v2174, %v2323
        %v2325 = vpop.f32.mrb[0].mxu0
        %v2326 = vadd.f32 %v2170, %v2325
        %v2327 = vpop.f32.mrb[0].mxu0
        %v2328 = vadd.f32 %v2174, %v2327
        %2329 = vmatprep.mubr.bf16.mxu0 0
        %2330 = vmatmul.mubr.bf16.gmra.mrb[0].mxu0 %v2137
        %v2331 = vpop.f32.mrb[0].mxu0
        %v2332 = vadd.f32 %v2170, %v2331
        %v2333 = vpop.f32.mrb[0].mxu0
        %v2334 = vadd.f32 %v2174, %v2333
        %v2335 = vpop.f32.mrb[0].mxu0
        %v2336 = vadd.f32 %v2170, %v2335
        %v2337 = vpop.f32.mrb[0].mxu0
        %v2338 = vadd.f32 %v2174, %v2337
        %2339 = vmatprep.mubr.bf16.mxu0 0
        %2340 = vmatmul.mubr.bf16.gmra.mrb[0].mxu0 %v2138
        %v2341 = vpop.f32.mrb[0].mxu0
        %v2342 = vadd.f32 %v2170, %v2341
        %v2343 = vpop.f32.mrb[0].mxu0
        %v2344 = vadd.f32 %v2174, %v2343
        %v2345 = vpop.f32.mrb[0].mxu0
        %v2346 = vadd.f32 %v2170, %v2345
        %v2347 = vpop.f32.mrb[0].mxu0
        %v2348 = vadd.f32 %v2174, %v2347
        %2349 = vmatprep.mubr.bf16.mxu0 0
        %2350 = vmatmul.mubr.bf16.gmra.mrb[0].mxu0 %v2139
        %v2351 = vpop.f32.mrb[0].mxu0
        %v2352 = vadd.f32 %v2170, %v2351
        %v2353 = vpop.f32.mrb[0].mxu0
        %v2354 = vadd.f32 %v2174, %v2353
        %v2355 = vpop.f32.mrb[0].mxu0
        %v2356 = vadd.f32 %v2170, %v2355
        %v2357 = vpop.f32.mrb[0].mxu0
        %v2358 = vadd.f32 %v2174, %v2357
        %2359 = vmatprep.mubr.bf16.mxu0 0
        %2360 = vmatmul.mubr.bf16.gmra.mrb[0].mxu0 %v2140
        %v2361 = vpop.f32.mrb[0].mxu0
        %v2362 = vadd.f32 %v2170, %v2361
        %v2363 = vpop.f32.mrb[0].mxu0
        %v2364 = vadd.f32 %v2174, %v2363
        %v2365 = vpop.f32.mrb[0].mxu0
        %v2366 = vadd.f32 %v2170, %v2365
        %v2367 = vpop.f32.mrb[0].mxu0
        %v2368 = vadd.f32 %v2174, %v2367
        %2369 = vmatprep.mubr.bf16.mxu0 0
        %2370 = vmatmul.mubr.bf16.gmra.mrb[0].mxu0 %v2141
        %v2371 = vpop.f32.mrb[0].mxu0
        %v2372 = vadd.f32 %v2170, %v2371
        %v2373 = vpop.f32.mrb[0].mxu0
        %v2374 = vadd.f32 %v2174, %v2373
        %v2375 = vpop.f32.mrb[0].mxu0
        %v2376 = vadd.f32 %v2170, %v2375
        %v2377 = vpop.f32.mrb[0].mxu0
        %v2378 = vadd.f32 %v2174, %v2377
        %2379 = vmatprep.mubr.bf16.mxu0 0
        %2380 = vmatmul.mubr.bf16.gmra.mrb[0].mxu0 %v2142
        %v2381 = vpop.f32.mrb[0].mxu0
        %v2382 = vadd.f32 %v2170, %v2381
        %v2383 = vpop.f32.mrb[0].mxu0
        %v2384 = vadd.f32 %v2174, %v2383
        %v2385 = vpop.f32.mrb[0].mxu0
        %v2386 = vadd.f32 %v2170, %v2385
        %v2387 = vpop.f32.mrb[0].mxu0
        %v2388 = vadd.f32 %v2174, %v2387
        %2389 = vmatprep.mubr.bf16.mxu0 0
        %2390 = vmatmul.mubr.bf16.gmra.mrb[0].mxu0 %v2143
        %v2391 = vpop.f32.mrb[0].mxu0
        %v2392 = vadd.f32 %v2170, %v2391
        %v2393 = vpop.f32.mrb[0].mxu0
        %v2394 = vadd.f32 %v2174, %v2393
        %v2395 = vpop.f32.mrb[0].mxu0
        %v2396 = vadd.f32 %v2170, %v2395
        %v2397 = vpop.f32.mrb[0].mxu0
        %v2398 = vadd.f32 %v2174, %v2397
        %2399 = vmatprep.mubr.bf16.mxu0 0
        %2400 = vmatmul.mubr.bf16.gmra.mrb[0].mxu0 %v2144
        %v2401 = vpop.f32.mrb[0].mxu0
        %v2402 = vadd.f32 %v2170, %v2401
        %v2403 = vpop.f32.mrb[0].mxu0
        %v2404 = vadd.f32 %v2174, %v2403
        %v2405 = vpop.f32.mrb[0].mxu0
        %v2406 = vadd.f32 %v2170, %v2405
        %v2407 = vpop.f32.mrb[0].mxu0
        %v2408 = vadd.f32 %v2174, %v2407
        %2409 = vmatprep.mubr.bf16.mxu0 0
        %2410 = vmatmul.mubr.bf16.gmra.mrb[0].mxu0 %v2145
        %v2411 = vpop.f32.mrb[0].mxu0
        %v2412 = vadd.f32 %v2170, %v2411
        %v2413 = vpop.f32.mrb[0].mxu0
        %v2414 = vadd.f32 %v2174, %v2413
        %v2415 = vpop.f32.mrb[0].mxu0
        %v2416 = vadd.f32 %v2170, %v2415
        %v2417 = vpop.f32.mrb[0].mxu0
        %v2418 = vadd.f32 %v2174, %v2417
        %2419 = vmatprep.mubr.bf16.mxu0 0
        %2420 = vmatmul.mubr.bf16.gmra.mrb[0].mxu0 %v2146
        %v2421 = vpop.f32.mrb[0].mxu0
        %v2422 = vadd.f32 %v2170, %v2421
        %v2423 = vpop.f32.mrb[0].mxu0
        %v2424 = vadd.f32 %v2174, %v2423
        %v2425 = vpop.f32.mrb[0].mxu0
        %v2426 = vadd.f32 %v2170, %v2425
        %v2427 = vpop.f32.mrb[0].mxu0
        %v2428 = vadd.f32 %v2174, %v2427
        %2429 = vmatprep.mubr.bf16.mxu0 0
        %2430 = vmatmul.mubr.bf16.gmra.mrb[0].mxu0 %v2147
        %v2431 = vpop.f32.mrb[0].mxu0
        %v2432 = vadd.f32 %v2170, %v2431
        %v2433 = vpop.f32.mrb[0].mxu0
        %v2434 = vadd.f32 %v2174, %v2433
        %v2435 = vpop.f32.mrb[0].mxu0
        %v2436 = vadd.f32 %v2170, %v2435
        %v2437 = vpop.f32.mrb[0].mxu0
        %v2438 = vadd.f32 %v2174, %v2437
        %2439 = vmatprep.mubr.bf16.mxu0 0
        %2440 = vmatmul.mubr.bf16.gmra.mrb[0].mxu0 %v2148
        %v2441 = vpop.f32.mrb[0].mxu0
        %v2442 = vadd.f32 %v2170, %v2441
        %v2443 = vpop.f32.mrb[0].mxu0
        %v2444 = vadd.f32 %v2174, %v2443
        %v2445 = vpop.f32.mrb[0].mxu0
        %v2446 = vadd.f32 %v2170, %v2445
        %v2447 = vpop.f32.mrb[0].mxu0
        %v2448 = vadd.f32 %v2174, %v2447
        %2449 = vdwg.mxu0
        %v2450 = vmax.f32 %v2292, 0.0
        %v2451 = vmax.f32 %v2294, 0.0
        %v2452 = vmax.f32 %v2296, 0.0
        %v2453 = vmax.f32 %v2298, 0.0
        %v2454 = vmax.f32 %v2302, 0.0
        %v2455 = vmax.f32 %v2304, 0.0
        %v2456 = vmax.f32 %v2306, 0.0
        %v2457 = vmax.f32 %v2308, 0.0
        %v2458 = vmax.f32 %v2312, 0.0
        %v2459 = vmax.f32 %v2314, 0.0
        %v2460 = vmax.f32 %v2316, 0.0
        %v2461 = vmax.f32 %v2318, 0.0
        %v2462 = vmax.f32 %v2322, 0.0
        %v2463 = vmax.f32 %v2324, 0.0
        %v2464 = vmax.f32 %v2326, 0.0
        %v2465 = vmax.f32 %v2328, 0.0
        %v2466 = vmax.f32 %v2332, 0.0
        %v2467 = vmax.f32 %v2334, 0.0
        %v2468 = vmax.f32 %v2336, 0.0
        %v2469 = vmax.f32 %v2338, 0.0
        %v2470 = vmax.f32 %v2342, 0.0
        %v2471 = vmax.f32 %v2344, 0.0
        %v2472 = vmax.f32 %v2346, 0.0
        %v2473 = vmax.f32 %v2348, 0.0
        %v2474 = vmax.f32 %v2352, 0.0
        %v2475 = vmax.f32 %v2354, 0.0
        %v2476 = vmax.f32 %v2356, 0.0
        %v2477 = vmax.f32 %v2358, 0.0
        %v2478 = vmax.f32 %v2362, 0.0
        %v2479 = vmax.f32 %v2364, 0.0
        %v2480 = vmax.f32 %v2366, 0.0
        %v2481 = vmax.f32 %v2368, 0.0
        %v2482 = vmax.f32 %v2372, 0.0
        %v2483 = vmax.f32 %v2374, 0.0
        %v2484 = vmax.f32 %v2376, 0.0
        %v2485 = vmax.f32 %v2378, 0.0
        %v2486 = vmax.f32 %v2382, 0.0
        %v2487 = vmax.f32 %v2384, 0.0
        %v2488 = vmax.f32 %v2386, 0.0
        %v2489 = vmax.f32 %v2388, 0.0
        %v2490 = vmax.f32 %v2392, 0.0
        %v2491 = vmax.f32 %v2394, 0.0
        %v2492 = vmax.f32 %v2396, 0.0
        %v2493 = vmax.f32 %v2398, 0.0
        %v2494 = vmax.f32 %v2402, 0.0
        %v2495 = vmax.f32 %v2404, 0.0
        %v2496 = vmax.f32 %v2406, 0.0
        %v2497 = vmax.f32 %v2408, 0.0
        %v2498 = vmax.f32 %v2412, 0.0
        %v2499 = vmax.f32 %v2414, 0.0
        %v2500 = vmax.f32 %v2416, 0.0
        %v2501 = vmax.f32 %v2418, 0.0
        %v2502 = vmax.f32 %v2422, 0.0
        %v2503 = vmax.f32 %v2424, 0.0
        %v2504 = vmax.f32 %v2426, 0.0
        %v2505 = vmax.f32 %v2428, 0.0
        %v2506 = vmax.f32 %v2432, 0.0
        %v2507 = vmax.f32 %v2434, 0.0
        %v2508 = vmax.f32 %v2436, 0.0
        %v2509 = vmax.f32 %v2438, 0.0
        %v2510 = vmax.f32 %v2442, 0.0
        %v2511 = vmax.f32 %v2444, 0.0
        %v2512 = vmax.f32 %v2446, 0.0
        %v2513 = vmax.f32 %v2448, 0.0
        %v2514 = vpack.c.bf16 %v2452, %v2450
        %v2515 = vpack.c.bf16 %v2453, %v2451
        %v2516 = vpack.c.bf16 %v2456, %v2454
        %v2517 = vpack.c.bf16 %v2457, %v2455
        %v2518 = vpack.c.bf16 %v2460, %v2458
        %v2519 = vpack.c.bf16 %v2461, %v2459
        %v2520 = vpack.c.bf16 %v2464, %v2462
        %v2521 = vpack.c.bf16 %v2465, %v2463
        %v2522 = vpack.c.bf16 %v2468, %v2466
        %v2523 = vpack.c.bf16 %v2469, %v2467
        %v2524 = vpack.c.bf16 %v2472, %v2470
        %v2525 = vpack.c.bf16 %v2473, %v2471
        %v2526 = vpack.c.bf16 %v2476, %v2474
        %v2527 = vpack.c.bf16 %v2477, %v2475
        %v2528 = vpack.c.bf16 %v2480, %v2478
        %v2529 = vpack.c.bf16 %v2481, %v2479
        %v2530 = vpack.c.bf16 %v2484, %v2482
        %v2531 = vpack.c.bf16 %v2485, %v2483
        %v2532 = vpack.c.bf16 %v2488, %v2486
        %v2533 = vpack.c.bf16 %v2489, %v2487
        %v2534 = vpack.c.bf16 %v2492, %v2490
        %v2535 = vpack.c.bf16 %v2493, %v2491
        %v2536 = vpack.c.bf16 %v2496, %v2494
        %v2537 = vpack.c.bf16 %v2497, %v2495
        %v2538 = vpack.c.bf16 %v2500, %v2498
        %v2539 = vpack.c.bf16 %v2501, %v2499
        %v2540 = vpack.c.bf16 %v2504, %v2502
        %v2541 = vpack.c.bf16 %v2505, %v2503
        %v2542 = vpack.c.bf16 %v2508, %v2506
        %v2543 = vpack.c.bf16 %v2509, %v2507
        %v2544 = vpack.c.bf16 %v2512, %v2510
        %v2545 = vpack.c.bf16 %v2513, %v2511
        %v2546 = vld [vmem:[#allocation17] sm:$0xff]
        %v2547 = vld [vmem:[#allocation17 + $0x8] sm:$0xff]
        %v2548 = vld [vmem:[#allocation17 + $0x10] sm:$0xff]
        %v2549 = vld [vmem:[#allocation17 + $0x18] sm:$0xff]
        %v2550 = vld [vmem:[#allocation17 + $0x20] sm:$0xff]
        %v2551 = vld [vmem:[#allocation17 + $0x28] sm:$0xff]
        %v2552 = vld [vmem:[#allocation17 + $0x30] sm:$0xff]
        %v2553 = vld [vmem:[#allocation17 + $0x38] sm:$0xff]
        %v2554 = vld [vmem:[#allocation17 + $0x40] sm:$0xff]
        %v2555 = vld [vmem:[#allocation17 + $0x48] sm:$0xff]
        %v2556 = vld [vmem:[#allocation17 + $0x50] sm:$0xff]
        %v2557 = vld [vmem:[#allocation17 + $0x58] sm:$0xff]
        %v2558 = vld [vmem:[#allocation17 + $0x60] sm:$0xff]
        %v2559 = vld [vmem:[#allocation17 + $0x68] sm:$0xff]
        %v2560 = vld [vmem:[#allocation17 + $0x70] sm:$0xff]
        %v2561 = vld [vmem:[#allocation17 + $0x78] sm:$0xff]
        %v2562 = vld [vmem:[#allocation17 + $0x80] sm:$0xff]
        %v2563 = vld [vmem:[#allocation17 + $0x88] sm:$0xff]
        %v2564 = vld [vmem:[#allocation17 + $0x90] sm:$0xff]
        %v2565 = vld [vmem:[#allocation17 + $0x98] sm:$0xff]
        %v2566 = vld [vmem:[#allocation17 + $0xa0] sm:$0xff]
        %v2567 = vld [vmem:[#allocation17 + $0xa8] sm:$0xff]
        %v2568 = vld [vmem:[#allocation17 + $0xb0] sm:$0xff]
        %v2569 = vld [vmem:[#allocation17 + $0xb8] sm:$0xff]
        %v2570 = vld [vmem:[#allocation17 + $0xc0] sm:$0xff]
        %v2571 = vld [vmem:[#allocation17 + $0xc8] sm:$0xff]
        %v2572 = vld [vmem:[#allocation17 + $0xd0] sm:$0xff]
        %v2573 = vld [vmem:[#allocation17 + $0xd8] sm:$0xff]
        %v2574 = vld [vmem:[#allocation17 + $0xe0] sm:$0xff]
        %v2575 = vld [vmem:[#allocation17 + $0xe8] sm:$0xff]
        %v2576 = vld [vmem:[#allocation17 + $0xf0] sm:$0xff]
        %v2577 = vld [vmem:[#allocation17 + $0xf8] sm:$0xff]
        %v2578 = vld [vmem:[#allocation19] sm:$0x3]
        %v2580 = vlaneseq
        %v2581 = vshrl.u32 %v2580, 7
        %v2582 = vsub.s32 0, %v2581
        %v2583 = vrot.slane %v2578, %v2582
        %v2584 = vlaneseq
        %v2585 = vshrl.u32 %v2584, 7
        %v2586 = vsub.s32 1, %v2585
        %v2587 = vrot.slane %v2578, %v2586
        %v2622 = vunpack.c.l.b16 %v2546
        %v2623 = vunpack.c.h.b16 %v2546
        %v2624 = vunpack.c.l.b16 %v2547
        %v2625 = vunpack.c.h.b16 %v2547
        %v2626 = vunpack.c.l.b16 %v2548
        %v2627 = vunpack.c.h.b16 %v2548
        %v2628 = vunpack.c.l.b16 %v2549
        %v2629 = vunpack.c.h.b16 %v2549
        %v2630 = vunpack.c.l.b16 %v2550
        %v2631 = vunpack.c.h.b16 %v2550
        %v2632 = vunpack.c.l.b16 %v2551
        %v2633 = vunpack.c.h.b16 %v2551
        %v2634 = vunpack.c.l.b16 %v2552
        %v2635 = vunpack.c.h.b16 %v2552
        %v2636 = vunpack.c.l.b16 %v2553
        %v2637 = vunpack.c.h.b16 %v2553
        %v2638 = vunpack.c.l.b16 %v2554
        %v2639 = vunpack.c.h.b16 %v2554
        %v2640 = vunpack.c.l.b16 %v2555
        %v2641 = vunpack.c.h.b16 %v2555
        %v2642 = vunpack.c.l.b16 %v2556
        %v2643 = vunpack.c.h.b16 %v2556
        %v2644 = vunpack.c.l.b16 %v2557
        %v2645 = vunpack.c.h.b16 %v2557
        %v2646 = vunpack.c.l.b16 %v2558
        %v2647 = vunpack.c.h.b16 %v2558
        %v2648 = vunpack.c.l.b16 %v2559
        %v2649 = vunpack.c.h.b16 %v2559
        %v2650 = vunpack.c.l.b16 %v2560
        %v2651 = vunpack.c.h.b16 %v2560
        %v2652 = vunpack.c.l.b16 %v2561
        %v2653 = vunpack.c.h.b16 %v2561
        %v2654 = vunpack.c.l.b16 %v2562
        %v2655 = vunpack.c.h.b16 %v2562
        %v2656 = vunpack.c.l.b16 %v2563
        %v2657 = vunpack.c.h.b16 %v2563
        %v2658 = vunpack.c.l.b16 %v2564
        %v2659 = vunpack.c.h.b16 %v2564
        %v2660 = vunpack.c.l.b16 %v2565
        %v2661 = vunpack.c.h.b16 %v2565
        %v2662 = vunpack.c.l.b16 %v2566
        %v2663 = vunpack.c.h.b16 %v2566
        %v2664 = vunpack.c.l.b16 %v2567
        %v2665 = vunpack.c.h.b16 %v2567
        %v2666 = vunpack.c.l.b16 %v2568
        %v2667 = vunpack.c.h.b16 %v2568
        %v2668 = vunpack.c.l.b16 %v2569
        %v2669 = vunpack.c.h.b16 %v2569
        %v2670 = vunpack.c.l.b16 %v2570
        %v2671 = vunpack.c.h.b16 %v2570
        %v2672 = vunpack.c.l.b16 %v2571
        %v2673 = vunpack.c.h.b16 %v2571
        %v2674 = vunpack.c.l.b16 %v2572
        %v2675 = vunpack.c.h.b16 %v2572
        %v2676 = vunpack.c.l.b16 %v2573
        %v2677 = vunpack.c.h.b16 %v2573
        %v2678 = vunpack.c.l.b16 %v2574
        %v2679 = vunpack.c.h.b16 %v2574
        %v2680 = vunpack.c.l.b16 %v2575
        %v2681 = vunpack.c.h.b16 %v2575
        %v2682 = vunpack.c.l.b16 %v2576
        %v2683 = vunpack.c.h.b16 %v2576
        %v2684 = vunpack.c.l.b16 %v2577
        %v2685 = vunpack.c.h.b16 %v2577
        %v2686 = vpack.c.b16 %v2624, %v2622
        %v2687 = vpack.c.b16 %v2625, %v2623
        %v2688 = vpack.c.b16 %v2628, %v2626
        %v2689 = vpack.c.b16 %v2629, %v2627
        %v2690 = vpack.c.b16 %v2632, %v2630
        %v2691 = vpack.c.b16 %v2633, %v2631
        %v2692 = vpack.c.b16 %v2636, %v2634
        %v2693 = vpack.c.b16 %v2637, %v2635
        %v2694 = vpack.c.b16 %v2640, %v2638
        %v2695 = vpack.c.b16 %v2641, %v2639
        %v2696 = vpack.c.b16 %v2644, %v2642
        %v2697 = vpack.c.b16 %v2645, %v2643
        %v2698 = vpack.c.b16 %v2648, %v2646
        %v2699 = vpack.c.b16 %v2649, %v2647
        %v2700 = vpack.c.b16 %v2652, %v2650
        %v2701 = vpack.c.b16 %v2653, %v2651
        %v2702 = vpack.c.b16 %v2656, %v2654
        %v2703 = vpack.c.b16 %v2657, %v2655
        %v2704 = vpack.c.b16 %v2660, %v2658
        %v2705 = vpack.c.b16 %v2661, %v2659
        %v2706 = vpack.c.b16 %v2664, %v2662
        %v2707 = vpack.c.b16 %v2665, %v2663
        %v2708 = vpack.c.b16 %v2668, %v2666
        %v2709 = vpack.c.b16 %v2669, %v2667
        %v2710 = vpack.c.b16 %v2672, %v2670
        %v2711 = vpack.c.b16 %v2673, %v2671
        %v2712 = vpack.c.b16 %v2676, %v2674
        %v2713 = vpack.c.b16 %v2677, %v2675
        %v2714 = vpack.c.b16 %v2680, %v2678
        %v2715 = vpack.c.b16 %v2681, %v2679
        %v2716 = vpack.c.b16 %v2684, %v2682
        %v2717 = vpack.c.b16 %v2685, %v2683
        %2750 = vmatprep.subr.bf16.mxu0 %v2687
        %2751 = vmatpush1.bf16.msra.mxu0 %v2686
        %2752 = vmatprep.subr.bf16.mxu0 %v2689
        %2753 = vmatpush1.bf16.msra.mxu0 %v2688
        %2754 = vmatprep.subr.bf16.mxu0 %v2691
        %2755 = vmatpush1.bf16.msra.mxu0 %v2690
        %2756 = vmatprep.subr.bf16.mxu0 %v2693
        %2757 = vmatpush1.bf16.msra.mxu0 %v2692
        %2758 = vmatprep.subr.bf16.mxu0 %v2695
        %2759 = vmatpush1.bf16.msra.mxu0 %v2694
        %2760 = vmatprep.subr.bf16.mxu0 %v2697
        %2761 = vmatpush1.bf16.msra.mxu0 %v2696
        %2762 = vmatprep.subr.bf16.mxu0 %v2699
        %2763 = vmatpush1.bf16.msra.mxu0 %v2698
        %2764 = vmatprep.subr.bf16.mxu0 %v2701
        %2765 = vmatpush1.bf16.msra.mxu0 %v2700
        %2766 = vmatprep.subr.bf16.mxu0 %v2703
        %2767 = vmatpush1.bf16.msra.mxu0 %v2702
        %2768 = vmatprep.subr.bf16.mxu0 %v2705
        %2769 = vmatpush1.bf16.msra.mxu0 %v2704
        %2770 = vmatprep.subr.bf16.mxu0 %v2707
        %2771 = vmatpush1.bf16.msra.mxu0 %v2706
        %2772 = vmatprep.subr.bf16.mxu0 %v2709
        %2773 = vmatpush1.bf16.msra.mxu0 %v2708
        %2774 = vmatprep.subr.bf16.mxu0 %v2711
        %2775 = vmatpush1.bf16.msra.mxu0 %v2710
        %2776 = vmatprep.subr.bf16.mxu0 %v2713
        %2777 = vmatpush1.bf16.msra.mxu0 %v2712
        %2778 = vmatprep.subr.bf16.mxu0 %v2715
        %2779 = vmatpush1.bf16.msra.mxu0 %v2714
        %2780 = vmatprep.subr.bf16.mxu0 %v2717
        %2781 = vmatpush1.bf16.msra.mxu0 %v2716
        %2782 = vmatprep.mubr.bf16.mxu0 %v2515
        %2783 = vmatmul.mubr.bf16.gmra.mrb[0].mxu0 %v2514
        %v2784 = vpop.f32.mrb[0].mxu0
        %v2785 = vadd.f32 %v2583, %v2784
        %v2786 = vpop.f32.mrb[0].mxu0
        %v2787 = vadd.f32 %v2587, %v2786
        %v2788 = vpop.f32.mrb[0].mxu0
        %v2789 = vadd.f32 %v2583, %v2788
        %v2790 = vpop.f32.mrb[0].mxu0
        %v2791 = vadd.f32 %v2587, %v2790
        %2792 = vmatprep.mubr.bf16.mxu0 %v2517
        %2793 = vmatmul.mubr.bf16.gmra.mrb[0].mxu0 %v2516
        %v2794 = vpop.f32.mrb[0].mxu0
        %v2795 = vadd.f32 %v2583, %v2794
        %v2796 = vpop.f32.mrb[0].mxu0
        %v2797 = vadd.f32 %v2587, %v2796
        %v2798 = vpop.f32.mrb[0].mxu0
        %v2799 = vadd.f32 %v2583, %v2798
        %v2800 = vpop.f32.mrb[0].mxu0
        %v2801 = vadd.f32 %v2587, %v2800
        %2802 = vmatprep.mubr.bf16.mxu0 %v2519
        %2803 = vmatmul.mubr.bf16.gmra.mrb[0].mxu0 %v2518
        %v2804 = vpop.f32.mrb[0].mxu0
        %v2805 = vadd.f32 %v2583, %v2804
        %v2806 = vpop.f32.mrb[0].mxu0
        %v2807 = vadd.f32 %v2587, %v2806
        %v2808 = vpop.f32.mrb[0].mxu0
        %v2809 = vadd.f32 %v2583, %v2808
        %v2810 = vpop.f32.mrb[0].mxu0
        %v2811 = vadd.f32 %v2587, %v2810
        %2812 = vmatprep.mubr.bf16.mxu0 %v2521
        %2813 = vmatmul.mubr.bf16.gmra.mrb[0].mxu0 %v2520
        %v2814 = vpop.f32.mrb[0].mxu0
        %v2815 = vadd.f32 %v2583, %v2814
        %v2816 = vpop.f32.mrb[0].mxu0
        %v2817 = vadd.f32 %v2587, %v2816
        %v2818 = vpop.f32.mrb[0].mxu0
        %v2819 = vadd.f32 %v2583, %v2818
        %v2820 = vpop.f32.mrb[0].mxu0
        %v2821 = vadd.f32 %v2587, %v2820
        %2822 = vmatprep.mubr.bf16.mxu0 %v2523
        %2823 = vmatmul.mubr.bf16.gmra.mrb[0].mxu0 %v2522
        %v2824 = vpop.f32.mrb[0].mxu0
        %v2825 = vadd.f32 %v2583, %v2824
        %v2826 = vpop.f32.mrb[0].mxu0
        %v2827 = vadd.f32 %v2587, %v2826
        %v2828 = vpop.f32.mrb[0].mxu0
        %v2829 = vadd.f32 %v2583, %v2828
        %v2830 = vpop.f32.mrb[0].mxu0
        %v2831 = vadd.f32 %v2587, %v2830
        %2832 = vmatprep.mubr.bf16.mxu0 %v2525
        %2833 = vmatmul.mubr.bf16.gmra.mrb[0].mxu0 %v2524
        %v2834 = vpop.f32.mrb[0].mxu0
        %v2835 = vadd.f32 %v2583, %v2834
        %v2836 = vpop.f32.mrb[0].mxu0
        %v2837 = vadd.f32 %v2587, %v2836
        %v2838 = vpop.f32.mrb[0].mxu0
        %v2839 = vadd.f32 %v2583, %v2838
        %v2840 = vpop.f32.mrb[0].mxu0
        %v2841 = vadd.f32 %v2587, %v2840
        %2842 = vmatprep.mubr.bf16.mxu0 %v2527
        %2843 = vmatmul.mubr.bf16.gmra.mrb[0].mxu0 %v2526
        %v2844 = vpop.f32.mrb[0].mxu0
        %v2845 = vadd.f32 %v2583, %v2844
        %v2846 = vpop.f32.mrb[0].mxu0
        %v2847 = vadd.f32 %v2587, %v2846
        %v2848 = vpop.f32.mrb[0].mxu0
        %v2849 = vadd.f32 %v2583, %v2848
        %v2850 = vpop.f32.mrb[0].mxu0
        %v2851 = vadd.f32 %v2587, %v2850
        %2852 = vmatprep.mubr.bf16.mxu0 %v2529
        %2853 = vmatmul.mubr.bf16.gmra.mrb[0].mxu0 %v2528
        %v2854 = vpop.f32.mrb[0].mxu0
        %v2855 = vadd.f32 %v2583, %v2854
        %v2856 = vpop.f32.mrb[0].mxu0
        %v2857 = vadd.f32 %v2587, %v2856
        %v2858 = vpop.f32.mrb[0].mxu0
        %v2859 = vadd.f32 %v2583, %v2858
        %v2860 = vpop.f32.mrb[0].mxu0
        %v2861 = vadd.f32 %v2587, %v2860
        %2862 = vmatprep.mubr.bf16.mxu0 %v2531
        %2863 = vmatmul.mubr.bf16.gmra.mrb[0].mxu0 %v2530
        %v2864 = vpop.f32.mrb[0].mxu0
        %v2865 = vadd.f32 %v2583, %v2864
        %v2866 = vpop.f32.mrb[0].mxu0
        %v2867 = vadd.f32 %v2587, %v2866
        %v2868 = vpop.f32.mrb[0].mxu0
        %v2869 = vadd.f32 %v2583, %v2868
        %v2870 = vpop.f32.mrb[0].mxu0
        %v2871 = vadd.f32 %v2587, %v2870
        %2872 = vmatprep.mubr.bf16.mxu0 %v2533
        %2873 = vmatmul.mubr.bf16.gmra.mrb[0].mxu0 %v2532
        %v2874 = vpop.f32.mrb[0].mxu0
        %v2875 = vadd.f32 %v2583, %v2874
        %v2876 = vpop.f32.mrb[0].mxu0
        %v2877 = vadd.f32 %v2587, %v2876
        %v2878 = vpop.f32.mrb[0].mxu0
        %v2879 = vadd.f32 %v2583, %v2878
        %v2880 = vpop.f32.mrb[0].mxu0
        %v2881 = vadd.f32 %v2587, %v2880
        %2882 = vmatprep.mubr.bf16.mxu0 %v2535
        %2883 = vmatmul.mubr.bf16.gmra.mrb[0].mxu0 %v2534
        %v2884 = vpop.f32.mrb[0].mxu0
        %v2885 = vadd.f32 %v2583, %v2884
        %v2886 = vpop.f32.mrb[0].mxu0
        %v2887 = vadd.f32 %v2587, %v2886
        %v2888 = vpop.f32.mrb[0].mxu0
        %v2889 = vadd.f32 %v2583, %v2888
        %v2890 = vpop.f32.mrb[0].mxu0
        %v2891 = vadd.f32 %v2587, %v2890
        %2892 = vmatprep.mubr.bf16.mxu0 %v2537
        %2893 = vmatmul.mubr.bf16.gmra.mrb[0].mxu0 %v2536
        %v2894 = vpop.f32.mrb[0].mxu0
        %v2895 = vadd.f32 %v2583, %v2894
        %v2896 = vpop.f32.mrb[0].mxu0
        %v2897 = vadd.f32 %v2587, %v2896
        %v2898 = vpop.f32.mrb[0].mxu0
        %v2899 = vadd.f32 %v2583, %v2898
        %v2900 = vpop.f32.mrb[0].mxu0
        %v2901 = vadd.f32 %v2587, %v2900
        %2902 = vmatprep.mubr.bf16.mxu0 %v2539
        %2903 = vmatmul.mubr.bf16.gmra.mrb[0].mxu0 %v2538
        %v2904 = vpop.f32.mrb[0].mxu0
        %v2905 = vadd.f32 %v2583, %v2904
        %v2906 = vpop.f32.mrb[0].mxu0
        %v2907 = vadd.f32 %v2587, %v2906
        %v2908 = vpop.f32.mrb[0].mxu0
        %v2909 = vadd.f32 %v2583, %v2908
        %v2910 = vpop.f32.mrb[0].mxu0
        %v2911 = vadd.f32 %v2587, %v2910
        %2912 = vmatprep.mubr.bf16.mxu0 %v2541
        %2913 = vmatmul.mubr.bf16.gmra.mrb[0].mxu0 %v2540
        %v2914 = vpop.f32.mrb[0].mxu0
        %v2915 = vadd.f32 %v2583, %v2914
        %v2916 = vpop.f32.mrb[0].mxu0
        %v2917 = vadd.f32 %v2587, %v2916
        %v2918 = vpop.f32.mrb[0].mxu0
        %v2919 = vadd.f32 %v2583, %v2918
        %v2920 = vpop.f32.mrb[0].mxu0
        %v2921 = vadd.f32 %v2587, %v2920
        %2922 = vmatprep.mubr.bf16.mxu0 %v2543
        %2923 = vmatmul.mubr.bf16.gmra.mrb[0].mxu0 %v2542
        %v2924 = vpop.f32.mrb[0].mxu0
        %v2925 = vadd.f32 %v2583, %v2924
        %v2926 = vpop.f32.mrb[0].mxu0
        %v2927 = vadd.f32 %v2587, %v2926
        %v2928 = vpop.f32.mrb[0].mxu0
        %v2929 = vadd.f32 %v2583, %v2928
        %v2930 = vpop.f32.mrb[0].mxu0
        %v2931 = vadd.f32 %v2587, %v2930
        %2932 = vmatprep.mubr.bf16.mxu0 %v2545
        %2933 = vmatmul.mubr.bf16.gmra.mrb[0].mxu0 %v2544
        %v2934 = vpop.f32.mrb[0].mxu0
        %v2935 = vadd.f32 %v2583, %v2934
        %v2936 = vpop.f32.mrb[0].mxu0
        %v2937 = vadd.f32 %v2587, %v2936
        %v2938 = vpop.f32.mrb[0].mxu0
        %v2939 = vadd.f32 %v2583, %v2938
        %v2940 = vpop.f32.mrb[0].mxu0
        %v2941 = vadd.f32 %v2587, %v2940
        %2942 = vdwg.mxu0
        %v2943 = vmax.f32 %v2785, 0.0
        %v2944 = vmax.f32 %v2787, 0.0
        %v2945 = vmax.f32 %v2789, 0.0
        %v2946 = vmax.f32 %v2791, 0.0
        %v2947 = vmax.f32 %v2795, 0.0
        %v2948 = vmax.f32 %v2797, 0.0
        %v2949 = vmax.f32 %v2799, 0.0
        %v2950 = vmax.f32 %v2801, 0.0
        %v2951 = vmax.f32 %v2805, 0.0
        %v2952 = vmax.f32 %v2807, 0.0
        %v2953 = vmax.f32 %v2809, 0.0
        %v2954 = vmax.f32 %v2811, 0.0
        %v2955 = vmax.f32 %v2815, 0.0
        %v2956 = vmax.f32 %v2817, 0.0
        %v2957 = vmax.f32 %v2819, 0.0
        %v2958 = vmax.f32 %v2821, 0.0
        %v2959 = vmax.f32 %v2825, 0.0
        %v2960 = vmax.f32 %v2827, 0.0
        %v2961 = vmax.f32 %v2829, 0.0
        %v2962 = vmax.f32 %v2831, 0.0
        %v2963 = vmax.f32 %v2835, 0.0
        %v2964 = vmax.f32 %v2837, 0.0
        %v2965 = vmax.f32 %v2839, 0.0
        %v2966 = vmax.f32 %v2841, 0.0
        %v2967 = vmax.f32 %v2845, 0.0
        %v2968 = vmax.f32 %v2847, 0.0
        %v2969 = vmax.f32 %v2849, 0.0
        %v2970 = vmax.f32 %v2851, 0.0
        %v2971 = vmax.f32 %v2855, 0.0
        %v2972 = vmax.f32 %v2857, 0.0
        %v2973 = vmax.f32 %v2859, 0.0
        %v2974 = vmax.f32 %v2861, 0.0
        %v2975 = vmax.f32 %v2865, 0.0
        %v2976 = vmax.f32 %v2867, 0.0
        %v2977 = vmax.f32 %v2869, 0.0
        %v2978 = vmax.f32 %v2871, 0.0
        %v2979 = vmax.f32 %v2875, 0.0
        %v2980 = vmax.f32 %v2877, 0.0
        %v2981 = vmax.f32 %v2879, 0.0
        %v2982 = vmax.f32 %v2881, 0.0
        %v2983 = vmax.f32 %v2885, 0.0
        %v2984 = vmax.f32 %v2887, 0.0
        %v2985 = vmax.f32 %v2889, 0.0
        %v2986 = vmax.f32 %v2891, 0.0
        %v2987 = vmax.f32 %v2895, 0.0
        %v2988 = vmax.f32 %v2897, 0.0
        %v2989 = vmax.f32 %v2899, 0.0
        %v2990 = vmax.f32 %v2901, 0.0
        %v2991 = vmax.f32 %v2905, 0.0
        %v2992 = vmax.f32 %v2907, 0.0
        %v2993 = vmax.f32 %v2909, 0.0
        %v2994 = vmax.f32 %v2911, 0.0
        %v2995 = vmax.f32 %v2915, 0.0
        %v2996 = vmax.f32 %v2917, 0.0
        %v2997 = vmax.f32 %v2919, 0.0
        %v2998 = vmax.f32 %v2921, 0.0
        %v2999 = vmax.f32 %v2925, 0.0
        %v3000 = vmax.f32 %v2927, 0.0
        %v3001 = vmax.f32 %v2929, 0.0
        %v3002 = vmax.f32 %v2931, 0.0
        %v3003 = vmax.f32 %v2935, 0.0
        %v3004 = vmax.f32 %v2937, 0.0
        %v3005 = vmax.f32 %v2939, 0.0
        %v3006 = vmax.f32 %v2941, 0.0
        %v3007 = vpack.c.bf16 %v2945, %v2943
        %v3008 = vpack.c.bf16 %v2946, %v2944
        %v3009 = vpack.c.bf16 %v2949, %v2947
        %v3010 = vpack.c.bf16 %v2950, %v2948
        %v3011 = vpack.c.bf16 %v2953, %v2951
        %v3012 = vpack.c.bf16 %v2954, %v2952
        %v3013 = vpack.c.bf16 %v2957, %v2955
        %v3014 = vpack.c.bf16 %v2958, %v2956
        %v3015 = vpack.c.bf16 %v2961, %v2959
        %v3016 = vpack.c.bf16 %v2962, %v2960
        %v3017 = vpack.c.bf16 %v2965, %v2963
        %v3018 = vpack.c.bf16 %v2966, %v2964
        %v3019 = vpack.c.bf16 %v2969, %v2967
        %v3020 = vpack.c.bf16 %v2970, %v2968
        %v3021 = vpack.c.bf16 %v2973, %v2971
        %v3022 = vpack.c.bf16 %v2974, %v2972
        %v3023 = vpack.c.bf16 %v2977, %v2975
        %v3024 = vpack.c.bf16 %v2978, %v2976
        %v3025 = vpack.c.bf16 %v2981, %v2979
        %v3026 = vpack.c.bf16 %v2982, %v2980
        %v3027 = vpack.c.bf16 %v2985, %v2983
        %v3028 = vpack.c.bf16 %v2986, %v2984
        %v3029 = vpack.c.bf16 %v2989, %v2987
        %v3030 = vpack.c.bf16 %v2990, %v2988
        %v3031 = vpack.c.bf16 %v2993, %v2991
        %v3032 = vpack.c.bf16 %v2994, %v2992
        %v3033 = vpack.c.bf16 %v2997, %v2995
        %v3034 = vpack.c.bf16 %v2998, %v2996
        %v3035 = vpack.c.bf16 %v3001, %v2999
        %v3036 = vpack.c.bf16 %v3002, %v3000
        %v3037 = vpack.c.bf16 %v3005, %v3003
        %v3038 = vpack.c.bf16 %v3006, %v3004
        %v3039 = vld [vmem:[#allocation20] sm:$0xf]
        %v3040 = vld [vmem:[#allocation20 + $0x4] sm:$0xf]
        %v3041 = vld [vmem:[#allocation20 + $0x8] sm:$0xf]
        %v3042 = vld [vmem:[#allocation20 + $0xc] sm:$0xf]
        %v3043 = vld [vmem:[#allocation20 + $0x10] sm:$0xf]
        %v3044 = vld [vmem:[#allocation20 + $0x14] sm:$0xf]
        %v3045 = vld [vmem:[#allocation20 + $0x18] sm:$0xf]
        %v3046 = vld [vmem:[#allocation20 + $0x1c] sm:$0xf]
        %v3047 = vld [vmem:[#allocation20 + $0x20] sm:$0xf]
        %v3048 = vld [vmem:[#allocation20 + $0x24] sm:$0xf]
        %v3049 = vld [vmem:[#allocation20 + $0x28] sm:$0xf]
        %v3050 = vld [vmem:[#allocation20 + $0x2c] sm:$0xf]
        %v3051 = vld [vmem:[#allocation20 + $0x30] sm:$0xf]
        %v3052 = vld [vmem:[#allocation20 + $0x34] sm:$0xf]
        %v3053 = vld [vmem:[#allocation20 + $0x38] sm:$0xf]
        %v3054 = vld [vmem:[#allocation20 + $0x3c] sm:$0xf]
        %v3055 = vld [vmem:[#allocation20 + $0x40] sm:$0xf]
        %v3056 = vld [vmem:[#allocation20 + $0x44] sm:$0xf]
        %v3057 = vld [vmem:[#allocation20 + $0x48] sm:$0xf]
        %v3058 = vld [vmem:[#allocation20 + $0x4c] sm:$0xf]
        %v3059 = vld [vmem:[#allocation20 + $0x50] sm:$0xf]
        %v3060 = vld [vmem:[#allocation20 + $0x54] sm:$0xf]
        %v3061 = vld [vmem:[#allocation20 + $0x58] sm:$0xf]
        %v3062 = vld [vmem:[#allocation20 + $0x5c] sm:$0xf]
        %v3063 = vld [vmem:[#allocation20 + $0x60] sm:$0xf]
        %v3064 = vld [vmem:[#allocation20 + $0x64] sm:$0xf]
        %v3065 = vld [vmem:[#allocation20 + $0x68] sm:$0xf]
        %v3066 = vld [vmem:[#allocation20 + $0x6c] sm:$0xf]
        %v3067 = vld [vmem:[#allocation20 + $0x70] sm:$0xf]
        %v3068 = vld [vmem:[#allocation20 + $0x74] sm:$0xf]
        %v3069 = vld [vmem:[#allocation20 + $0x78] sm:$0xf]
        %v3070 = vld [vmem:[#allocation20 + $0x7c] sm:$0xf]
        %v3071 = vld [vmem:[#allocation22] sm:$0x1]
        %v3073 = vlaneseq
        %v3074 = vshrl.u32 %v3073, 7
        %v3075 = vsub.s32 0, %v3074
        %v3076 = vrot.slane %v3071, %v3075
        %v3110 = vunpack.c.l.b16 %v3039
        %v3111 = vunpack.c.l.b16 %v3040
        %v3112 = vunpack.c.l.b16 %v3041
        %v3113 = vunpack.c.l.b16 %v3042
        %v3114 = vunpack.c.l.b16 %v3043
        %v3115 = vunpack.c.l.b16 %v3044
        %v3116 = vunpack.c.l.b16 %v3045
        %v3117 = vunpack.c.l.b16 %v3046
        %v3118 = vunpack.c.l.b16 %v3047
        %v3119 = vunpack.c.l.b16 %v3048
        %v3120 = vunpack.c.l.b16 %v3049
        %v3121 = vunpack.c.l.b16 %v3050
        %v3122 = vunpack.c.l.b16 %v3051
        %v3123 = vunpack.c.l.b16 %v3052
        %v3124 = vunpack.c.l.b16 %v3053
        %v3125 = vunpack.c.l.b16 %v3054
        %v3126 = vunpack.c.l.b16 %v3055
        %v3127 = vunpack.c.l.b16 %v3056
        %v3128 = vunpack.c.l.b16 %v3057
        %v3129 = vunpack.c.l.b16 %v3058
        %v3130 = vunpack.c.l.b16 %v3059
        %v3131 = vunpack.c.l.b16 %v3060
        %v3132 = vunpack.c.l.b16 %v3061
        %v3133 = vunpack.c.l.b16 %v3062
        %v3134 = vunpack.c.l.b16 %v3063
        %v3135 = vunpack.c.l.b16 %v3064
        %v3136 = vunpack.c.l.b16 %v3065
        %v3137 = vunpack.c.l.b16 %v3066
        %v3138 = vunpack.c.l.b16 %v3067
        %v3139 = vunpack.c.l.b16 %v3068
        %v3140 = vunpack.c.l.b16 %v3069
        %v3141 = vunpack.c.l.b16 %v3070
        %v3142 = vpack.c.b16 %v3111, %v3110
        %v3143 = vpack.c.b16 %v3113, %v3112
        %v3144 = vpack.c.b16 %v3115, %v3114
        %v3145 = vpack.c.b16 %v3117, %v3116
        %v3146 = vpack.c.b16 %v3119, %v3118
        %v3147 = vpack.c.b16 %v3121, %v3120
        %v3148 = vpack.c.b16 %v3123, %v3122
        %v3149 = vpack.c.b16 %v3125, %v3124
        %v3150 = vpack.c.b16 %v3127, %v3126
        %v3151 = vpack.c.b16 %v3129, %v3128
        %v3152 = vpack.c.b16 %v3131, %v3130
        %v3153 = vpack.c.b16 %v3133, %v3132
        %v3154 = vpack.c.b16 %v3135, %v3134
        %v3155 = vpack.c.b16 %v3137, %v3136
        %v3156 = vpack.c.b16 %v3139, %v3138
        %v3157 = vpack.c.b16 %v3141, %v3140
        %3174 = vmatprep.subr.bf16.mxu0 0
        %3175 = vmatpush1.bf16.msra.mxu0 %v3142
        %3176 = vmatprep.subr.bf16.mxu0 0
        %3177 = vmatpush1.bf16.msra.mxu0 %v3143
        %3178 = vmatprep.subr.bf16.mxu0 0
        %3179 = vmatpush1.bf16.msra.mxu0 %v3144
        %3180 = vmatprep.subr.bf16.mxu0 0
        %3181 = vmatpush1.bf16.msra.mxu0 %v3145
        %3182 = vmatprep.subr.bf16.mxu0 0
        %3183 = vmatpush1.bf16.msra.mxu0 %v3146
        %3184 = vmatprep.subr.bf16.mxu0 0
        %3185 = vmatpush1.bf16.msra.mxu0 %v3147
        %3186 = vmatprep.subr.bf16.mxu0 0
        %3187 = vmatpush1.bf16.msra.mxu0 %v3148
        %3188 = vmatprep.subr.bf16.mxu0 0
        %3189 = vmatpush1.bf16.msra.mxu0 %v3149
        %3190 = vmatprep.subr.bf16.mxu0 0
        %3191 = vmatpush1.bf16.msra.mxu0 %v3150
        %3192 = vmatprep.subr.bf16.mxu0 0
        %3193 = vmatpush1.bf16.msra.mxu0 %v3151
        %3194 = vmatprep.subr.bf16.mxu0 0
        %3195 = vmatpush1.bf16.msra.mxu0 %v3152
        %3196 = vmatprep.subr.bf16.mxu0 0
        %3197 = vmatpush1.bf16.msra.mxu0 %v3153
        %3198 = vmatprep.subr.bf16.mxu0 0
        %3199 = vmatpush1.bf16.msra.mxu0 %v3154
        %3200 = vmatprep.subr.bf16.mxu0 0
        %3201 = vmatpush1.bf16.msra.mxu0 %v3155
        %3202 = vmatprep.subr.bf16.mxu0 0
        %3203 = vmatpush1.bf16.msra.mxu0 %v3156
        %3204 = vmatprep.subr.bf16.mxu0 0
        %3205 = vmatpush1.bf16.msra.mxu0 %v3157
        %3206 = vmatprep.mubr.bf16.mxu0 %v3008
        %3207 = vmatmul.mubr.bf16.gmra.mrb[0].mxu0 %v3007
        %v3208 = vpop.f32.mrb[0].mxu0
        %v3209 = vadd.f32 %v3076, %v3208
        %v3210 = vpop.f32.mrb[0].mxu0
        %v3211 = vpop.f32.mrb[0].mxu0
        %v3212 = vadd.f32 %v3076, %v3211
        %v3213 = vpop.f32.mrb[0].mxu0
        %3214 = vmatprep.mubr.bf16.mxu0 %v3010
        %3215 = vmatmul.mubr.bf16.gmra.mrb[0].mxu0 %v3009
        %v3216 = vpop.f32.mrb[0].mxu0
        %v3217 = vadd.f32 %v3076, %v3216
        %v3218 = vpop.f32.mrb[0].mxu0
        %v3219 = vpop.f32.mrb[0].mxu0
        %v3220 = vadd.f32 %v3076, %v3219
        %v3221 = vpop.f32.mrb[0].mxu0
        %3222 = vmatprep.mubr.bf16.mxu0 %v3012
        %3223 = vmatmul.mubr.bf16.gmra.mrb[0].mxu0 %v3011
        %v3224 = vpop.f32.mrb[0].mxu0
        %v3225 = vadd.f32 %v3076, %v3224
        %v3226 = vpop.f32.mrb[0].mxu0
        %v3227 = vpop.f32.mrb[0].mxu0
        %v3228 = vadd.f32 %v3076, %v3227
        %v3229 = vpop.f32.mrb[0].mxu0
        %3230 = vmatprep.mubr.bf16.mxu0 %v3014
        %3231 = vmatmul.mubr.bf16.gmra.mrb[0].mxu0 %v3013
        %v3232 = vpop.f32.mrb[0].mxu0
        %v3233 = vadd.f32 %v3076, %v3232
        %v3234 = vpop.f32.mrb[0].mxu0
        %v3235 = vpop.f32.mrb[0].mxu0
        %v3236 = vadd.f32 %v3076, %v3235
        %v3237 = vpop.f32.mrb[0].mxu0
        %3238 = vmatprep.mubr.bf16.mxu0 %v3016
        %3239 = vmatmul.mubr.bf16.gmra.mrb[0].mxu0 %v3015
        %v3240 = vpop.f32.mrb[0].mxu0
        %v3241 = vadd.f32 %v3076, %v3240
        %v3242 = vpop.f32.mrb[0].mxu0
        %v3243 = vpop.f32.mrb[0].mxu0
        %v3244 = vadd.f32 %v3076, %v3243
        %v3245 = vpop.f32.mrb[0].mxu0
        %3246 = vmatprep.mubr.bf16.mxu0 %v3018
        %3247 = vmatmul.mubr.bf16.gmra.mrb[0].mxu0 %v3017
        %v3248 = vpop.f32.mrb[0].mxu0
        %v3249 = vadd.f32 %v3076, %v3248
        %v3250 = vpop.f32.mrb[0].mxu0
        %v3251 = vpop.f32.mrb[0].mxu0
        %v3252 = vadd.f32 %v3076, %v3251
        %v3253 = vpop.f32.mrb[0].mxu0
        %3254 = vmatprep.mubr.bf16.mxu0 %v3020
        %3255 = vmatmul.mubr.bf16.gmra.mrb[0].mxu0 %v3019
        %v3256 = vpop.f32.mrb[0].mxu0
        %v3257 = vadd.f32 %v3076, %v3256
        %v3258 = vpop.f32.mrb[0].mxu0
        %v3259 = vpop.f32.mrb[0].mxu0
        %v3260 = vadd.f32 %v3076, %v3259
        %v3261 = vpop.f32.mrb[0].mxu0
        %3262 = vmatprep.mubr.bf16.mxu0 %v3022
        %3263 = vmatmul.mubr.bf16.gmra.mrb[0].mxu0 %v3021
        %v3264 = vpop.f32.mrb[0].mxu0
        %v3265 = vadd.f32 %v3076, %v3264
        %v3266 = vpop.f32.mrb[0].mxu0
        %v3267 = vpop.f32.mrb[0].mxu0
        %v3268 = vadd.f32 %v3076, %v3267
        %v3269 = vpop.f32.mrb[0].mxu0
        %3270 = vmatprep.mubr.bf16.mxu0 %v3024
        %3271 = vmatmul.mubr.bf16.gmra.mrb[0].mxu0 %v3023
        %v3272 = vpop.f32.mrb[0].mxu0
        %v3273 = vadd.f32 %v3076, %v3272
        %v3274 = vpop.f32.mrb[0].mxu0
        %v3275 = vpop.f32.mrb[0].mxu0
        %v3276 = vadd.f32 %v3076, %v3275
        %v3277 = vpop.f32.mrb[0].mxu0
        %3278 = vmatprep.mubr.bf16.mxu0 %v3026
        %3279 = vmatmul.mubr.bf16.gmra.mrb[0].mxu0 %v3025
        %v3280 = vpop.f32.mrb[0].mxu0
        %v3281 = vadd.f32 %v3076, %v3280
        %v3282 = vpop.f32.mrb[0].mxu0
        %v3283 = vpop.f32.mrb[0].mxu0
        %v3284 = vadd.f32 %v3076, %v3283
        %v3285 = vpop.f32.mrb[0].mxu0
        %3286 = vmatprep.mubr.bf16.mxu0 %v3028
        %3287 = vmatmul.mubr.bf16.gmra.mrb[0].mxu0 %v3027
        %v3288 = vpop.f32.mrb[0].mxu0
        %v3289 = vadd.f32 %v3076, %v3288
        %v3290 = vpop.f32.mrb[0].mxu0
        %v3291 = vpop.f32.mrb[0].mxu0
        %v3292 = vadd.f32 %v3076, %v3291
        %v3293 = vpop.f32.mrb[0].mxu0
        %3294 = vmatprep.mubr.bf16.mxu0 %v3030
        %3295 = vmatmul.mubr.bf16.gmra.mrb[0].mxu0 %v3029
        %v3296 = vpop.f32.mrb[0].mxu0
        %v3297 = vadd.f32 %v3076, %v3296
        %v3298 = vpop.f32.mrb[0].mxu0
        %v3299 = vpop.f32.mrb[0].mxu0
        %v3300 = vadd.f32 %v3076, %v3299
        %v3301 = vpop.f32.mrb[0].mxu0
        %3302 = vmatprep.mubr.bf16.mxu0 %v3032
        %3303 = vmatmul.mubr.bf16.gmra.mrb[0].mxu0 %v3031
        %v3304 = vpop.f32.mrb[0].mxu0
        %v3305 = vadd.f32 %v3076, %v3304
        %v3306 = vpop.f32.mrb[0].mxu0
        %v3307 = vpop.f32.mrb[0].mxu0
        %v3308 = vadd.f32 %v3076, %v3307
        %v3309 = vpop.f32.mrb[0].mxu0
        %3310 = vmatprep.mubr.bf16.mxu0 %v3034
        %3311 = vmatmul.mubr.bf16.gmra.mrb[0].mxu0 %v3033
        %v3312 = vpop.f32.mrb[0].mxu0
        %v3313 = vadd.f32 %v3076, %v3312
        %v3314 = vpop.f32.mrb[0].mxu0
        %v3315 = vpop.f32.mrb[0].mxu0
        %v3316 = vadd.f32 %v3076, %v3315
        %v3317 = vpop.f32.mrb[0].mxu0
        %3318 = vmatprep.mubr.bf16.mxu0 %v3036
        %3319 = vmatmul.mubr.bf16.gmra.mrb[0].mxu0 %v3035
        %v3320 = vpop.f32.mrb[0].mxu0
        %v3321 = vadd.f32 %v3076, %v3320
        %v3322 = vpop.f32.mrb[0].mxu0
        %v3323 = vpop.f32.mrb[0].mxu0
        %v3324 = vadd.f32 %v3076, %v3323
        %v3325 = vpop.f32.mrb[0].mxu0
        %3326 = vmatprep.mubr.bf16.mxu0 %v3038
        %3327 = vmatmul.mubr.bf16.gmra.mrb[0].mxu0 %v3037
        %v3328 = vpop.f32.mrb[0].mxu0
        %v3329 = vadd.f32 %v3076, %v3328
        %v3330 = vpop.f32.mrb[0].mxu0
        %v3331 = vpop.f32.mrb[0].mxu0
        %v3332 = vadd.f32 %v3076, %v3331
        %v3333 = vpop.f32.mrb[0].mxu0
        %3334 = vdwg.mxu0
        %v3335 = vadd.f32 %v2101, %v3209
        %v3336 = vadd.f32 %v2102, %v3212
        %v3337 = vadd.f32 %v2103, %v3217
        %v3338 = vadd.f32 %v2104, %v3220
        %v3339 = vadd.f32 %v2105, %v3225
        %v3340 = vadd.f32 %v2106, %v3228
        %v3341 = vadd.f32 %v2107, %v3233
        %v3342 = vadd.f32 %v2108, %v3236
        %v3343 = vadd.f32 %v2109, %v3241
        %v3344 = vadd.f32 %v2110, %v3244
        %v3345 = vadd.f32 %v2111, %v3249
        %v3346 = vadd.f32 %v2112, %v3252
        %v3347 = vadd.f32 %v2113, %v3257
        %v3348 = vadd.f32 %v2114, %v3260
        %v3349 = vadd.f32 %v2115, %v3265
        %v3350 = vadd.f32 %v2116, %v3268
        %v3351 = vadd.f32 %v2117, %v3273
        %v3352 = vadd.f32 %v2118, %v3276
        %v3353 = vadd.f32 %v2119, %v3281
        %v3354 = vadd.f32 %v2120, %v3284
        %v3355 = vadd.f32 %v2121, %v3289
        %v3356 = vadd.f32 %v2122, %v3292
        %v3357 = vadd.f32 %v2123, %v3297
        %v3358 = vadd.f32 %v2124, %v3300
        %v3359 = vadd.f32 %v2125, %v3305
        %v3360 = vadd.f32 %v2126, %v3308
        %v3361 = vadd.f32 %v2127, %v3313
        %v3362 = vadd.f32 %v2128, %v3316
        %v3363 = vadd.f32 %v2129, %v3321
        %v3364 = vadd.f32 %v2130, %v3324
        %v3365 = vadd.f32 %v2131, %v3329
        %v3366 = vadd.f32 %v2132, %v3332
        %v3367 = vpack.c.bf16 %v3336, %v3335
        %v3368 = vpack.c.bf16 %v3338, %v3337
        %v3369 = vpack.c.bf16 %v3340, %v3339
        %v3370 = vpack.c.bf16 %v3342, %v3341
        %v3371 = vpack.c.bf16 %v3344, %v3343
        %v3372 = vpack.c.bf16 %v3346, %v3345
        %v3373 = vpack.c.bf16 %v3348, %v3347
        %v3374 = vpack.c.bf16 %v3350, %v3349
        %v3375 = vpack.c.bf16 %v3352, %v3351
        %v3376 = vpack.c.bf16 %v3354, %v3353
        %v3377 = vpack.c.bf16 %v3356, %v3355
        %v3378 = vpack.c.bf16 %v3358, %v3357
        %v3379 = vpack.c.bf16 %v3360, %v3359
        %v3380 = vpack.c.bf16 %v3362, %v3361
        %v3381 = vpack.c.bf16 %v3364, %v3363
        %v3382 = vpack.c.bf16 %v3366, %v3365
        %v3383 = vld [vmem:[#allocation23] sm:$0xff]
        %v3384 = vld [vmem:[#allocation23 + $0x8] sm:$0xff]
        %v3385 = vld [vmem:[#allocation23 + $0x10] sm:$0xff]
        %v3386 = vld [vmem:[#allocation23 + $0x18] sm:$0xff]
        %v3387 = vld [vmem:[#allocation23 + $0x20] sm:$0xff]
        %v3388 = vld [vmem:[#allocation23 + $0x28] sm:$0xff]
        %v3389 = vld [vmem:[#allocation23 + $0x30] sm:$0xff]
        %v3390 = vld [vmem:[#allocation23 + $0x38] sm:$0xff]
        %v3391 = vld [vmem:[#allocation23 + $0x40] sm:$0xff]
        %v3392 = vld [vmem:[#allocation23 + $0x48] sm:$0xff]
        %v3393 = vld [vmem:[#allocation23 + $0x50] sm:$0xff]
        %v3394 = vld [vmem:[#allocation23 + $0x58] sm:$0xff]
        %v3395 = vld [vmem:[#allocation23 + $0x60] sm:$0xff]
        %v3396 = vld [vmem:[#allocation23 + $0x68] sm:$0xff]
        %v3397 = vld [vmem:[#allocation23 + $0x70] sm:$0xff]
        %v3398 = vld [vmem:[#allocation23 + $0x78] sm:$0xff]
        %v3399 = vld [vmem:[#allocation25] sm:$0x3]
        %v3401 = vlaneseq
        %v3402 = vshrl.u32 %v3401, 7
        %v3403 = vsub.s32 0, %v3402
        %v3404 = vrot.slane %v3399, %v3403
        %v3405 = vlaneseq
        %v3406 = vshrl.u32 %v3405, 7
        %v3407 = vsub.s32 1, %v3406
        %v3408 = vrot.slane %v3399, %v3407
        %v3427 = vunpack.c.l.b16 %v3383
        %v3428 = vunpack.c.h.b16 %v3383
        %v3429 = vunpack.c.l.b16 %v3384
        %v3430 = vunpack.c.h.b16 %v3384
        %v3431 = vunpack.c.l.b16 %v3385
        %v3432 = vunpack.c.h.b16 %v3385
        %v3433 = vunpack.c.l.b16 %v3386
        %v3434 = vunpack.c.h.b16 %v3386
        %v3435 = vunpack.c.l.b16 %v3387
        %v3436 = vunpack.c.h.b16 %v3387
        %v3437 = vunpack.c.l.b16 %v3388
        %v3438 = vunpack.c.h.b16 %v3388
        %v3439 = vunpack.c.l.b16 %v3389
        %v3440 = vunpack.c.h.b16 %v3389
        %v3441 = vunpack.c.l.b16 %v3390
        %v3442 = vunpack.c.h.b16 %v3390
        %v3443 = vunpack.c.l.b16 %v3391
        %v3444 = vunpack.c.h.b16 %v3391
        %v3445 = vunpack.c.l.b16 %v3392
        %v3446 = vunpack.c.h.b16 %v3392
        %v3447 = vunpack.c.l.b16 %v3393
        %v3448 = vunpack.c.h.b16 %v3393
        %v3449 = vunpack.c.l.b16 %v3394
        %v3450 = vunpack.c.h.b16 %v3394
        %v3451 = vunpack.c.l.b16 %v3395
        %v3452 = vunpack.c.h.b16 %v3395
        %v3453 = vunpack.c.l.b16 %v3396
        %v3454 = vunpack.c.h.b16 %v3396
        %v3455 = vunpack.c.l.b16 %v3397
        %v3456 = vunpack.c.h.b16 %v3397
        %v3457 = vunpack.c.l.b16 %v3398
        %v3458 = vunpack.c.h.b16 %v3398
        %v3459 = vpack.c.b16 %v3429, %v3427
        %v3460 = vpack.c.b16 %v3430, %v3428
        %v3461 = vpack.c.b16 %v3433, %v3431
        %v3462 = vpack.c.b16 %v3434, %v3432
        %v3463 = vpack.c.b16 %v3437, %v3435
        %v3464 = vpack.c.b16 %v3438, %v3436
        %v3465 = vpack.c.b16 %v3441, %v3439
        %v3466 = vpack.c.b16 %v3442, %v3440
        %v3467 = vpack.c.b16 %v3445, %v3443
        %v3468 = vpack.c.b16 %v3446, %v3444
        %v3469 = vpack.c.b16 %v3449, %v3447
        %v3470 = vpack.c.b16 %v3450, %v3448
        %v3471 = vpack.c.b16 %v3453, %v3451
        %v3472 = vpack.c.b16 %v3454, %v3452
        %v3473 = vpack.c.b16 %v3457, %v3455
        %v3474 = vpack.c.b16 %v3458, %v3456
        %3491 = vmatprep.subr.bf16.mxu0 %v3460
        %3492 = vmatpush1.bf16.msra.mxu0 %v3459
        %3493 = vmatprep.subr.bf16.mxu0 %v3462
        %3494 = vmatpush1.bf16.msra.mxu0 %v3461
        %3495 = vmatprep.subr.bf16.mxu0 %v3464
        %3496 = vmatpush1.bf16.msra.mxu0 %v3463
        %3497 = vmatprep.subr.bf16.mxu0 %v3466
        %3498 = vmatpush1.bf16.msra.mxu0 %v3465
        %3499 = vmatprep.subr.bf16.mxu0 %v3468
        %3500 = vmatpush1.bf16.msra.mxu0 %v3467
        %3501 = vmatprep.subr.bf16.mxu0 %v3470
        %3502 = vmatpush1.bf16.msra.mxu0 %v3469
        %3503 = vmatprep.subr.bf16.mxu0 %v3472
        %3504 = vmatpush1.bf16.msra.mxu0 %v3471
        %3505 = vmatprep.subr.bf16.mxu0 %v3474
        %3506 = vmatpush1.bf16.msra.mxu0 %v3473
        %3507 = vmatprep.subr.bf16.mxu0 0
        %3508 = vmatpush1.bf16.msra.mxu0 0
        %3509 = vmatprep.subr.bf16.mxu0 0
        %3510 = vmatpush1.bf16.msra.mxu0 0
        %3511 = vmatprep.subr.bf16.mxu0 0
        %3512 = vmatpush1.bf16.msra.mxu0 0
        %3513 = vmatprep.subr.bf16.mxu0 0
        %3514 = vmatpush1.bf16.msra.mxu0 0
        %3515 = vmatprep.subr.bf16.mxu0 0
        %3516 = vmatpush1.bf16.msra.mxu0 0
        %3517 = vmatprep.subr.bf16.mxu0 0
        %3518 = vmatpush1.bf16.msra.mxu0 0
        %3519 = vmatprep.subr.bf16.mxu0 0
        %3520 = vmatpush1.bf16.msra.mxu0 0
        %3521 = vmatprep.subr.bf16.mxu0 0
        %3522 = vmatpush1.bf16.msra.mxu0 0
        %3523 = vmatprep.mubr.bf16.mxu0 0
        %3524 = vmatmul.mubr.bf16.gmra.mrb[0].mxu0 %v3367
        %v3525 = vpop.f32.mrb[0].mxu0
        %v3526 = vadd.f32 %v3404, %v3525
        %v3527 = vpop.f32.mrb[0].mxu0
        %v3528 = vadd.f32 %v3408, %v3527
        %v3529 = vpop.f32.mrb[0].mxu0
        %v3530 = vadd.f32 %v3404, %v3529
        %v3531 = vpop.f32.mrb[0].mxu0
        %v3532 = vadd.f32 %v3408, %v3531
        %3533 = vmatprep.mubr.bf16.mxu0 0
        %3534 = vmatmul.mubr.bf16.gmra.mrb[0].mxu0 %v3368
        %v3535 = vpop.f32.mrb[0].mxu0
        %v3536 = vadd.f32 %v3404, %v3535
        %v3537 = vpop.f32.mrb[0].mxu0
        %v3538 = vadd.f32 %v3408, %v3537
        %v3539 = vpop.f32.mrb[0].mxu0
        %v3540 = vadd.f32 %v3404, %v3539
        %v3541 = vpop.f32.mrb[0].mxu0
        %v3542 = vadd.f32 %v3408, %v3541
        %3543 = vmatprep.mubr.bf16.mxu0 0
        %3544 = vmatmul.mubr.bf16.gmra.mrb[0].mxu0 %v3369
        %v3545 = vpop.f32.mrb[0].mxu0
        %v3546 = vadd.f32 %v3404, %v3545
        %v3547 = vpop.f32.mrb[0].mxu0
        %v3548 = vadd.f32 %v3408, %v3547
        %v3549 = vpop.f32.mrb[0].mxu0
        %v3550 = vadd.f32 %v3404, %v3549
        %v3551 = vpop.f32.mrb[0].mxu0
        %v3552 = vadd.f32 %v3408, %v3551
        %3553 = vmatprep.mubr.bf16.mxu0 0
        %3554 = vmatmul.mubr.bf16.gmra.mrb[0].mxu0 %v3370
        %v3555 = vpop.f32.mrb[0].mxu0
        %v3556 = vadd.f32 %v3404, %v3555
        %v3557 = vpop.f32.mrb[0].mxu0
        %v3558 = vadd.f32 %v3408, %v3557
        %v3559 = vpop.f32.mrb[0].mxu0
        %v3560 = vadd.f32 %v3404, %v3559
        %v3561 = vpop.f32.mrb[0].mxu0
        %v3562 = vadd.f32 %v3408, %v3561
        %3563 = vmatprep.mubr.bf16.mxu0 0
        %3564 = vmatmul.mubr.bf16.gmra.mrb[0].mxu0 %v3371
        %v3565 = vpop.f32.mrb[0].mxu0
        %v3566 = vadd.f32 %v3404, %v3565
        %v3567 = vpop.f32.mrb[0].mxu0
        %v3568 = vadd.f32 %v3408, %v3567
        %v3569 = vpop.f32.mrb[0].mxu0
        %v3570 = vadd.f32 %v3404, %v3569
        %v3571 = vpop.f32.mrb[0].mxu0
        %v3572 = vadd.f32 %v3408, %v3571
        %3573 = vmatprep.mubr.bf16.mxu0 0
        %3574 = vmatmul.mubr.bf16.gmra.mrb[0].mxu0 %v3372
        %v3575 = vpop.f32.mrb[0].mxu0
        %v3576 = vadd.f32 %v3404, %v3575
        %v3577 = vpop.f32.mrb[0].mxu0
        %v3578 = vadd.f32 %v3408, %v3577
        %v3579 = vpop.f32.mrb[0].mxu0
        %v3580 = vadd.f32 %v3404, %v3579
        %v3581 = vpop.f32.mrb[0].mxu0
        %v3582 = vadd.f32 %v3408, %v3581
        %3583 = vmatprep.mubr.bf16.mxu0 0
        %3584 = vmatmul.mubr.bf16.gmra.mrb[0].mxu0 %v3373
        %v3585 = vpop.f32.mrb[0].mxu0
        %v3586 = vadd.f32 %v3404, %v3585
        %v3587 = vpop.f32.mrb[0].mxu0
        %v3588 = vadd.f32 %v3408, %v3587
        %v3589 = vpop.f32.mrb[0].mxu0
        %v3590 = vadd.f32 %v3404, %v3589
        %v3591 = vpop.f32.mrb[0].mxu0
        %v3592 = vadd.f32 %v3408, %v3591
        %3593 = vmatprep.mubr.bf16.mxu0 0
        %3594 = vmatmul.mubr.bf16.gmra.mrb[0].mxu0 %v3374
        %v3595 = vpop.f32.mrb[0].mxu0
        %v3596 = vadd.f32 %v3404, %v3595
        %v3597 = vpop.f32.mrb[0].mxu0
        %v3598 = vadd.f32 %v3408, %v3597
        %v3599 = vpop.f32.mrb[0].mxu0
        %v3600 = vadd.f32 %v3404, %v3599
        %v3601 = vpop.f32.mrb[0].mxu0
        %v3602 = vadd.f32 %v3408, %v3601
        %3603 = vmatprep.mubr.bf16.mxu0 0
        %3604 = vmatmul.mubr.bf16.gmra.mrb[0].mxu0 %v3375
        %v3605 = vpop.f32.mrb[0].mxu0
        %v3606 = vadd.f32 %v3404, %v3605
        %v3607 = vpop.f32.mrb[0].mxu0
        %v3608 = vadd.f32 %v3408, %v3607
        %v3609 = vpop.f32.mrb[0].mxu0
        %v3610 = vadd.f32 %v3404, %v3609
        %v3611 = vpop.f32.mrb[0].mxu0
        %v3612 = vadd.f32 %v3408, %v3611
        %3613 = vmatprep.mubr.bf16.mxu0 0
        %3614 = vmatmul.mubr.bf16.gmra.mrb[0].mxu0 %v3376
        %v3615 = vpop.f32.mrb[0].mxu0
        %v3616 = vadd.f32 %v3404, %v3615
        %v3617 = vpop.f32.mrb[0].mxu0
        %v3618 = vadd.f32 %v3408, %v3617
        %v3619 = vpop.f32.mrb[0].mxu0
        %v3620 = vadd.f32 %v3404, %v3619
        %v3621 = vpop.f32.mrb[0].mxu0
        %v3622 = vadd.f32 %v3408, %v3621
        %3623 = vmatprep.mubr.bf16.mxu0 0
        %3624 = vmatmul.mubr.bf16.gmra.mrb[0].mxu0 %v3377
        %v3625 = vpop.f32.mrb[0].mxu0
        %v3626 = vadd.f32 %v3404, %v3625
        %v3627 = vpop.f32.mrb[0].mxu0
        %v3628 = vadd.f32 %v3408, %v3627
        %v3629 = vpop.f32.mrb[0].mxu0
        %v3630 = vadd.f32 %v3404, %v3629
        %v3631 = vpop.f32.mrb[0].mxu0
        %v3632 = vadd.f32 %v3408, %v3631
        %3633 = vmatprep.mubr.bf16.mxu0 0
        %3634 = vmatmul.mubr.bf16.gmra.mrb[0].mxu0 %v3378
        %v3635 = vpop.f32.mrb[0].mxu0
        %v3636 = vadd.f32 %v3404, %v3635
        %v3637 = vpop.f32.mrb[0].mxu0
        %v3638 = vadd.f32 %v3408, %v3637
        %v3639 = vpop.f32.mrb[0].mxu0
        %v3640 = vadd.f32 %v3404, %v3639
        %v3641 = vpop.f32.mrb[0].mxu0
        %v3642 = vadd.f32 %v3408, %v3641
        %3643 = vmatprep.mubr.bf16.mxu0 0
        %3644 = vmatmul.mubr.bf16.gmra.mrb[0].mxu0 %v3379
        %v3645 = vpop.f32.mrb[0].mxu0
        %v3646 = vadd.f32 %v3404, %v3645
        %v3647 = vpop.f32.mrb[0].mxu0
        %v3648 = vadd.f32 %v3408, %v3647
        %v3649 = vpop.f32.mrb[0].mxu0
        %v3650 = vadd.f32 %v3404, %v3649
        %v3651 = vpop.f32.mrb[0].mxu0
        %v3652 = vadd.f32 %v3408, %v3651
        %3653 = vmatprep.mubr.bf16.mxu0 0
        %3654 = vmatmul.mubr.bf16.gmra.mrb[0].mxu0 %v3380
        %v3655 = vpop.f32.mrb[0].mxu0
        %v3656 = vadd.f32 %v3404, %v3655
        %v3657 = vpop.f32.mrb[0].mxu0
        %v3658 = vadd.f32 %v3408, %v3657
        %v3659 = vpop.f32.mrb[0].mxu0
        %v3660 = vadd.f32 %v3404, %v3659
        %v3661 = vpop.f32.mrb[0].mxu0
        %v3662 = vadd.f32 %v3408, %v3661
        %3663 = vmatprep.mubr.bf16.mxu0 0
        %3664 = vmatmul.mubr.bf16.gmra.mrb[0].mxu0 %v3381
        %v3665 = vpop.f32.mrb[0].mxu0
        %v3666 = vadd.f32 %v3404, %v3665
        %v3667 = vpop.f32.mrb[0].mxu0
        %v3668 = vadd.f32 %v3408, %v3667
        %v3669 = vpop.f32.mrb[0].mxu0
        %v3670 = vadd.f32 %v3404, %v3669
        %v3671 = vpop.f32.mrb[0].mxu0
        %v3672 = vadd.f32 %v3408, %v3671
        %3673 = vmatprep.mubr.bf16.mxu0 0
        %3674 = vmatmul.mubr.bf16.gmra.mrb[0].mxu0 %v3382
        %v3675 = vpop.f32.mrb[0].mxu0
        %v3676 = vadd.f32 %v3404, %v3675
        %v3677 = vpop.f32.mrb[0].mxu0
        %v3678 = vadd.f32 %v3408, %v3677
        %v3679 = vpop.f32.mrb[0].mxu0
        %v3680 = vadd.f32 %v3404, %v3679
        %v3681 = vpop.f32.mrb[0].mxu0
        %v3682 = vadd.f32 %v3408, %v3681
        %3683 = vdwg.mxu0
        %v3684 = vmax.f32 %v3526, 0.0
        %v3685 = vmax.f32 %v3528, 0.0
        %v3686 = vmax.f32 %v3530, 0.0
        %v3687 = vmax.f32 %v3532, 0.0
        %v3688 = vmax.f32 %v3536, 0.0
        %v3689 = vmax.f32 %v3538, 0.0
        %v3690 = vmax.f32 %v3540, 0.0
        %v3691 = vmax.f32 %v3542, 0.0
        %v3692 = vmax.f32 %v3546, 0.0
        %v3693 = vmax.f32 %v3548, 0.0
        %v3694 = vmax.f32 %v3550, 0.0
        %v3695 = vmax.f32 %v3552, 0.0
        %v3696 = vmax.f32 %v3556, 0.0
        %v3697 = vmax.f32 %v3558, 0.0
        %v3698 = vmax.f32 %v3560, 0.0
        %v3699 = vmax.f32 %v3562, 0.0
        %v3700 = vmax.f32 %v3566, 0.0
        %v3701 = vmax.f32 %v3568, 0.0
        %v3702 = vmax.f32 %v3570, 0.0
        %v3703 = vmax.f32 %v3572, 0.0
        %v3704 = vmax.f32 %v3576, 0.0
        %v3705 = vmax.f32 %v3578, 0.0
        %v3706 = vmax.f32 %v3580, 0.0
        %v3707 = vmax.f32 %v3582, 0.0
        %v3708 = vmax.f32 %v3586, 0.0
        %v3709 = vmax.f32 %v3588, 0.0
        %v3710 = vmax.f32 %v3590, 0.0
        %v3711 = vmax.f32 %v3592, 0.0
        %v3712 = vmax.f32 %v3596, 0.0
        %v3713 = vmax.f32 %v3598, 0.0
        %v3714 = vmax.f32 %v3600, 0.0
        %v3715 = vmax.f32 %v3602, 0.0
        %v3716 = vmax.f32 %v3606, 0.0
        %v3717 = vmax.f32 %v3608, 0.0
        %v3718 = vmax.f32 %v3610, 0.0
        %v3719 = vmax.f32 %v3612, 0.0
        %v3720 = vmax.f32 %v3616, 0.0
        %v3721 = vmax.f32 %v3618, 0.0
        %v3722 = vmax.f32 %v3620, 0.0
        %v3723 = vmax.f32 %v3622, 0.0
        %v3724 = vmax.f32 %v3626, 0.0
        %v3725 = vmax.f32 %v3628, 0.0
        %v3726 = vmax.f32 %v3630, 0.0
        %v3727 = vmax.f32 %v3632, 0.0
        %v3728 = vmax.f32 %v3636, 0.0
        %v3729 = vmax.f32 %v3638, 0.0
        %v3730 = vmax.f32 %v3640, 0.0
        %v3731 = vmax.f32 %v3642, 0.0
        %v3732 = vmax.f32 %v3646, 0.0
        %v3733 = vmax.f32 %v3648, 0.0
        %v3734 = vmax.f32 %v3650, 0.0
        %v3735 = vmax.f32 %v3652, 0.0
        %v3736 = vmax.f32 %v3656, 0.0
        %v3737 = vmax.f32 %v3658, 0.0
        %v3738 = vmax.f32 %v3660, 0.0
        %v3739 = vmax.f32 %v3662, 0.0
        %v3740 = vmax.f32 %v3666, 0.0
        %v3741 = vmax.f32 %v3668, 0.0
        %v3742 = vmax.f32 %v3670, 0.0
        %v3743 = vmax.f32 %v3672, 0.0
        %v3744 = vmax.f32 %v3676, 0.0
        %v3745 = vmax.f32 %v3678, 0.0
        %v3746 = vmax.f32 %v3680, 0.0
        %v3747 = vmax.f32 %v3682, 0.0
        %v3748 = vpack.c.bf16 %v3686, %v3684
        %v3749 = vpack.c.bf16 %v3687, %v3685
        %v3750 = vpack.c.bf16 %v3690, %v3688
        %v3751 = vpack.c.bf16 %v3691, %v3689
        %v3752 = vpack.c.bf16 %v3694, %v3692
        %v3753 = vpack.c.bf16 %v3695, %v3693
        %v3754 = vpack.c.bf16 %v3698, %v3696
        %v3755 = vpack.c.bf16 %v3699, %v3697
        %v3756 = vpack.c.bf16 %v3702, %v3700
        %v3757 = vpack.c.bf16 %v3703, %v3701
        %v3758 = vpack.c.bf16 %v3706, %v3704
        %v3759 = vpack.c.bf16 %v3707, %v3705
        %v3760 = vpack.c.bf16 %v3710, %v3708
        %v3761 = vpack.c.bf16 %v3711, %v3709
        %v3762 = vpack.c.bf16 %v3714, %v3712
        %v3763 = vpack.c.bf16 %v3715, %v3713
        %v3764 = vpack.c.bf16 %v3718, %v3716
        %v3765 = vpack.c.bf16 %v3719, %v3717
        %v3766 = vpack.c.bf16 %v3722, %v3720
        %v3767 = vpack.c.bf16 %v3723, %v3721
        %v3768 = vpack.c.bf16 %v3726, %v3724
        %v3769 = vpack.c.bf16 %v3727, %v3725
        %v3770 = vpack.c.bf16 %v3730, %v3728
        %v3771 = vpack.c.bf16 %v3731, %v3729
        %v3772 = vpack.c.bf16 %v3734, %v3732
        %v3773 = vpack.c.bf16 %v3735, %v3733
        %v3774 = vpack.c.bf16 %v3738, %v3736
        %v3775 = vpack.c.bf16 %v3739, %v3737
        %v3776 = vpack.c.bf16 %v3742, %v3740
        %v3777 = vpack.c.bf16 %v3743, %v3741
        %v3778 = vpack.c.bf16 %v3746, %v3744
        %v3779 = vpack.c.bf16 %v3747, %v3745
        %v3780 = vld [vmem:[#allocation26] sm:$0xff]
        %v3781 = vld [vmem:[#allocation26 + $0x8] sm:$0xff]
        %v3782 = vld [vmem:[#allocation26 + $0x10] sm:$0xff]
        %v3783 = vld [vmem:[#allocation26 + $0x18] sm:$0xff]
        %v3784 = vld [vmem:[#allocation26 + $0x20] sm:$0xff]
        %v3785 = vld [vmem:[#allocation26 + $0x28] sm:$0xff]
        %v3786 = vld [vmem:[#allocation26 + $0x30] sm:$0xff]
        %v3787 = vld [vmem:[#allocation26 + $0x38] sm:$0xff]
        %v3788 = vld [vmem:[#allocation26 + $0x40] sm:$0xff]
        %v3789 = vld [vmem:[#allocation26 + $0x48] sm:$0xff]
        %v3790 = vld [vmem:[#allocation26 + $0x50] sm:$0xff]
        %v3791 = vld [vmem:[#allocation26 + $0x58] sm:$0xff]
        %v3792 = vld [vmem:[#allocation26 + $0x60] sm:$0xff]
        %v3793 = vld [vmem:[#allocation26 + $0x68] sm:$0xff]
        %v3794 = vld [vmem:[#allocation26 + $0x70] sm:$0xff]
        %v3795 = vld [vmem:[#allocation26 + $0x78] sm:$0xff]
        %v3796 = vld [vmem:[#allocation26 + $0x80] sm:$0xff]
        %v3797 = vld [vmem:[#allocation26 + $0x88] sm:$0xff]
        %v3798 = vld [vmem:[#allocation26 + $0x90] sm:$0xff]
        %v3799 = vld [vmem:[#allocation26 + $0x98] sm:$0xff]
        %v3800 = vld [vmem:[#allocation26 + $0xa0] sm:$0xff]
        %v3801 = vld [vmem:[#allocation26 + $0xa8] sm:$0xff]
        %v3802 = vld [vmem:[#allocation26 + $0xb0] sm:$0xff]
        %v3803 = vld [vmem:[#allocation26 + $0xb8] sm:$0xff]
        %v3804 = vld [vmem:[#allocation26 + $0xc0] sm:$0xff]
        %v3805 = vld [vmem:[#allocation26 + $0xc8] sm:$0xff]
        %v3806 = vld [vmem:[#allocation26 + $0xd0] sm:$0xff]
        %v3807 = vld [vmem:[#allocation26 + $0xd8] sm:$0xff]
        %v3808 = vld [vmem:[#allocation26 + $0xe0] sm:$0xff]
        %v3809 = vld [vmem:[#allocation26 + $0xe8] sm:$0xff]
        %v3810 = vld [vmem:[#allocation26 + $0xf0] sm:$0xff]
        %v3811 = vld [vmem:[#allocation26 + $0xf8] sm:$0xff]
        %v3812 = vld [vmem:[#allocation28] sm:$0x3]
        %v3814 = vlaneseq
        %v3815 = vshrl.u32 %v3814, 7
        %v3816 = vsub.s32 0, %v3815
        %v3817 = vrot.slane %v3812, %v3816
        %v3818 = vlaneseq
        %v3819 = vshrl.u32 %v3818, 7
        %v3820 = vsub.s32 1, %v3819
        %v3821 = vrot.slane %v3812, %v3820
        %v3856 = vunpack.c.l.b16 %v3780
        %v3857 = vunpack.c.h.b16 %v3780
        %v3858 = vunpack.c.l.b16 %v3781
        %v3859 = vunpack.c.h.b16 %v3781
        %v3860 = vunpack.c.l.b16 %v3782
        %v3861 = vunpack.c.h.b16 %v3782
        %v3862 = vunpack.c.l.b16 %v3783
        %v3863 = vunpack.c.h.b16 %v3783
        %v3864 = vunpack.c.l.b16 %v3784
        %v3865 = vunpack.c.h.b16 %v3784
        %v3866 = vunpack.c.l.b16 %v3785
        %v3867 = vunpack.c.h.b16 %v3785
        %v3868 = vunpack.c.l.b16 %v3786
        %v3869 = vunpack.c.h.b16 %v3786
        %v3870 = vunpack.c.l.b16 %v3787
        %v3871 = vunpack.c.h.b16 %v3787
        %v3872 = vunpack.c.l.b16 %v3788
        %v3873 = vunpack.c.h.b16 %v3788
        %v3874 = vunpack.c.l.b16 %v3789
        %v3875 = vunpack.c.h.b16 %v3789
        %v3876 = vunpack.c.l.b16 %v3790
        %v3877 = vunpack.c.h.b16 %v3790
        %v3878 = vunpack.c.l.b16 %v3791
        %v3879 = vunpack.c.h.b16 %v3791
        %v3880 = vunpack.c.l.b16 %v3792
        %v3881 = vunpack.c.h.b16 %v3792
        %v3882 = vunpack.c.l.b16 %v3793
        %v3883 = vunpack.c.h.b16 %v3793
        %v3884 = vunpack.c.l.b16 %v3794
        %v3885 = vunpack.c.h.b16 %v3794
        %v3886 = vunpack.c.l.b16 %v3795
        %v3887 = vunpack.c.h.b16 %v3795
        %v3888 = vunpack.c.l.b16 %v3796
        %v3889 = vunpack.c.h.b16 %v3796
        %v3890 = vunpack.c.l.b16 %v3797
        %v3891 = vunpack.c.h.b16 %v3797
        %v3892 = vunpack.c.l.b16 %v3798
        %v3893 = vunpack.c.h.b16 %v3798
        %v3894 = vunpack.c.l.b16 %v3799
        %v3895 = vunpack.c.h.b16 %v3799
        %v3896 = vunpack.c.l.b16 %v3800
        %v3897 = vunpack.c.h.b16 %v3800
        %v3898 = vunpack.c.l.b16 %v3801
        %v3899 = vunpack.c.h.b16 %v3801
        %v3900 = vunpack.c.l.b16 %v3802
        %v3901 = vunpack.c.h.b16 %v3802
        %v3902 = vunpack.c.l.b16 %v3803
        %v3903 = vunpack.c.h.b16 %v3803
        %v3904 = vunpack.c.l.b16 %v3804
        %v3905 = vunpack.c.h.b16 %v3804
        %v3906 = vunpack.c.l.b16 %v3805
        %v3907 = vunpack.c.h.b16 %v3805
        %v3908 = vunpack.c.l.b16 %v3806
        %v3909 = vunpack.c.h.b16 %v3806
        %v3910 = vunpack.c.l.b16 %v3807
        %v3911 = vunpack.c.h.b16 %v3807
        %v3912 = vunpack.c.l.b16 %v3808
        %v3913 = vunpack.c.h.b16 %v3808
        %v3914 = vunpack.c.l.b16 %v3809
        %v3915 = vunpack.c.h.b16 %v3809
        %v3916 = vunpack.c.l.b16 %v3810
        %v3917 = vunpack.c.h.b16 %v3810
        %v3918 = vunpack.c.l.b16 %v3811
        %v3919 = vunpack.c.h.b16 %v3811
        %v3920 = vpack.c.b16 %v3858, %v3856
        %v3921 = vpack.c.b16 %v3859, %v3857
        %v3922 = vpack.c.b16 %v3862, %v3860
        %v3923 = vpack.c.b16 %v3863, %v3861
        %v3924 = vpack.c.b16 %v3866, %v3864
        %v3925 = vpack.c.b16 %v3867, %v3865
        %v3926 = vpack.c.b16 %v3870, %v3868
        %v3927 = vpack.c.b16 %v3871, %v3869
        %v3928 = vpack.c.b16 %v3874, %v3872
        %v3929 = vpack.c.b16 %v3875, %v3873
        %v3930 = vpack.c.b16 %v3878, %v3876
        %v3931 = vpack.c.b16 %v3879, %v3877
        %v3932 = vpack.c.b16 %v3882, %v3880
        %v3933 = vpack.c.b16 %v3883, %v3881
        %v3934 = vpack.c.b16 %v3886, %v3884
        %v3935 = vpack.c.b16 %v3887, %v3885
        %v3936 = vpack.c.b16 %v3890, %v3888
        %v3937 = vpack.c.b16 %v3891, %v3889
        %v3938 = vpack.c.b16 %v3894, %v3892
        %v3939 = vpack.c.b16 %v3895, %v3893
        %v3940 = vpack.c.b16 %v3898, %v3896
        %v3941 = vpack.c.b16 %v3899, %v3897
        %v3942 = vpack.c.b16 %v3902, %v3900
        %v3943 = vpack.c.b16 %v3903, %v3901
        %v3944 = vpack.c.b16 %v3906, %v3904
        %v3945 = vpack.c.b16 %v3907, %v3905
        %v3946 = vpack.c.b16 %v3910, %v3908
        %v3947 = vpack.c.b16 %v3911, %v3909
        %v3948 = vpack.c.b16 %v3914, %v3912
        %v3949 = vpack.c.b16 %v3915, %v3913
        %v3950 = vpack.c.b16 %v3918, %v3916
        %v3951 = vpack.c.b16 %v3919, %v3917
        %3984 = vmatprep.subr.bf16.mxu0 %v3921
        %3985 = vmatpush1.bf16.msra.mxu0 %v3920
        %3986 = vmatprep.subr.bf16.mxu0 %v3923
        %3987 = vmatpush1.bf16.msra.mxu0 %v3922
        %3988 = vmatprep.subr.bf16.mxu0 %v3925
        %3989 = vmatpush1.bf16.msra.mxu0 %v3924
        %3990 = vmatprep.subr.bf16.mxu0 %v3927
        %3991 = vmatpush1.bf16.msra.mxu0 %v3926
        %3992 = vmatprep.subr.bf16.mxu0 %v3929
        %3993 = vmatpush1.bf16.msra.mxu0 %v3928
        %3994 = vmatprep.subr.bf16.mxu0 %v3931
        %3995 = vmatpush1.bf16.msra.mxu0 %v3930
        %3996 = vmatprep.subr.bf16.mxu0 %v3933
        %3997 = vmatpush1.bf16.msra.mxu0 %v3932
        %3998 = vmatprep.subr.bf16.mxu0 %v3935
        %3999 = vmatpush1.bf16.msra.mxu0 %v3934
        %4000 = vmatprep.subr.bf16.mxu0 %v3937
        %4001 = vmatpush1.bf16.msra.mxu0 %v3936
        %4002 = vmatprep.subr.bf16.mxu0 %v3939
        %4003 = vmatpush1.bf16.msra.mxu0 %v3938
        %4004 = vmatprep.subr.bf16.mxu0 %v3941
        %4005 = vmatpush1.bf16.msra.mxu0 %v3940
        %4006 = vmatprep.subr.bf16.mxu0 %v3943
        %4007 = vmatpush1.bf16.msra.mxu0 %v3942
        %4008 = vmatprep.subr.bf16.mxu0 %v3945
        %4009 = vmatpush1.bf16.msra.mxu0 %v3944
        %4010 = vmatprep.subr.bf16.mxu0 %v3947
        %4011 = vmatpush1.bf16.msra.mxu0 %v3946
        %4012 = vmatprep.subr.bf16.mxu0 %v3949
        %4013 = vmatpush1.bf16.msra.mxu0 %v3948
        %4014 = vmatprep.subr.bf16.mxu0 %v3951
        %4015 = vmatpush1.bf16.msra.mxu0 %v3950
        %4016 = vmatprep.mubr.bf16.mxu0 %v3749
        %4017 = vmatmul.mubr.bf16.gmra.mrb[0].mxu0 %v3748
        %v4018 = vpop.f32.mrb[0].mxu0
        %v4019 = vadd.f32 %v3817, %v4018
        %v4020 = vpop.f32.mrb[0].mxu0
        %v4021 = vadd.f32 %v3821, %v4020
        %v4022 = vpop.f32.mrb[0].mxu0
        %v4023 = vadd.f32 %v3817, %v4022
        %v4024 = vpop.f32.mrb[0].mxu0
        %v4025 = vadd.f32 %v3821, %v4024
        %4026 = vmatprep.mubr.bf16.mxu0 %v3751
        %4027 = vmatmul.mubr.bf16.gmra.mrb[0].mxu0 %v3750
        %v4028 = vpop.f32.mrb[0].mxu0
        %v4029 = vadd.f32 %v3817, %v4028
        %v4030 = vpop.f32.mrb[0].mxu0
        %v4031 = vadd.f32 %v3821, %v4030
        %v4032 = vpop.f32.mrb[0].mxu0
        %v4033 = vadd.f32 %v3817, %v4032
        %v4034 = vpop.f32.mrb[0].mxu0
        %v4035 = vadd.f32 %v3821, %v4034
        %4036 = vmatprep.mubr.bf16.mxu0 %v3753
        %4037 = vmatmul.mubr.bf16.gmra.mrb[0].mxu0 %v3752
        %v4038 = vpop.f32.mrb[0].mxu0
        %v4039 = vadd.f32 %v3817, %v4038
        %v4040 = vpop.f32.mrb[0].mxu0
        %v4041 = vadd.f32 %v3821, %v4040
        %v4042 = vpop.f32.mrb[0].mxu0
        %v4043 = vadd.f32 %v3817, %v4042
        %v4044 = vpop.f32.mrb[0].mxu0
        %v4045 = vadd.f32 %v3821, %v4044
        %4046 = vmatprep.mubr.bf16.mxu0 %v3755
        %4047 = vmatmul.mubr.bf16.gmra.mrb[0].mxu0 %v3754
        %v4048 = vpop.f32.mrb[0].mxu0
        %v4049 = vadd.f32 %v3817, %v4048
        %v4050 = vpop.f32.mrb[0].mxu0
        %v4051 = vadd.f32 %v3821, %v4050
        %v4052 = vpop.f32.mrb[0].mxu0
        %v4053 = vadd.f32 %v3817, %v4052
        %v4054 = vpop.f32.mrb[0].mxu0
        %v4055 = vadd.f32 %v3821, %v4054
        %4056 = vmatprep.mubr.bf16.mxu0 %v3757
        %4057 = vmatmul.mubr.bf16.gmra.mrb[0].mxu0 %v3756
        %v4058 = vpop.f32.mrb[0].mxu0
        %v4059 = vadd.f32 %v3817, %v4058
        %v4060 = vpop.f32.mrb[0].mxu0
        %v4061 = vadd.f32 %v3821, %v4060
        %v4062 = vpop.f32.mrb[0].mxu0
        %v4063 = vadd.f32 %v3817, %v4062
        %v4064 = vpop.f32.mrb[0].mxu0
        %v4065 = vadd.f32 %v3821, %v4064
        %4066 = vmatprep.mubr.bf16.mxu0 %v3759
        %4067 = vmatmul.mubr.bf16.gmra.mrb[0].mxu0 %v3758
        %v4068 = vpop.f32.mrb[0].mxu0
        %v4069 = vadd.f32 %v3817, %v4068
        %v4070 = vpop.f32.mrb[0].mxu0
        %v4071 = vadd.f32 %v3821, %v4070
        %v4072 = vpop.f32.mrb[0].mxu0
        %v4073 = vadd.f32 %v3817, %v4072
        %v4074 = vpop.f32.mrb[0].mxu0
        %v4075 = vadd.f32 %v3821, %v4074
        %4076 = vmatprep.mubr.bf16.mxu0 %v3761
        %4077 = vmatmul.mubr.bf16.gmra.mrb[0].mxu0 %v3760
        %v4078 = vpop.f32.mrb[0].mxu0
        %v4079 = vadd.f32 %v3817, %v4078
        %v4080 = vpop.f32.mrb[0].mxu0
        %v4081 = vadd.f32 %v3821, %v4080
        %v4082 = vpop.f32.mrb[0].mxu0
        %v4083 = vadd.f32 %v3817, %v4082
        %v4084 = vpop.f32.mrb[0].mxu0
        %v4085 = vadd.f32 %v3821, %v4084
        %4086 = vmatprep.mubr.bf16.mxu0 %v3763
        %4087 = vmatmul.mubr.bf16.gmra.mrb[0].mxu0 %v3762
        %v4088 = vpop.f32.mrb[0].mxu0
        %v4089 = vadd.f32 %v3817, %v4088
        %v4090 = vpop.f32.mrb[0].mxu0
        %v4091 = vadd.f32 %v3821, %v4090
        %v4092 = vpop.f32.mrb[0].mxu0
        %v4093 = vadd.f32 %v3817, %v4092
        %v4094 = vpop.f32.mrb[0].mxu0
        %v4095 = vadd.f32 %v3821, %v4094
        %4096 = vmatprep.mubr.bf16.mxu0 %v3765
        %4097 = vmatmul.mubr.bf16.gmra.mrb[0].mxu0 %v3764
        %v4098 = vpop.f32.mrb[0].mxu0
        %v4099 = vadd.f32 %v3817, %v4098
        %v4100 = vpop.f32.mrb[0].mxu0
        %v4101 = vadd.f32 %v3821, %v4100
        %v4102 = vpop.f32.mrb[0].mxu0
        %v4103 = vadd.f32 %v3817, %v4102
        %v4104 = vpop.f32.mrb[0].mxu0
        %v4105 = vadd.f32 %v3821, %v4104
        %4106 = vmatprep.mubr.bf16.mxu0 %v3767
        %4107 = vmatmul.mubr.bf16.gmra.mrb[0].mxu0 %v3766
        %v4108 = vpop.f32.mrb[0].mxu0
        %v4109 = vadd.f32 %v3817, %v4108
        %v4110 = vpop.f32.mrb[0].mxu0
        %v4111 = vadd.f32 %v3821, %v4110
        %v4112 = vpop.f32.mrb[0].mxu0
        %v4113 = vadd.f32 %v3817, %v4112
        %v4114 = vpop.f32.mrb[0].mxu0
        %v4115 = vadd.f32 %v3821, %v4114
        %4116 = vmatprep.mubr.bf16.mxu0 %v3769
        %4117 = vmatmul.mubr.bf16.gmra.mrb[0].mxu0 %v3768
        %v4118 = vpop.f32.mrb[0].mxu0
        %v4119 = vadd.f32 %v3817, %v4118
        %v4120 = vpop.f32.mrb[0].mxu0
        %v4121 = vadd.f32 %v3821, %v4120
        %v4122 = vpop.f32.mrb[0].mxu0
        %v4123 = vadd.f32 %v3817, %v4122
        %v4124 = vpop.f32.mrb[0].mxu0
        %v4125 = vadd.f32 %v3821, %v4124
        %4126 = vmatprep.mubr.bf16.mxu0 %v3771
        %4127 = vmatmul.mubr.bf16.gmra.mrb[0].mxu0 %v3770
        %v4128 = vpop.f32.mrb[0].mxu0
        %v4129 = vadd.f32 %v3817, %v4128
        %v4130 = vpop.f32.mrb[0].mxu0
        %v4131 = vadd.f32 %v3821, %v4130
        %v4132 = vpop.f32.mrb[0].mxu0
        %v4133 = vadd.f32 %v3817, %v4132
        %v4134 = vpop.f32.mrb[0].mxu0
        %v4135 = vadd.f32 %v3821, %v4134
        %4136 = vmatprep.mubr.bf16.mxu0 %v3773
        %4137 = vmatmul.mubr.bf16.gmra.mrb[0].mxu0 %v3772
        %v4138 = vpop.f32.mrb[0].mxu0
        %v4139 = vadd.f32 %v3817, %v4138
        %v4140 = vpop.f32.mrb[0].mxu0
        %v4141 = vadd.f32 %v3821, %v4140
        %v4142 = vpop.f32.mrb[0].mxu0
        %v4143 = vadd.f32 %v3817, %v4142
        %v4144 = vpop.f32.mrb[0].mxu0
        %v4145 = vadd.f32 %v3821, %v4144
        %4146 = vmatprep.mubr.bf16.mxu0 %v3775
        %4147 = vmatmul.mubr.bf16.gmra.mrb[0].mxu0 %v3774
        %v4148 = vpop.f32.mrb[0].mxu0
        %v4149 = vadd.f32 %v3817, %v4148
        %v4150 = vpop.f32.mrb[0].mxu0
        %v4151 = vadd.f32 %v3821, %v4150
        %v4152 = vpop.f32.mrb[0].mxu0
        %v4153 = vadd.f32 %v3817, %v4152
        %v4154 = vpop.f32.mrb[0].mxu0
        %v4155 = vadd.f32 %v3821, %v4154
        %4156 = vmatprep.mubr.bf16.mxu0 %v3777
        %4157 = vmatmul.mubr.bf16.gmra.mrb[0].mxu0 %v3776
        %v4158 = vpop.f32.mrb[0].mxu0
        %v4159 = vadd.f32 %v3817, %v4158
        %v4160 = vpop.f32.mrb[0].mxu0
        %v4161 = vadd.f32 %v3821, %v4160
        %v4162 = vpop.f32.mrb[0].mxu0
        %v4163 = vadd.f32 %v3817, %v4162
        %v4164 = vpop.f32.mrb[0].mxu0
        %v4165 = vadd.f32 %v3821, %v4164
        %4166 = vmatprep.mubr.bf16.mxu0 %v3779
        %4167 = vmatmul.mubr.bf16.gmra.mrb[0].mxu0 %v3778
        %v4168 = vpop.f32.mrb[0].mxu0
        %v4169 = vadd.f32 %v3817, %v4168
        %v4170 = vpop.f32.mrb[0].mxu0
        %v4171 = vadd.f32 %v3821, %v4170
        %v4172 = vpop.f32.mrb[0].mxu0
        %v4173 = vadd.f32 %v3817, %v4172
        %v4174 = vpop.f32.mrb[0].mxu0
        %v4175 = vadd.f32 %v3821, %v4174
        %4176 = vdwg.mxu0
        %v4177 = vmax.f32 %v4019, 0.0
        %v4178 = vmax.f32 %v4021, 0.0
        %v4179 = vmax.f32 %v4023, 0.0
        %v4180 = vmax.f32 %v4025, 0.0
        %v4181 = vmax.f32 %v4029, 0.0
        %v4182 = vmax.f32 %v4031, 0.0
        %v4183 = vmax.f32 %v4033, 0.0
        %v4184 = vmax.f32 %v4035, 0.0
        %v4185 = vmax.f32 %v4039, 0.0
        %v4186 = vmax.f32 %v4041, 0.0
        %v4187 = vmax.f32 %v4043, 0.0
        %v4188 = vmax.f32 %v4045, 0.0
        %v4189 = vmax.f32 %v4049, 0.0
        %v4190 = vmax.f32 %v4051, 0.0
        %v4191 = vmax.f32 %v4053, 0.0
        %v4192 = vmax.f32 %v4055, 0.0
        %v4193 = vmax.f32 %v4059, 0.0
        %v4194 = vmax.f32 %v4061, 0.0
        %v4195 = vmax.f32 %v4063, 0.0
        %v4196 = vmax.f32 %v4065, 0.0
        %v4197 = vmax.f32 %v4069, 0.0
        %v4198 = vmax.f32 %v4071, 0.0
        %v4199 = vmax.f32 %v4073, 0.0
        %v4200 = vmax.f32 %v4075, 0.0
        %v4201 = vmax.f32 %v4079, 0.0
        %v4202 = vmax.f32 %v4081, 0.0
        %v4203 = vmax.f32 %v4083, 0.0
        %v4204 = vmax.f32 %v4085, 0.0
        %v4205 = vmax.f32 %v4089, 0.0
        %v4206 = vmax.f32 %v4091, 0.0
        %v4207 = vmax.f32 %v4093, 0.0
        %v4208 = vmax.f32 %v4095, 0.0
        %v4209 = vmax.f32 %v4099, 0.0
        %v4210 = vmax.f32 %v4101, 0.0
        %v4211 = vmax.f32 %v4103, 0.0
        %v4212 = vmax.f32 %v4105, 0.0
        %v4213 = vmax.f32 %v4109, 0.0
        %v4214 = vmax.f32 %v4111, 0.0
        %v4215 = vmax.f32 %v4113, 0.0
        %v4216 = vmax.f32 %v4115, 0.0
        %v4217 = vmax.f32 %v4119, 0.0
        %v4218 = vmax.f32 %v4121, 0.0
        %v4219 = vmax.f32 %v4123, 0.0
        %v4220 = vmax.f32 %v4125, 0.0
        %v4221 = vmax.f32 %v4129, 0.0
        %v4222 = vmax.f32 %v4131, 0.0
        %v4223 = vmax.f32 %v4133, 0.0
        %v4224 = vmax.f32 %v4135, 0.0
        %v4225 = vmax.f32 %v4139, 0.0
        %v4226 = vmax.f32 %v4141, 0.0
        %v4227 = vmax.f32 %v4143, 0.0
        %v4228 = vmax.f32 %v4145, 0.0
        %v4229 = vmax.f32 %v4149, 0.0
        %v4230 = vmax.f32 %v4151, 0.0
        %v4231 = vmax.f32 %v4153, 0.0
        %v4232 = vmax.f32 %v4155, 0.0
        %v4233 = vmax.f32 %v4159, 0.0
        %v4234 = vmax.f32 %v4161, 0.0
        %v4235 = vmax.f32 %v4163, 0.0
        %v4236 = vmax.f32 %v4165, 0.0
        %v4237 = vmax.f32 %v4169, 0.0
        %v4238 = vmax.f32 %v4171, 0.0
        %v4239 = vmax.f32 %v4173, 0.0
        %v4240 = vmax.f32 %v4175, 0.0
        %v4241 = vpack.c.bf16 %v4179, %v4177
        %v4242 = vpack.c.bf16 %v4180, %v4178
        %v4243 = vpack.c.bf16 %v4183, %v4181
        %v4244 = vpack.c.bf16 %v4184, %v4182
        %v4245 = vpack.c.bf16 %v4187, %v4185
        %v4246 = vpack.c.bf16 %v4188, %v4186
        %v4247 = vpack.c.bf16 %v4191, %v4189
        %v4248 = vpack.c.bf16 %v4192, %v4190
        %v4249 = vpack.c.bf16 %v4195, %v4193
        %v4250 = vpack.c.bf16 %v4196, %v4194
        %v4251 = vpack.c.bf16 %v4199, %v4197
        %v4252 = vpack.c.bf16 %v4200, %v4198
        %v4253 = vpack.c.bf16 %v4203, %v4201
        %v4254 = vpack.c.bf16 %v4204, %v4202
        %v4255 = vpack.c.bf16 %v4207, %v4205
        %v4256 = vpack.c.bf16 %v4208, %v4206
        %v4257 = vpack.c.bf16 %v4211, %v4209
        %v4258 = vpack.c.bf16 %v4212, %v4210
        %v4259 = vpack.c.bf16 %v4215, %v4213
        %v4260 = vpack.c.bf16 %v4216, %v4214
        %v4261 = vpack.c.bf16 %v4219, %v4217
        %v4262 = vpack.c.bf16 %v4220, %v4218
        %v4263 = vpack.c.bf16 %v4223, %v4221
        %v4264 = vpack.c.bf16 %v4224, %v4222
        %v4265 = vpack.c.bf16 %v4227, %v4225
        %v4266 = vpack.c.bf16 %v4228, %v4226
        %v4267 = vpack.c.bf16 %v4231, %v4229
        %v4268 = vpack.c.bf16 %v4232, %v4230
        %v4269 = vpack.c.bf16 %v4235, %v4233
        %v4270 = vpack.c.bf16 %v4236, %v4234
        %v4271 = vpack.c.bf16 %v4239, %v4237
        %v4272 = vpack.c.bf16 %v4240, %v4238
        %v4273 = vld [vmem:[#allocation29] sm:$0xf]
        %v4274 = vld [vmem:[#allocation29 + $0x4] sm:$0xf]
        %v4275 = vld [vmem:[#allocation29 + $0x8] sm:$0xf]
        %v4276 = vld [vmem:[#allocation29 + $0xc] sm:$0xf]
        %v4277 = vld [vmem:[#allocation29 + $0x10] sm:$0xf]
        %v4278 = vld [vmem:[#allocation29 + $0x14] sm:$0xf]
        %v4279 = vld [vmem:[#allocation29 + $0x18] sm:$0xf]
        %v4280 = vld [vmem:[#allocation29 + $0x1c] sm:$0xf]
        %v4281 = vld [vmem:[#allocation29 + $0x20] sm:$0xf]
        %v4282 = vld [vmem:[#allocation29 + $0x24] sm:$0xf]
        %v4283 = vld [vmem:[#allocation29 + $0x28] sm:$0xf]
        %v4284 = vld [vmem:[#allocation29 + $0x2c] sm:$0xf]
        %v4285 = vld [vmem:[#allocation29 + $0x30] sm:$0xf]
        %v4286 = vld [vmem:[#allocation29 + $0x34] sm:$0xf]
        %v4287 = vld [vmem:[#allocation29 + $0x38] sm:$0xf]
        %v4288 = vld [vmem:[#allocation29 + $0x3c] sm:$0xf]
        %v4289 = vld [vmem:[#allocation29 + $0x40] sm:$0xf]
        %v4290 = vld [vmem:[#allocation29 + $0x44] sm:$0xf]
        %v4291 = vld [vmem:[#allocation29 + $0x48] sm:$0xf]
        %v4292 = vld [vmem:[#allocation29 + $0x4c] sm:$0xf]
        %v4293 = vld [vmem:[#allocation29 + $0x50] sm:$0xf]
        %v4294 = vld [vmem:[#allocation29 + $0x54] sm:$0xf]
        %v4295 = vld [vmem:[#allocation29 + $0x58] sm:$0xf]
        %v4296 = vld [vmem:[#allocation29 + $0x5c] sm:$0xf]
        %v4297 = vld [vmem:[#allocation29 + $0x60] sm:$0xf]
        %v4298 = vld [vmem:[#allocation29 + $0x64] sm:$0xf]
        %v4299 = vld [vmem:[#allocation29 + $0x68] sm:$0xf]
        %v4300 = vld [vmem:[#allocation29 + $0x6c] sm:$0xf]
        %v4301 = vld [vmem:[#allocation29 + $0x70] sm:$0xf]
        %v4302 = vld [vmem:[#allocation29 + $0x74] sm:$0xf]
        %v4303 = vld [vmem:[#allocation29 + $0x78] sm:$0xf]
        %v4304 = vld [vmem:[#allocation29 + $0x7c] sm:$0xf]
        %v4305 = vld [vmem:[#allocation31] sm:$0x1]
        %v4307 = vlaneseq
        %v4308 = vshrl.u32 %v4307, 7
        %v4309 = vsub.s32 0, %v4308
        %v4310 = vrot.slane %v4305, %v4309
        %v4344 = vunpack.c.l.b16 %v4273
        %v4345 = vunpack.c.l.b16 %v4274
        %v4346 = vunpack.c.l.b16 %v4275
        %v4347 = vunpack.c.l.b16 %v4276
        %v4348 = vunpack.c.l.b16 %v4277
        %v4349 = vunpack.c.l.b16 %v4278
        %v4350 = vunpack.c.l.b16 %v4279
        %v4351 = vunpack.c.l.b16 %v4280
        %v4352 = vunpack.c.l.b16 %v4281
        %v4353 = vunpack.c.l.b16 %v4282
        %v4354 = vunpack.c.l.b16 %v4283
        %v4355 = vunpack.c.l.b16 %v4284
        %v4356 = vunpack.c.l.b16 %v4285
        %v4357 = vunpack.c.l.b16 %v4286
        %v4358 = vunpack.c.l.b16 %v4287
        %v4359 = vunpack.c.l.b16 %v4288
        %v4360 = vunpack.c.l.b16 %v4289
        %v4361 = vunpack.c.l.b16 %v4290
        %v4362 = vunpack.c.l.b16 %v4291
        %v4363 = vunpack.c.l.b16 %v4292
        %v4364 = vunpack.c.l.b16 %v4293
        %v4365 = vunpack.c.l.b16 %v4294
        %v4366 = vunpack.c.l.b16 %v4295
        %v4367 = vunpack.c.l.b16 %v4296
        %v4368 = vunpack.c.l.b16 %v4297
        %v4369 = vunpack.c.l.b16 %v4298
        %v4370 = vunpack.c.l.b16 %v4299
        %v4371 = vunpack.c.l.b16 %v4300
        %v4372 = vunpack.c.l.b16 %v4301
        %v4373 = vunpack.c.l.b16 %v4302
        %v4374 = vunpack.c.l.b16 %v4303
        %v4375 = vunpack.c.l.b16 %v4304
        %v4376 = vpack.c.b16 %v4345, %v4344
        %v4377 = vpack.c.b16 %v4347, %v4346
        %v4378 = vpack.c.b16 %v4349, %v4348
        %v4379 = vpack.c.b16 %v4351, %v4350
        %v4380 = vpack.c.b16 %v4353, %v4352
        %v4381 = vpack.c.b16 %v4355, %v4354
        %v4382 = vpack.c.b16 %v4357, %v4356
        %v4383 = vpack.c.b16 %v4359, %v4358
        %v4384 = vpack.c.b16 %v4361, %v4360
        %v4385 = vpack.c.b16 %v4363, %v4362
        %v4386 = vpack.c.b16 %v4365, %v4364
        %v4387 = vpack.c.b16 %v4367, %v4366
        %v4388 = vpack.c.b16 %v4369, %v4368
        %v4389 = vpack.c.b16 %v4371, %v4370
        %v4390 = vpack.c.b16 %v4373, %v4372
        %v4391 = vpack.c.b16 %v4375, %v4374
        %4408 = vmatprep.subr.bf16.mxu0 0
        %4409 = vmatpush1.bf16.msra.mxu0 %v4376
        %4410 = vmatprep.subr.bf16.mxu0 0
        %4411 = vmatpush1.bf16.msra.mxu0 %v4377
        %4412 = vmatprep.subr.bf16.mxu0 0
        %4413 = vmatpush1.bf16.msra.mxu0 %v4378
        %4414 = vmatprep.subr.bf16.mxu0 0
        %4415 = vmatpush1.bf16.msra.mxu0 %v4379
        %4416 = vmatprep.subr.bf16.mxu0 0
        %4417 = vmatpush1.bf16.msra.mxu0 %v4380
        %4418 = vmatprep.subr.bf16.mxu0 0
        %4419 = vmatpush1.bf16.msra.mxu0 %v4381
        %4420 = vmatprep.subr.bf16.mxu0 0
        %4421 = vmatpush1.bf16.msra.mxu0 %v4382
        %4422 = vmatprep.subr.bf16.mxu0 0
        %4423 = vmatpush1.bf16.msra.mxu0 %v4383
        %4424 = vmatprep.subr.bf16.mxu0 0
        %4425 = vmatpush1.bf16.msra.mxu0 %v4384
        %4426 = vmatprep.subr.bf16.mxu0 0
        %4427 = vmatpush1.bf16.msra.mxu0 %v4385
        %4428 = vmatprep.subr.bf16.mxu0 0
        %4429 = vmatpush1.bf16.msra.mxu0 %v4386
        %4430 = vmatprep.subr.bf16.mxu0 0
        %4431 = vmatpush1.bf16.msra.mxu0 %v4387
        %4432 = vmatprep.subr.bf16.mxu0 0
        %4433 = vmatpush1.bf16.msra.mxu0 %v4388
        %4434 = vmatprep.subr.bf16.mxu0 0
        %4435 = vmatpush1.bf16.msra.mxu0 %v4389
        %4436 = vmatprep.subr.bf16.mxu0 0
        %4437 = vmatpush1.bf16.msra.mxu0 %v4390
        %4438 = vmatprep.subr.bf16.mxu0 0
        %4439 = vmatpush1.bf16.msra.mxu0 %v4391
        %4440 = vmatprep.mubr.bf16.mxu0 %v4242
        %4441 = vmatmul.mubr.bf16.gmra.mrb[0].mxu0 %v4241
        %v4442 = vpop.f32.mrb[0].mxu0
        %v4443 = vadd.f32 %v4310, %v4442
        %v4444 = vpop.f32.mrb[0].mxu0
        %v4445 = vpop.f32.mrb[0].mxu0
        %v4446 = vadd.f32 %v4310, %v4445
        %v4447 = vpop.f32.mrb[0].mxu0
        %4448 = vmatprep.mubr.bf16.mxu0 %v4244
        %4449 = vmatmul.mubr.bf16.gmra.mrb[0].mxu0 %v4243
        %v4450 = vpop.f32.mrb[0].mxu0
        %v4451 = vadd.f32 %v4310, %v4450
        %v4452 = vpop.f32.mrb[0].mxu0
        %v4453 = vpop.f32.mrb[0].mxu0
        %v4454 = vadd.f32 %v4310, %v4453
        %v4455 = vpop.f32.mrb[0].mxu0
        %4456 = vmatprep.mubr.bf16.mxu0 %v4246
        %4457 = vmatmul.mubr.bf16.gmra.mrb[0].mxu0 %v4245
        %v4458 = vpop.f32.mrb[0].mxu0
        %v4459 = vadd.f32 %v4310, %v4458
        %v4460 = vpop.f32.mrb[0].mxu0
        %v4461 = vpop.f32.mrb[0].mxu0
        %v4462 = vadd.f32 %v4310, %v4461
        %v4463 = vpop.f32.mrb[0].mxu0
        %4464 = vmatprep.mubr.bf16.mxu0 %v4248
        %4465 = vmatmul.mubr.bf16.gmra.mrb[0].mxu0 %v4247
        %v4466 = vpop.f32.mrb[0].mxu0
        %v4467 = vadd.f32 %v4310, %v4466
        %v4468 = vpop.f32.mrb[0].mxu0
        %v4469 = vpop.f32.mrb[0].mxu0
        %v4470 = vadd.f32 %v4310, %v4469
        %v4471 = vpop.f32.mrb[0].mxu0
        %4472 = vmatprep.mubr.bf16.mxu0 %v4250
        %4473 = vmatmul.mubr.bf16.gmra.mrb[0].mxu0 %v4249
        %v4474 = vpop.f32.mrb[0].mxu0
        %v4475 = vadd.f32 %v4310, %v4474
        %v4476 = vpop.f32.mrb[0].mxu0
        %v4477 = vpop.f32.mrb[0].mxu0
        %v4478 = vadd.f32 %v4310, %v4477
        %v4479 = vpop.f32.mrb[0].mxu0
        %4480 = vmatprep.mubr.bf16.mxu0 %v4252
        %4481 = vmatmul.mubr.bf16.gmra.mrb[0].mxu0 %v4251
        %v4482 = vpop.f32.mrb[0].mxu0
        %v4483 = vadd.f32 %v4310, %v4482
        %v4484 = vpop.f32.mrb[0].mxu0
        %v4485 = vpop.f32.mrb[0].mxu0
        %v4486 = vadd.f32 %v4310, %v4485
        %v4487 = vpop.f32.mrb[0].mxu0
        %4488 = vmatprep.mubr.bf16.mxu0 %v4254
        %4489 = vmatmul.mubr.bf16.gmra.mrb[0].mxu0 %v4253
        %v4490 = vpop.f32.mrb[0].mxu0
        %v4491 = vadd.f32 %v4310, %v4490
        %v4492 = vpop.f32.mrb[0].mxu0
        %v4493 = vpop.f32.mrb[0].mxu0
        %v4494 = vadd.f32 %v4310, %v4493
        %v4495 = vpop.f32.mrb[0].mxu0
        %4496 = vmatprep.mubr.bf16.mxu0 %v4256
        %4497 = vmatmul.mubr.bf16.gmra.mrb[0].mxu0 %v4255
        %v4498 = vpop.f32.mrb[0].mxu0
        %v4499 = vadd.f32 %v4310, %v4498
        %v4500 = vpop.f32.mrb[0].mxu0
        %v4501 = vpop.f32.mrb[0].mxu0
        %v4502 = vadd.f32 %v4310, %v4501
        %v4503 = vpop.f32.mrb[0].mxu0
        %4504 = vmatprep.mubr.bf16.mxu0 %v4258
        %4505 = vmatmul.mubr.bf16.gmra.mrb[0].mxu0 %v4257
        %v4506 = vpop.f32.mrb[0].mxu0
        %v4507 = vadd.f32 %v4310, %v4506
        %v4508 = vpop.f32.mrb[0].mxu0
        %v4509 = vpop.f32.mrb[0].mxu0
        %v4510 = vadd.f32 %v4310, %v4509
        %v4511 = vpop.f32.mrb[0].mxu0
        %4512 = vmatprep.mubr.bf16.mxu0 %v4260
        %4513 = vmatmul.mubr.bf16.gmra.mrb[0].mxu0 %v4259
        %v4514 = vpop.f32.mrb[0].mxu0
        %v4515 = vadd.f32 %v4310, %v4514
        %v4516 = vpop.f32.mrb[0].mxu0
        %v4517 = vpop.f32.mrb[0].mxu0
        %v4518 = vadd.f32 %v4310, %v4517
        %v4519 = vpop.f32.mrb[0].mxu0
        %4520 = vmatprep.mubr.bf16.mxu0 %v4262
        %4521 = vmatmul.mubr.bf16.gmra.mrb[0].mxu0 %v4261
        %v4522 = vpop.f32.mrb[0].mxu0
        %v4523 = vadd.f32 %v4310, %v4522
        %v4524 = vpop.f32.mrb[0].mxu0
        %v4525 = vpop.f32.mrb[0].mxu0
        %v4526 = vadd.f32 %v4310, %v4525
        %v4527 = vpop.f32.mrb[0].mxu0
        %4528 = vmatprep.mubr.bf16.mxu0 %v4264
        %4529 = vmatmul.mubr.bf16.gmra.mrb[0].mxu0 %v4263
        %v4530 = vpop.f32.mrb[0].mxu0
        %v4531 = vadd.f32 %v4310, %v4530
        %v4532 = vpop.f32.mrb[0].mxu0
        %v4533 = vpop.f32.mrb[0].mxu0
        %v4534 = vadd.f32 %v4310, %v4533
        %v4535 = vpop.f32.mrb[0].mxu0
        %4536 = vmatprep.mubr.bf16.mxu0 %v4266
        %4537 = vmatmul.mubr.bf16.gmra.mrb[0].mxu0 %v4265
        %v4538 = vpop.f32.mrb[0].mxu0
        %v4539 = vadd.f32 %v4310, %v4538
        %v4540 = vpop.f32.mrb[0].mxu0
        %v4541 = vpop.f32.mrb[0].mxu0
        %v4542 = vadd.f32 %v4310, %v4541
        %v4543 = vpop.f32.mrb[0].mxu0
        %4544 = vmatprep.mubr.bf16.mxu0 %v4268
        %4545 = vmatmul.mubr.bf16.gmra.mrb[0].mxu0 %v4267
        %v4546 = vpop.f32.mrb[0].mxu0
        %v4547 = vadd.f32 %v4310, %v4546
        %v4548 = vpop.f32.mrb[0].mxu0
        %v4549 = vpop.f32.mrb[0].mxu0
        %v4550 = vadd.f32 %v4310, %v4549
        %v4551 = vpop.f32.mrb[0].mxu0
        %4552 = vmatprep.mubr.bf16.mxu0 %v4270
        %4553 = vmatmul.mubr.bf16.gmra.mrb[0].mxu0 %v4269
        %v4554 = vpop.f32.mrb[0].mxu0
        %v4555 = vadd.f32 %v4310, %v4554
        %v4556 = vpop.f32.mrb[0].mxu0
        %v4557 = vpop.f32.mrb[0].mxu0
        %v4558 = vadd.f32 %v4310, %v4557
        %v4559 = vpop.f32.mrb[0].mxu0
        %4560 = vmatprep.mubr.bf16.mxu0 %v4272
        %4561 = vmatmul.mubr.bf16.gmra.mrb[0].mxu0 %v4271
        %v4562 = vpop.f32.mrb[0].mxu0
        %v4563 = vadd.f32 %v4310, %v4562
        %v4564 = vpop.f32.mrb[0].mxu0
        %v4565 = vpop.f32.mrb[0].mxu0
        %v4566 = vadd.f32 %v4310, %v4565
        %v4567 = vpop.f32.mrb[0].mxu0
        %4568 = vdwg.mxu0
        %v4569 = vadd.f32 %v3335, %v4443
        %v4570 = vadd.f32 %v3336, %v4446
        %v4571 = vadd.f32 %v3337, %v4451
        %v4572 = vadd.f32 %v3338, %v4454
        %v4573 = vadd.f32 %v3339, %v4459
        %v4574 = vadd.f32 %v3340, %v4462
        %v4575 = vadd.f32 %v3341, %v4467
        %v4576 = vadd.f32 %v3342, %v4470
        %v4577 = vadd.f32 %v3343, %v4475
        %v4578 = vadd.f32 %v3344, %v4478
        %v4579 = vadd.f32 %v3345, %v4483
        %v4580 = vadd.f32 %v3346, %v4486
        %v4581 = vadd.f32 %v3347, %v4491
        %v4582 = vadd.f32 %v3348, %v4494
        %v4583 = vadd.f32 %v3349, %v4499
        %v4584 = vadd.f32 %v3350, %v4502
        %v4585 = vadd.f32 %v3351, %v4507
        %v4586 = vadd.f32 %v3352, %v4510
        %v4587 = vadd.f32 %v3353, %v4515
        %v4588 = vadd.f32 %v3354, %v4518
        %v4589 = vadd.f32 %v3355, %v4523
        %v4590 = vadd.f32 %v3356, %v4526
        %v4591 = vadd.f32 %v3357, %v4531
        %v4592 = vadd.f32 %v3358, %v4534
        %v4593 = vadd.f32 %v3359, %v4539
        %v4594 = vadd.f32 %v3360, %v4542
        %v4595 = vadd.f32 %v3361, %v4547
        %v4596 = vadd.f32 %v3362, %v4550
        %v4597 = vadd.f32 %v3363, %v4555
        %v4598 = vadd.f32 %v3364, %v4558
        %v4599 = vadd.f32 %v3365, %v4563
        %v4600 = vadd.f32 %v3366, %v4566
        %4601 = vst [vmem:[%s863] sm:$0xff] %v4569
        %4602 = vst [vmem:[%s863 + $0x8] sm:$0xff] %v4570
        %4603 = vst [vmem:[%s863 + $0x10] sm:$0xff] %v4571
        %4604 = vst [vmem:[%s863 + $0x18] sm:$0xff] %v4572
        %4605 = vst [vmem:[%s863 + $0x20] sm:$0xff] %v4573
        %4606 = vst [vmem:[%s863 + $0x28] sm:$0xff] %v4574
        %4607 = vst [vmem:[%s863 + $0x30] sm:$0xff] %v4575
        %4608 = vst [vmem:[%s863 + $0x38] sm:$0xff] %v4576
        %4609 = vst [vmem:[%s863 + $0x40] sm:$0xff] %v4577
        %4610 = vst [vmem:[%s863 + $0x48] sm:$0xff] %v4578
        %4611 = vst [vmem:[%s863 + $0x50] sm:$0xff] %v4579
        %4612 = vst [vmem:[%s863 + $0x58] sm:$0xff] %v4580
        %4613 = vst [vmem:[%s863 + $0x60] sm:$0xff] %v4581
        %4614 = vst [vmem:[%s863 + $0x68] sm:$0xff] %v4582
        %4615 = vst [vmem:[%s863 + $0x70] sm:$0xff] %v4583
        %4616 = vst [vmem:[%s863 + $0x78] sm:$0xff] %v4584
        %4617 = vst [vmem:[%s863 + $0x80] sm:$0xff] %v4585
        %4618 = vst [vmem:[%s863 + $0x88] sm:$0xff] %v4586
        %4619 = vst [vmem:[%s863 + $0x90] sm:$0xff] %v4587
        %4620 = vst [vmem:[%s863 + $0x98] sm:$0xff] %v4588
        %4621 = vst [vmem:[%s863 + $0xa0] sm:$0xff] %v4589
        %4622 = vst [vmem:[%s863 + $0xa8] sm:$0xff] %v4590
        %4623 = vst [vmem:[%s863 + $0xb0] sm:$0xff] %v4591
        %4624 = vst [vmem:[%s863 + $0xb8] sm:$0xff] %v4592
        %4625 = vst [vmem:[%s863 + $0xc0] sm:$0xff] %v4593
        %4626 = vst [vmem:[%s863 + $0xc8] sm:$0xff] %v4594
        %4627 = vst [vmem:[%s863 + $0xd0] sm:$0xff] %v4595
        %4628 = vst [vmem:[%s863 + $0xd8] sm:$0xff] %v4596
        %4629 = vst [vmem:[%s863 + $0xe0] sm:$0xff] %v4597
        %4630 = vst [vmem:[%s863 + $0xe8] sm:$0xff] %v4598
        %4631 = vst [vmem:[%s863 + $0xf0] sm:$0xff] %v4599
        %4632 = vst [vmem:[%s863 + $0xf8] sm:$0xff] %v4600
        %s4633 = sand.u32 %s457, 1
        %s4634 = scalar_lea.sflag [#allocation4], %s4633
        %s4635 = sand.u32 %s457, 1
        %s4636 = smul.addr %s4635, 256
        %s4637 = scalar_lea.vmem [#allocation32], %s4636
        // Predicated region
        $region173: #{resnet_forward.1} parent=95 // pred_check
          %p4638 = pneg %p467
        $region174: #{resnet_forward.1} parent=95 // pred_check_branch
          %4640 = sbr.rel (%p4638) target = $region176
        $region175: #{resnet_forward.1} parent=95 // pred_region
          %s4641 = smul.u32 32, %s45
          %s4643 = ssub.s32 4096, 4096
          %4644 = vsyncadd %s4634, %s4643
          %s4645 = smul.addr %s4641, 128
          %s4646 = scalar_lea.hbm %s19, %s4645
          %s4647 = sshll.u32 %s4637, 4
          %s4648 = int_to_ptr.vmem [resolvable:$true] %s4647
          %4653 = dma.vmem_to_hbm [thread:$0]  %s4648, 4096, %s4646, %s4634, 128, 128, 8
        $region176: #{resnet_forward.1} parent=95 // pred_fallthru
          _
      $region96: #{resnet_forward.1} parent=5 // pred_fallthru
        _
      %p4654 = scmp.le.s32.totalorder 2, %s40
      // Predicated region
      $region177: #{resnet_forward.1} parent=5 // pred_check
        %p4655 = pneg %p4654
      $region178: #{resnet_forward.1} parent=5 // pred_check_branch
        %4657 = sbr.rel (%p4655) target = $region180
      $region179: #{resnet_forward.1} parent=5 // pred_region
        %s4658 = ssub.s32 %s40, 2
        // Predicated region
        $region181: #{resnet_forward.1} parent=179 // pred_check
          %p4659 = pneg %p473
        $region182: #{resnet_forward.1} parent=179 // pred_check_branch
          %4661 = sbr.rel (%p4659) target = $region184
        $region183: #{resnet_forward.1} parent=179 // pred_region
          %s4662 = sand.u32 %s458, 1
          %s4663 = scalar_lea.sflag [#allocation4], %s4662
          %s4664 = sand.u32 %s458, 1
          %s4665 = smul.addr %s4664, 256
          %s4666 = scalar_lea.vmem [#allocation32], %s4665
          %4667 = dma.done %s4663, 4096
        $region184: #{resnet_forward.1} parent=179 // pred_fallthru
          _
      $region180: #{resnet_forward.1} parent=5 // pred_fallthru
        _
    $region6: #{resnet_forward.1} parent=1 // loop_footer
      %s44 = sadd.s32 1, %s40
    $region7: #{resnet_forward.1} parent=1 // loop_footer_branch
      %39 = sbr.rel target = $region3
    $region8: #{resnet_forward.1} parent=1 // loop_exit
      _
    %4668 = vsyncpa [#allocation3], 1
    %s4669 = scalar_lea.sflag [#allocation3], 1
    %4670 = vsyncpa %s4669, 1
    %4671 = vsyncpa [#allocation6], 1
    %4672 = vsyncpa [#allocation9], 1
    %4673 = vsyncpa [#allocation12], 1
    %4674 = vsyncpa [#allocation15], 1
    %4675 = vsyncpa [#allocation18], 1
    %4676 = vsyncpa [#allocation21], 1
    %4677 = vsyncpa [#allocation24], 1
    %4678 = vsyncpa [#allocation27], 1
    %4679 = vsyncpa [#allocation30], 1
    %4680 = vsyncpa [#allocation4], 1
    %s4681 = scalar_lea.sflag [#allocation4], 1
    %4682 = vsyncpa %s4681, 1

</llo_original>
